<compile_context>
chip_gen: v5e
topology: v5e:2x2
jax: 0.10.0
libtpu: 0.0.40
codegen_flags: <defaults>
</compile_context>

<pallas_src>
import math
import jax
import jax.numpy as jnp
from jax.experimental import pallas as pl
from jax.experimental.pallas import tpu as pltpu

D_MODEL = 256
N_HEADS = 2
HEAD_DIM = D_MODEL // N_HEADS
D_FF = 256
N_LAYERS = 2
LN_EPS = 1e-5
SCALE = 1.0 / math.sqrt(HEAD_DIM)


# ------------------------------ kernel helpers ------------------------------
def _mxu(a, b):
    """MXU matmul, bf16 inputs, f32 accumulation."""
    return jnp.dot(a.astype(jnp.bfloat16), b.astype(jnp.bfloat16),
                   preferred_element_type=jnp.float32)


def _mxu_nt(a, b):
    """a @ b.T (contraction over last dims), bf16 inputs, f32 accumulation."""
    return jax.lax.dot_general(a.astype(jnp.bfloat16), b.astype(jnp.bfloat16),
                               (((1,), (1,)), ((), ())),
                               preferred_element_type=jnp.float32)


def _layernorm(x, w, b):
    # Independent cross-lane reductions: var = E[x^2] - E[x]^2.
    mu = jnp.mean(x, axis=-1, keepdims=True)
    ms = jnp.mean(x * x, axis=-1, keepdims=True)
    var = ms - mu * mu
    return (x - mu) * jax.lax.rsqrt(var + LN_EPS) * w + b


# --------------------------------- kernel -----------------------------------
def _ist_kernel(h_ref, mask_ref, wenc_ref,
                wqkv_ref, bqkv_ref, wo_ref, bo_ref,
                ln1w_ref, ln1b_ref,
                w1_ref, b1_ref, w2_ref, b2_ref,
                ln2w_ref, ln2b_ref,
                out_ref):
    h_flat = h_ref[0]                                   # (N, KPAD) bf16
    mask = mask_ref[0]                                  # (N, N) f32 additive mask
    h_feat = _mxu(h_flat, wenc_ref[...])                # (N, 256) encode_past (no bias)

    src = h_feat
    # TODO(synk): dropout (p=0.1) inside TransformerEncoderLayer omitted (eval-mode identity).
    for l in range(N_LAYERS):
        # ---- multi-head self-attention (post-LN encoder layer) ----
        qkv = _mxu(src, wqkv_ref[l]) + bqkv_ref[l]      # (N, 768) f32
        q = qkv[:, 0:D_MODEL]
        k = qkv[:, D_MODEL:2 * D_MODEL]
        v = qkv[:, 2 * D_MODEL:3 * D_MODEL]

        wo_l = wo_ref[l]                                # (256, 256) bf16
        attn = bo_ref[l]                                # (1, 256) f32, broadcasts below
        for hh in range(N_HEADS):
            s = hh * HEAD_DIM
            qh = q[:, s:s + HEAD_DIM] * SCALE
            kh = k[:, s:s + HEAD_DIM]
            vh = v[:, s:s + HEAD_DIM]
            scores = _mxu_nt(qh, kh) + mask             # (N, N) f32
            m = jnp.max(scores, axis=-1, keepdims=True)
            e = jnp.exp(scores - m)
            d = jnp.sum(e, axis=-1, keepdims=True)
            p = e * pl.reciprocal(d, approx=True)       # EUP reciprocal, off VALU path
            head = _mxu(p, vh)                          # (N, 128)
            # Fold Wo into the head loop: no concat / lane-layout copy.
            attn = attn + _mxu(head, wo_l[s:s + HEAD_DIM, :])

        src = _layernorm(src + attn, ln1w_ref[l], ln1b_ref[l])

        # ---- feed forward (relu) ----
        ff = jnp.maximum(_mxu(src, w1_ref[l]) + b1_ref[l], 0.0)
        ff = _mxu(ff, w2_ref[l]) + b2_ref[l]
        src = _layernorm(src + ff, ln2w_ref[l], ln2b_ref[l])

    out_ref[0] = h_feat + src                           # h_feat + transformer(h_feat)


# -------------------------------- wrappers ----------------------------------
def _round_up(x, m):
    return ((x + m - 1) // m) * m


def _prep_device_params(params, in_dim, k_pad):
    """Cast matmul weights to bf16, zero-pad wenc rows to the padded K dim."""
    wenc = params['wenc'].astype(jnp.bfloat16)
    if k_pad != in_dim:
        wenc = jnp.pad(wenc, ((0, k_pad - in_dim), (0, 0)))
    return dict(
        wenc=wenc,
        wqkv=params['wqkv'].astype(jnp.bfloat16), bqkv=params['bqkv'],
        wo=params['wo'].astype(jnp.bfloat16),     bo=params['bo'],
        ln1w=params['ln1w'], ln1b=params['ln1b'],
        w1=params['w1'].astype(jnp.bfloat16),     b1=params['b1'],
        w2=params['w2'].astype(jnp.bfloat16),     b2=params['b2'],
        ln2w=params['ln2w'], ln2b=params['ln2b'],
    )


@jax.jit
def intention_social_transformer_forward_batched(h, mask, params):
    """h: (B, N, t, 9); mask: (B, N, N) float additive mask. Returns (B, N, 256)."""
    B, N, T, F = h.shape
    in_dim = T * F
    k_pad = _round_up(in_dim, 128)
    h_flat = h.reshape(B, N, in_dim).astype(jnp.bfloat16)
    if k_pad != in_dim:
        h_flat = jnp.pad(h_flat, ((0, 0), (0, 0), (0, k_pad - in_dim)))
    p = _prep_device_params(params, in_dim, k_pad)
    mask = mask.astype(jnp.float32)

    scene = lambda b: (b, 0, 0)            # per-scene activation blocks
    fixed2 = lambda b: (0, 0)              # weights stay resident in VMEM
    fixed3 = lambda b: (0, 0, 0)

    in_specs = [
        pl.BlockSpec((1, N, k_pad), scene),                       # h
        pl.BlockSpec((1, N, N), scene),                           # mask
        pl.BlockSpec((k_pad, D_MODEL), fixed2),                   # wenc
        pl.BlockSpec((N_LAYERS, D_MODEL, 3 * D_MODEL), fixed3),   # wqkv
        pl.BlockSpec((N_LAYERS, 1, 3 * D_MODEL), fixed3),         # bqkv
        pl.BlockSpec((N_LAYERS, D_MODEL, D_MODEL), fixed3),       # wo
        pl.BlockSpec((N_LAYERS, 1, D_MODEL), fixed3),             # bo
        pl.BlockSpec((N_LAYERS, 1, D_MODEL), fixed3),             # ln1w
        pl.BlockSpec((N_LAYERS, 1, D_MODEL), fixed3),             # ln1b
        pl.BlockSpec((N_LAYERS, D_MODEL, D_FF), fixed3),          # w1
        pl.BlockSpec((N_LAYERS, 1, D_FF), fixed3),                # b1
        pl.BlockSpec((N_LAYERS, D_FF, D_MODEL), fixed3),          # w2
        pl.BlockSpec((N_LAYERS, 1, D_MODEL), fixed3),             # b2
        pl.BlockSpec((N_LAYERS, 1, D_MODEL), fixed3),             # ln2w
        pl.BlockSpec((N_LAYERS, 1, D_MODEL), fixed3),             # ln2b
    ]

    return pl.pallas_call(
        _ist_kernel,
        out_shape=jax.ShapeDtypeStruct((B, N, D_MODEL), jnp.float32),
        grid=(B,),
        in_specs=in_specs,
        out_specs=pl.BlockSpec((1, N, D_MODEL), scene),
        compiler_params=pltpu.CompilerParams(
            dimension_semantics=("parallel",)),    # megacore sharding on v7x
    )(h_flat, mask, p['wenc'], p['wqkv'], p['bqkv'], p['wo'], p['bo'],
      p['ln1w'], p['ln1b'], p['w1'], p['b1'], p['w2'], p['b2'],
      p['ln2w'], p['ln2b'])


def intention_social_transformer_forward(h, mask, params):
    """Single-scene API matching the PyTorch module: h (N, t, 9), mask (N, N) -> (N, 1, 256)."""
    out = intention_social_transformer_forward_batched(h[None], mask[None], params)
    return out[0][:, None, :]


# ---------------- parameter init (deterministic, synthetic) ----------------
def init_params(key, past_len):
    in_dim = past_len * 9
    ks = jax.random.split(key, 9)

    def w(k, shape, scale):
        return jax.random.normal(k, shape, jnp.float32) * scale

    return {
        # stored pre-transposed: (in, out)
        'wenc': w(ks[0], (in_dim, D_MODEL), 0.05),
        'wqkv': w(ks[1], (N_LAYERS, D_MODEL, 3 * D_MODEL), 0.05),
        'bqkv': w(ks[2], (N_LAYERS, 1, 3 * D_MODEL), 0.02),
        'wo':   w(ks[3], (N_LAYERS, D_MODEL, D_MODEL), 0.05),
        'bo':   w(ks[4], (N_LAYERS, 1, D_MODEL), 0.02),
        'ln1w': jnp.ones((N_LAYERS, 1, D_MODEL), jnp.float32),
        'ln1b': jnp.zeros((N_LAYERS, 1, D_MODEL), jnp.float32),
        'w1':   w(ks[5], (N_LAYERS, D_MODEL, D_FF), 0.05),
        'b1':   w(ks[6], (N_LAYERS, 1, D_FF), 0.02),
        'w2':   w(ks[7], (N_LAYERS, D_FF, D_MODEL), 0.05),
        'b2':   w(ks[8], (N_LAYERS, 1, D_MODEL), 0.02),
        'ln2w': jnp.ones((N_LAYERS, 1, D_MODEL), jnp.float32),
        'ln2b': jnp.zeros((N_LAYERS, 1, D_MODEL), jnp.float32),
    }


# ---------- pure-JAX reference (same math / bf16 MXU inputs, no Pallas) ----------
def _ref_mm(a, b):
    return jnp.dot(a.astype(jnp.bfloat16), b.astype(jnp.bfloat16),
                   preferred_element_type=jnp.float32)


def reference_forward(h, mask, params):
    N, T, F = h.shape
    x = _ref_mm(h.reshape(N, T * F), params['wenc'])
    h_feat = x
    src = x
    for l in range(N_LAYERS):
        qkv = _ref_mm(src, params['wqkv'][l]) + params['bqkv'][l]
        q, k, v = jnp.split(qkv, 3, axis=-1)
        heads = []
        for hh in range(N_HEADS):
            s = hh * HEAD_DIM
            sc = _ref_mm(q[:, s:s + HEAD_DIM] * SCALE, k[:, s:s + HEAD_DIM].T) + mask
            p = jax.nn.softmax(sc, axis=-1)
            heads.append(_ref_mm(p, v[:, s:s + HEAD_DIM]))
        attn = _ref_mm(jnp.concatenate(heads, -1), params['wo'][l]) + params['bo'][l]
        src = _layernorm(src + attn, params['ln1w'][l], params['ln1b'][l])
        ff = jnp.maximum(_ref_mm(src, params['w1'][l]) + params['b1'][l], 0.0)
        ff = _ref_mm(ff, params['w2'][l]) + params['b2'][l]
        src = _layernorm(src + ff, params['ln2w'][l], params['ln2b'][l])
    return (h_feat + src)[:, None, :]


if __name__ == "__main__":
    key = jax.random.PRNGKey(0)
    past_len = 8   # t
    N = 8          # agents per scene (= attention sequence length)
    B = 4          # scenes batched through the grid axis

    k_h, k_p = jax.random.split(key)
    h = jax.random.normal(k_h, (B, N, past_len, 9), jnp.float32)
    # float additive attention mask per scene (upper triangle blocked)
    base_mask = jnp.where(jnp.triu(jnp.ones((N, N), dtype=bool), k=1), -1e9, 0.0)
    mask = jnp.broadcast_to(base_mask, (B, N, N)).astype(jnp.float32)
    params = init_params(k_p, past_len)

    out = intention_social_transformer_forward_batched(h, mask, params)
    out = jax.block_until_ready(out)
    assert out.shape == (B, N, D_MODEL), out.shape

    # per-scene check against the pure-JAX reference
    max_err = 0.0
    for b in range(B):
        ref = reference_forward(h[b], mask[b], params)[:, 0, :]
        max_err = max(max_err, float(jnp.max(jnp.abs(out[b] - ref))))
    assert max_err < 5e-2, f"max abs err {max_err}"

    # single-scene API matching the PyTorch module exactly: (N, t, 9) -> (N, 1, 256)
    out1 = intention_social_transformer_forward(h[0], mask[0], params)
    out1 = jax.block_until_ready(out1)
    assert out1.shape == (N, 1, D_MODEL), out1.shape

    print("KERNEL_OK")
</pallas_src>

<mosaic_0001>
module attributes {stable_mosaic.version = 11 : i64} {
  func.func @_ist_kernel(%arg0: i32, %arg1: memref<1x8x128xbf16, #tpu.memory_space<vmem>>, %arg2: memref<1x8x8xf32, #tpu.memory_space<vmem>>, %arg3: memref<128x256xbf16, #tpu.memory_space<vmem>>, %arg4: memref<2x256x768xbf16, #tpu.memory_space<vmem>>, %arg5: memref<2x1x768xf32, #tpu.memory_space<vmem>>, %arg6: memref<2x256x256xbf16, #tpu.memory_space<vmem>>, %arg7: memref<2x1x256xf32, #tpu.memory_space<vmem>>, %arg8: memref<2x1x256xf32, #tpu.memory_space<vmem>>, %arg9: memref<2x1x256xf32, #tpu.memory_space<vmem>>, %arg10: memref<2x256x256xbf16, #tpu.memory_space<vmem>>, %arg11: memref<2x1x256xf32, #tpu.memory_space<vmem>>, %arg12: memref<2x256x256xbf16, #tpu.memory_space<vmem>>, %arg13: memref<2x1x256xf32, #tpu.memory_space<vmem>>, %arg14: memref<2x1x256xf32, #tpu.memory_space<vmem>>, %arg15: memref<2x1x256xf32, #tpu.memory_space<vmem>>, %arg16: memref<1x8x256xf32, #tpu.memory_space<vmem>>) attributes {dimension_semantics = [#tpu.dimension_semantics<parallel>], iteration_bounds = array<i64: 4>, scalar_prefetch = 0 : i64, scratch_operands = 0 : i64, tpu.core_type = #tpu.core_type<tc>, window_params = [{transform_indices = @transform_0, window_bounds = array<i64: 1, 8, 128>}, {transform_indices = @transform_1, window_bounds = array<i64: 1, 8, 8>}, {pipeline_mode = #tpu.pipeline_mode<synchronous>, transform_indices = @transform_2, window_bounds = array<i64: 128, 256>}, {pipeline_mode = #tpu.pipeline_mode<synchronous>, transform_indices = @transform_3, window_bounds = array<i64: 2, 256, 768>}, {pipeline_mode = #tpu.pipeline_mode<synchronous>, transform_indices = @transform_4, window_bounds = array<i64: 2, 1, 768>}, {pipeline_mode = #tpu.pipeline_mode<synchronous>, transform_indices = @transform_5, window_bounds = array<i64: 2, 256, 256>}, {pipeline_mode = #tpu.pipeline_mode<synchronous>, transform_indices = @transform_6, window_bounds = array<i64: 2, 1, 256>}, {pipeline_mode = #tpu.pipeline_mode<synchronous>, transform_indices = @transform_7, window_bounds = array<i64: 2, 1, 256>}, {pipeline_mode = #tpu.pipeline_mode<synchronous>, transform_indices = @transform_8, window_bounds = array<i64: 2, 1, 256>}, {pipeline_mode = #tpu.pipeline_mode<synchronous>, transform_indices = @transform_9, window_bounds = array<i64: 2, 256, 256>}, {pipeline_mode = #tpu.pipeline_mode<synchronous>, transform_indices = @transform_10, window_bounds = array<i64: 2, 1, 256>}, {pipeline_mode = #tpu.pipeline_mode<synchronous>, transform_indices = @transform_11, window_bounds = array<i64: 2, 256, 256>}, {pipeline_mode = #tpu.pipeline_mode<synchronous>, transform_indices = @transform_12, window_bounds = array<i64: 2, 1, 256>}, {pipeline_mode = #tpu.pipeline_mode<synchronous>, transform_indices = @transform_13, window_bounds = array<i64: 2, 1, 256>}, {pipeline_mode = #tpu.pipeline_mode<synchronous>, transform_indices = @transform_14, window_bounds = array<i64: 2, 1, 256>}, {transform_indices = @transform_15, window_bounds = array<i64: 1, 8, 256>}]} {
    %c0 = arith.constant 0 : index
    %c0_0 = arith.constant 0 : index
    %c0_1 = arith.constant 0 : index
    %0 = vector.load %arg1[%c0, %c0_0, %c0_1] : memref<1x8x128xbf16, #tpu.memory_space<vmem>>, vector<1x8x128xbf16>
    %1 = vector.shape_cast %0 : vector<1x8x128xbf16> to vector<8x128xbf16>
    %c0_2 = arith.constant 0 : index
    %c0_3 = arith.constant 0 : index
    %c0_4 = arith.constant 0 : index
    %2 = vector.load %arg2[%c0_2, %c0_3, %c0_4] : memref<1x8x8xf32, #tpu.memory_space<vmem>>, vector<1x8x8xf32>
    %3 = vector.shape_cast %2 : vector<1x8x8xf32> to vector<8x8xf32>
    %c0_5 = arith.constant 0 : index
    %c0_6 = arith.constant 0 : index
    %4 = vector.load %arg3[%c0_5, %c0_6] : memref<128x256xbf16, #tpu.memory_space<vmem>>, vector<128x256xbf16>
    %cst = arith.constant dense<0.000000e+00> : vector<8x256xf32>
    %5 = tpu.matmul %1, %4, %cst {dimension_numbers = #tpu.dot_dimension_numbers<[1], [0], [0], [1], [0, 0, 1, 1], [], []>} : vector<8x128xbf16>, vector<128x256xbf16>, vector<8x256xf32> -> vector<8x256xf32>
    %c0_7 = arith.constant 0 : index
    %c0_8 = arith.constant 0 : index
    %c0_9 = arith.constant 0 : index
    %6 = vector.load %arg4[%c0_7, %c0_8, %c0_9] : memref<2x256x768xbf16, #tpu.memory_space<vmem>>, vector<1x256x768xbf16>
    %7 = vector.shape_cast %6 : vector<1x256x768xbf16> to vector<256x768xbf16>
    %8 = arith.truncf %5 : vector<8x256xf32> to vector<8x256xbf16>
    %cst_10 = arith.constant dense<0.000000e+00> : vector<8x768xf32>
    %9 = tpu.matmul %8, %7, %cst_10 {dimension_numbers = #tpu.dot_dimension_numbers<[1], [0], [0], [1], [0, 0, 1, 1], [], []>} : vector<8x256xbf16>, vector<256x768xbf16>, vector<8x768xf32> -> vector<8x768xf32>
    %c0_11 = arith.constant 0 : index
    %c0_12 = arith.constant 0 : index
    %c0_13 = arith.constant 0 : index
    %10 = vector.load %arg5[%c0_11, %c0_12, %c0_13] : memref<2x1x768xf32, #tpu.memory_space<vmem>>, vector<1x1x768xf32>
    %11 = vector.shape_cast %10 : vector<1x1x768xf32> to vector<1x768xf32>
    %12 = vector.broadcast %11 : vector<1x768xf32> to vector<8x768xf32>
    %13 = arith.addf %9, %12 : vector<8x768xf32>
    %14 = vector.extract_strided_slice %13 {offsets = [0, 0], sizes = [8, 256], strides = [1, 1]} : vector<8x768xf32> to vector<8x256xf32>
    %15 = vector.extract_strided_slice %13 {offsets = [0, 256], sizes = [8, 256], strides = [1, 1]} : vector<8x768xf32> to vector<8x256xf32>
    %16 = vector.extract_strided_slice %13 {offsets = [0, 512], sizes = [8, 256], strides = [1, 1]} : vector<8x768xf32> to vector<8x256xf32>
    %c0_14 = arith.constant 0 : index
    %c0_15 = arith.constant 0 : index
    %c0_16 = arith.constant 0 : index
    %17 = vector.load %arg6[%c0_14, %c0_15, %c0_16] : memref<2x256x256xbf16, #tpu.memory_space<vmem>>, vector<1x256x256xbf16>
    %18 = vector.shape_cast %17 : vector<1x256x256xbf16> to vector<256x256xbf16>
    %c0_17 = arith.constant 0 : index
    %c0_18 = arith.constant 0 : index
    %c0_19 = arith.constant 0 : index
    %19 = vector.load %arg7[%c0_17, %c0_18, %c0_19] : memref<2x1x256xf32, #tpu.memory_space<vmem>>, vector<1x1x256xf32>
    %20 = vector.shape_cast %19 : vector<1x1x256xf32> to vector<1x256xf32>
    %21 = vector.extract_strided_slice %14 {offsets = [0, 0], sizes = [8, 128], strides = [1, 1]} : vector<8x256xf32> to vector<8x128xf32>
    %cst_20 = arith.constant 0.0883883461 : f32
    %22 = vector.broadcast %cst_20 : f32 to vector<8x128xf32>
    %23 = arith.mulf %21, %22 : vector<8x128xf32>
    %24 = vector.extract_strided_slice %15 {offsets = [0, 0], sizes = [8, 128], strides = [1, 1]} : vector<8x256xf32> to vector<8x128xf32>
    %25 = vector.extract_strided_slice %16 {offsets = [0, 0], sizes = [8, 128], strides = [1, 1]} : vector<8x256xf32> to vector<8x128xf32>
    %26 = arith.truncf %23 : vector<8x128xf32> to vector<8x128xbf16>
    %27 = arith.truncf %24 : vector<8x128xf32> to vector<8x128xbf16>
    %cst_21 = arith.constant dense<0.000000e+00> : vector<8x8xf32>
    %28 = tpu.matmul %26, %27, %cst_21 {dimension_numbers = #tpu.dot_dimension_numbers<[1], [1], [0], [0], [0, 0, 1, 0], [], []>} : vector<8x128xbf16>, vector<8x128xbf16>, vector<8x8xf32> -> vector<8x8xf32>
    %29 = arith.addf %28, %3 : vector<8x8xf32>
    %cst_22 = arith.constant dense<0xFF800000> : vector<8xf32>
    %30 = vector.multi_reduction <maximumf>, %29, %cst_22 [1] : vector<8x8xf32> to vector<8xf32>
    %31 = vector.shape_cast %30 : vector<8xf32> to vector<8x1xf32>
    %32 = vector.broadcast %31 : vector<8x1xf32> to vector<8x8xf32>
    %33 = arith.subf %29, %32 : vector<8x8xf32>
    %34 = math.exp %33 : vector<8x8xf32>
    %cst_23 = arith.constant dense<0.000000e+00> : vector<8xf32>
    %35 = vector.multi_reduction <add>, %34, %cst_23 [1] : vector<8x8xf32> to vector<8xf32>
    %36 = vector.shape_cast %35 : vector<8xf32> to vector<8x1xf32>
    %37 = tpu.reciprocal %36 {approx = true} : vector<8x1xf32> -> vector<8x1xf32>
    %38 = vector.broadcast %37 : vector<8x1xf32> to vector<8x8xf32>
    %39 = arith.mulf %34, %38 : vector<8x8xf32>
    %40 = arith.truncf %39 : vector<8x8xf32> to vector<8x8xbf16>
    %41 = arith.truncf %25 : vector<8x128xf32> to vector<8x128xbf16>
    %cst_24 = arith.constant dense<0.000000e+00> : vector<8x128xf32>
    %42 = tpu.matmul %40, %41, %cst_24 {dimension_numbers = #tpu.dot_dimension_numbers<[1], [0], [0], [1], [0, 0, 1, 1], [], []>} : vector<8x8xbf16>, vector<8x128xbf16>, vector<8x128xf32> -> vector<8x128xf32>
    %43 = vector.extract_strided_slice %18 {offsets = [0, 0], sizes = [128, 256], strides = [1, 1]} : vector<256x256xbf16> to vector<128x256xbf16>
    %44 = arith.truncf %42 : vector<8x128xf32> to vector<8x128xbf16>
    %cst_25 = arith.constant dense<0.000000e+00> : vector<8x256xf32>
    %45 = tpu.matmul %44, %43, %cst_25 {dimension_numbers = #tpu.dot_dimension_numbers<[1], [0], [0], [1], [0, 0, 1, 1], [], []>} : vector<8x128xbf16>, vector<128x256xbf16>, vector<8x256xf32> -> vector<8x256xf32>
    %46 = vector.broadcast %20 : vector<1x256xf32> to vector<8x256xf32>
    %47 = arith.addf %46, %45 : vector<8x256xf32>
    %48 = vector.extract_strided_slice %14 {offsets = [0, 128], sizes = [8, 128], strides = [1, 1]} : vector<8x256xf32> to vector<8x128xf32>
    %cst_26 = arith.constant 0.0883883461 : f32
    %49 = vector.broadcast %cst_26 : f32 to vector<8x128xf32>
    %50 = arith.mulf %48, %49 : vector<8x128xf32>
    %51 = vector.extract_strided_slice %15 {offsets = [0, 128], sizes = [8, 128], strides = [1, 1]} : vector<8x256xf32> to vector<8x128xf32>
    %52 = vector.extract_strided_slice %16 {offsets = [0, 128], sizes = [8, 128], strides = [1, 1]} : vector<8x256xf32> to vector<8x128xf32>
    %53 = arith.truncf %50 : vector<8x128xf32> to vector<8x128xbf16>
    %54 = arith.truncf %51 : vector<8x128xf32> to vector<8x128xbf16>
    %cst_27 = arith.constant dense<0.000000e+00> : vector<8x8xf32>
    %55 = tpu.matmul %53, %54, %cst_27 {dimension_numbers = #tpu.dot_dimension_numbers<[1], [1], [0], [0], [0, 0, 1, 0], [], []>} : vector<8x128xbf16>, vector<8x128xbf16>, vector<8x8xf32> -> vector<8x8xf32>
    %56 = arith.addf %55, %3 : vector<8x8xf32>
    %cst_28 = arith.constant dense<0xFF800000> : vector<8xf32>
    %57 = vector.multi_reduction <maximumf>, %56, %cst_28 [1] : vector<8x8xf32> to vector<8xf32>
    %58 = vector.shape_cast %57 : vector<8xf32> to vector<8x1xf32>
    %59 = vector.broadcast %58 : vector<8x1xf32> to vector<8x8xf32>
    %60 = arith.subf %56, %59 : vector<8x8xf32>
    %61 = math.exp %60 : vector<8x8xf32>
    %cst_29 = arith.constant dense<0.000000e+00> : vector<8xf32>
    %62 = vector.multi_reduction <add>, %61, %cst_29 [1] : vector<8x8xf32> to vector<8xf32>
    %63 = vector.shape_cast %62 : vector<8xf32> to vector<8x1xf32>
    %64 = tpu.reciprocal %63 {approx = true} : vector<8x1xf32> -> vector<8x1xf32>
    %65 = vector.broadcast %64 : vector<8x1xf32> to vector<8x8xf32>
    %66 = arith.mulf %61, %65 : vector<8x8xf32>
    %67 = arith.truncf %66 : vector<8x8xf32> to vector<8x8xbf16>
    %68 = arith.truncf %52 : vector<8x128xf32> to vector<8x128xbf16>
    %cst_30 = arith.constant dense<0.000000e+00> : vector<8x128xf32>
    %69 = tpu.matmul %67, %68, %cst_30 {dimension_numbers = #tpu.dot_dimension_numbers<[1], [0], [0], [1], [0, 0, 1, 1], [], []>} : vector<8x8xbf16>, vector<8x128xbf16>, vector<8x128xf32> -> vector<8x128xf32>
    %70 = vector.extract_strided_slice %18 {offsets = [128, 0], sizes = [128, 256], strides = [1, 1]} : vector<256x256xbf16> to vector<128x256xbf16>
    %71 = arith.truncf %69 : vector<8x128xf32> to vector<8x128xbf16>
    %cst_31 = arith.constant dense<0.000000e+00> : vector<8x256xf32>
    %72 = tpu.matmul %71, %70, %cst_31 {dimension_numbers = #tpu.dot_dimension_numbers<[1], [0], [0], [1], [0, 0, 1, 1], [], []>} : vector<8x128xbf16>, vector<128x256xbf16>, vector<8x256xf32> -> vector<8x256xf32>
    %73 = arith.addf %47, %72 : vector<8x256xf32>
    %74 = arith.addf %5, %73 : vector<8x256xf32>
    %c0_32 = arith.constant 0 : index
    %c0_33 = arith.constant 0 : index
    %c0_34 = arith.constant 0 : index
    %75 = vector.load %arg8[%c0_32, %c0_33, %c0_34] : memref<2x1x256xf32, #tpu.memory_space<vmem>>, vector<1x1x256xf32>
    %76 = vector.shape_cast %75 : vector<1x1x256xf32> to vector<1x256xf32>
    %c0_35 = arith.constant 0 : index
    %c0_36 = arith.constant 0 : index
    %c0_37 = arith.constant 0 : index
    %77 = vector.load %arg9[%c0_35, %c0_36, %c0_37] : memref<2x1x256xf32, #tpu.memory_space<vmem>>, vector<1x1x256xf32>
    %78 = vector.shape_cast %77 : vector<1x1x256xf32> to vector<1x256xf32>
    %cst_38 = arith.constant dense<0.000000e+00> : vector<8xf32>
    %79 = vector.multi_reduction <add>, %74, %cst_38 [1] : vector<8x256xf32> to vector<8xf32>
    %80 = vector.shape_cast %79 : vector<8xf32> to vector<8x1xf32>
    %cst_39 = arith.constant 2.560000e+02 : f32
    %81 = vector.broadcast %cst_39 : f32 to vector<8x1xf32>
    %82 = arith.divf %80, %81 : vector<8x1xf32>
    %83 = arith.mulf %74, %74 : vector<8x256xf32>
    %cst_40 = arith.constant dense<0.000000e+00> : vector<8xf32>
    %84 = vector.multi_reduction <add>, %83, %cst_40 [1] : vector<8x256xf32> to vector<8xf32>
    %85 = vector.shape_cast %84 : vector<8xf32> to vector<8x1xf32>
    %cst_41 = arith.constant 2.560000e+02 : f32
    %86 = vector.broadcast %cst_41 : f32 to vector<8x1xf32>
    %87 = arith.divf %85, %86 : vector<8x1xf32>
    %88 = arith.mulf %82, %82 : vector<8x1xf32>
    %89 = arith.subf %87, %88 : vector<8x1xf32>
    %90 = vector.broadcast %82 : vector<8x1xf32> to vector<8x256xf32>
    %91 = arith.subf %74, %90 : vector<8x256xf32>
    %cst_42 = arith.constant 9.99999974E-6 : f32
    %92 = vector.broadcast %cst_42 : f32 to vector<8x1xf32>
    %93 = arith.addf %89, %92 : vector<8x1xf32>
    %94 = math.rsqrt %93 : vector<8x1xf32>
    %95 = vector.broadcast %94 : vector<8x1xf32> to vector<8x256xf32>
    %96 = arith.mulf %91, %95 : vector<8x256xf32>
    %97 = vector.broadcast %76 : vector<1x256xf32> to vector<8x256xf32>
    %98 = arith.mulf %96, %97 : vector<8x256xf32>
    %99 = vector.broadcast %78 : vector<1x256xf32> to vector<8x256xf32>
    %100 = arith.addf %98, %99 : vector<8x256xf32>
    %c0_43 = arith.constant 0 : index
    %c0_44 = arith.constant 0 : index
    %c0_45 = arith.constant 0 : index
    %101 = vector.load %arg10[%c0_43, %c0_44, %c0_45] : memref<2x256x256xbf16, #tpu.memory_space<vmem>>, vector<1x256x256xbf16>
    %102 = vector.shape_cast %101 : vector<1x256x256xbf16> to vector<256x256xbf16>
    %103 = arith.truncf %100 : vector<8x256xf32> to vector<8x256xbf16>
    %cst_46 = arith.constant dense<0.000000e+00> : vector<8x256xf32>
    %104 = tpu.matmul %103, %102, %cst_46 {dimension_numbers = #tpu.dot_dimension_numbers<[1], [0], [0], [1], [0, 0, 1, 1], [], []>} : vector<8x256xbf16>, vector<256x256xbf16>, vector<8x256xf32> -> vector<8x256xf32>
    %c0_47 = arith.constant 0 : index
    %c0_48 = arith.constant 0 : index
    %c0_49 = arith.constant 0 : index
    %105 = vector.load %arg11[%c0_47, %c0_48, %c0_49] : memref<2x1x256xf32, #tpu.memory_space<vmem>>, vector<1x1x256xf32>
    %106 = vector.shape_cast %105 : vector<1x1x256xf32> to vector<1x256xf32>
    %107 = vector.broadcast %106 : vector<1x256xf32> to vector<8x256xf32>
    %108 = arith.addf %104, %107 : vector<8x256xf32>
    %cst_50 = arith.constant 0.000000e+00 : f32
    %109 = vector.broadcast %cst_50 : f32 to vector<8x256xf32>
    %110 = arith.maximumf %108, %109 : vector<8x256xf32>
    %c0_51 = arith.constant 0 : index
    %c0_52 = arith.constant 0 : index
    %c0_53 = arith.constant 0 : index
    %111 = vector.load %arg12[%c0_51, %c0_52, %c0_53] : memref<2x256x256xbf16, #tpu.memory_space<vmem>>, vector<1x256x256xbf16>
    %112 = vector.shape_cast %111 : vector<1x256x256xbf16> to vector<256x256xbf16>
    %113 = arith.truncf %110 : vector<8x256xf32> to vector<8x256xbf16>
    %cst_54 = arith.constant dense<0.000000e+00> : vector<8x256xf32>
    %114 = tpu.matmul %113, %112, %cst_54 {dimension_numbers = #tpu.dot_dimension_numbers<[1], [0], [0], [1], [0, 0, 1, 1], [], []>} : vector<8x256xbf16>, vector<256x256xbf16>, vector<8x256xf32> -> vector<8x256xf32>
    %c0_55 = arith.constant 0 : index
    %c0_56 = arith.constant 0 : index
    %c0_57 = arith.constant 0 : index
    %115 = vector.load %arg13[%c0_55, %c0_56, %c0_57] : memref<2x1x256xf32, #tpu.memory_space<vmem>>, vector<1x1x256xf32>
    %116 = vector.shape_cast %115 : vector<1x1x256xf32> to vector<1x256xf32>
    %117 = vector.broadcast %116 : vector<1x256xf32> to vector<8x256xf32>
    %118 = arith.addf %114, %117 : vector<8x256xf32>
    %119 = arith.addf %100, %118 : vector<8x256xf32>
    %c0_58 = arith.constant 0 : index
    %c0_59 = arith.constant 0 : index
    %c0_60 = arith.constant 0 : index
    %120 = vector.load %arg14[%c0_58, %c0_59, %c0_60] : memref<2x1x256xf32, #tpu.memory_space<vmem>>, vector<1x1x256xf32>
    %121 = vector.shape_cast %120 : vector<1x1x256xf32> to vector<1x256xf32>
    %c0_61 = arith.constant 0 : index
    %c0_62 = arith.constant 0 : index
    %c0_63 = arith.constant 0 : index
    %122 = vector.load %arg15[%c0_61, %c0_62, %c0_63] : memref<2x1x256xf32, #tpu.memory_space<vmem>>, vector<1x1x256xf32>
    %123 = vector.shape_cast %122 : vector<1x1x256xf32> to vector<1x256xf32>
    %cst_64 = arith.constant dense<0.000000e+00> : vector<8xf32>
    %124 = vector.multi_reduction <add>, %119, %cst_64 [1] : vector<8x256xf32> to vector<8xf32>
    %125 = vector.shape_cast %124 : vector<8xf32> to vector<8x1xf32>
    %cst_65 = arith.constant 2.560000e+02 : f32
    %126 = vector.broadcast %cst_65 : f32 to vector<8x1xf32>
    %127 = arith.divf %125, %126 : vector<8x1xf32>
    %128 = arith.mulf %119, %119 : vector<8x256xf32>
    %cst_66 = arith.constant dense<0.000000e+00> : vector<8xf32>
    %129 = vector.multi_reduction <add>, %128, %cst_66 [1] : vector<8x256xf32> to vector<8xf32>
    %130 = vector.shape_cast %129 : vector<8xf32> to vector<8x1xf32>
    %cst_67 = arith.constant 2.560000e+02 : f32
    %131 = vector.broadcast %cst_67 : f32 to vector<8x1xf32>
    %132 = arith.divf %130, %131 : vector<8x1xf32>
    %133 = arith.mulf %127, %127 : vector<8x1xf32>
    %134 = arith.subf %132, %133 : vector<8x1xf32>
    %135 = vector.broadcast %127 : vector<8x1xf32> to vector<8x256xf32>
    %136 = arith.subf %119, %135 : vector<8x256xf32>
    %cst_68 = arith.constant 9.99999974E-6 : f32
    %137 = vector.broadcast %cst_68 : f32 to vector<8x1xf32>
    %138 = arith.addf %134, %137 : vector<8x1xf32>
    %139 = math.rsqrt %138 : vector<8x1xf32>
    %140 = vector.broadcast %139 : vector<8x1xf32> to vector<8x256xf32>
    %141 = arith.mulf %136, %140 : vector<8x256xf32>
    %142 = vector.broadcast %121 : vector<1x256xf32> to vector<8x256xf32>
    %143 = arith.mulf %141, %142 : vector<8x256xf32>
    %144 = vector.broadcast %123 : vector<1x256xf32> to vector<8x256xf32>
    %145 = arith.addf %143, %144 : vector<8x256xf32>
    %c1 = arith.constant 1 : index
    %c0_69 = arith.constant 0 : index
    %c0_70 = arith.constant 0 : index
    %146 = vector.load %arg4[%c1, %c0_69, %c0_70] : memref<2x256x768xbf16, #tpu.memory_space<vmem>>, vector<1x256x768xbf16>
    %147 = vector.shape_cast %146 : vector<1x256x768xbf16> to vector<256x768xbf16>
    %148 = arith.truncf %145 : vector<8x256xf32> to vector<8x256xbf16>
    %cst_71 = arith.constant dense<0.000000e+00> : vector<8x768xf32>
    %149 = tpu.matmul %148, %147, %cst_71 {dimension_numbers = #tpu.dot_dimension_numbers<[1], [0], [0], [1], [0, 0, 1, 1], [], []>} : vector<8x256xbf16>, vector<256x768xbf16>, vector<8x768xf32> -> vector<8x768xf32>
    %c1_72 = arith.constant 1 : index
    %c0_73 = arith.constant 0 : index
    %c0_74 = arith.constant 0 : index
    %150 = vector.load %arg5[%c1_72, %c0_73, %c0_74] : memref<2x1x768xf32, #tpu.memory_space<vmem>>, vector<1x1x768xf32>
    %151 = vector.shape_cast %150 : vector<1x1x768xf32> to vector<1x768xf32>
    %152 = vector.broadcast %151 : vector<1x768xf32> to vector<8x768xf32>
    %153 = arith.addf %149, %152 : vector<8x768xf32>
    %154 = vector.extract_strided_slice %153 {offsets = [0, 0], sizes = [8, 256], strides = [1, 1]} : vector<8x768xf32> to vector<8x256xf32>
    %155 = vector.extract_strided_slice %153 {offsets = [0, 256], sizes = [8, 256], strides = [1, 1]} : vector<8x768xf32> to vector<8x256xf32>
    %156 = vector.extract_strided_slice %153 {offsets = [0, 512], sizes = [8, 256], strides = [1, 1]} : vector<8x768xf32> to vector<8x256xf32>
    %c1_75 = arith.constant 1 : index
    %c0_76 = arith.constant 0 : index
    %c0_77 = arith.constant 0 : index
    %157 = vector.load %arg6[%c1_75, %c0_76, %c0_77] : memref<2x256x256xbf16, #tpu.memory_space<vmem>>, vector<1x256x256xbf16>
    %158 = vector.shape_cast %157 : vector<1x256x256xbf16> to vector<256x256xbf16>
    %c1_78 = arith.constant 1 : index
    %c0_79 = arith.constant 0 : index
    %c0_80 = arith.constant 0 : index
    %159 = vector.load %arg7[%c1_78, %c0_79, %c0_80] : memref<2x1x256xf32, #tpu.memory_space<vmem>>, vector<1x1x256xf32>
    %160 = vector.shape_cast %159 : vector<1x1x256xf32> to vector<1x256xf32>
    %161 = vector.extract_strided_slice %154 {offsets = [0, 0], sizes = [8, 128], strides = [1, 1]} : vector<8x256xf32> to vector<8x128xf32>
    %cst_81 = arith.constant 0.0883883461 : f32
    %162 = vector.broadcast %cst_81 : f32 to vector<8x128xf32>
    %163 = arith.mulf %161, %162 : vector<8x128xf32>
    %164 = vector.extract_strided_slice %155 {offsets = [0, 0], sizes = [8, 128], strides = [1, 1]} : vector<8x256xf32> to vector<8x128xf32>
    %165 = vector.extract_strided_slice %156 {offsets = [0, 0], sizes = [8, 128], strides = [1, 1]} : vector<8x256xf32> to vector<8x128xf32>
    %166 = arith.truncf %163 : vector<8x128xf32> to vector<8x128xbf16>
    %167 = arith.truncf %164 : vector<8x128xf32> to vector<8x128xbf16>
    %cst_82 = arith.constant dense<0.000000e+00> : vector<8x8xf32>
    %168 = tpu.matmul %166, %167, %cst_82 {dimension_numbers = #tpu.dot_dimension_numbers<[1], [1], [0], [0], [0, 0, 1, 0], [], []>} : vector<8x128xbf16>, vector<8x128xbf16>, vector<8x8xf32> -> vector<8x8xf32>
    %169 = arith.addf %168, %3 : vector<8x8xf32>
    %cst_83 = arith.constant dense<0xFF800000> : vector<8xf32>
    %170 = vector.multi_reduction <maximumf>, %169, %cst_83 [1] : vector<8x8xf32> to vector<8xf32>
    %171 = vector.shape_cast %170 : vector<8xf32> to vector<8x1xf32>
    %172 = vector.broadcast %171 : vector<8x1xf32> to vector<8x8xf32>
    %173 = arith.subf %169, %172 : vector<8x8xf32>
    %174 = math.exp %173 : vector<8x8xf32>
    %cst_84 = arith.constant dense<0.000000e+00> : vector<8xf32>
    %175 = vector.multi_reduction <add>, %174, %cst_84 [1] : vector<8x8xf32> to vector<8xf32>
    %176 = vector.shape_cast %175 : vector<8xf32> to vector<8x1xf32>
    %177 = tpu.reciprocal %176 {approx = true} : vector<8x1xf32> -> vector<8x1xf32>
    %178 = vector.broadcast %177 : vector<8x1xf32> to vector<8x8xf32>
    %179 = arith.mulf %174, %178 : vector<8x8xf32>
    %180 = arith.truncf %179 : vector<8x8xf32> to vector<8x8xbf16>
    %181 = arith.truncf %165 : vector<8x128xf32> to vector<8x128xbf16>
    %cst_85 = arith.constant dense<0.000000e+00> : vector<8x128xf32>
    %182 = tpu.matmul %180, %181, %cst_85 {dimension_numbers = #tpu.dot_dimension_numbers<[1], [0], [0], [1], [0, 0, 1, 1], [], []>} : vector<8x8xbf16>, vector<8x128xbf16>, vector<8x128xf32> -> vector<8x128xf32>
    %183 = vector.extract_strided_slice %158 {offsets = [0, 0], sizes = [128, 256], strides = [1, 1]} : vector<256x256xbf16> to vector<128x256xbf16>
    %184 = arith.truncf %182 : vector<8x128xf32> to vector<8x128xbf16>
    %cst_86 = arith.constant dense<0.000000e+00> : vector<8x256xf32>
    %185 = tpu.matmul %184, %183, %cst_86 {dimension_numbers = #tpu.dot_dimension_numbers<[1], [0], [0], [1], [0, 0, 1, 1], [], []>} : vector<8x128xbf16>, vector<128x256xbf16>, vector<8x256xf32> -> vector<8x256xf32>
    %186 = vector.broadcast %160 : vector<1x256xf32> to vector<8x256xf32>
    %187 = arith.addf %186, %185 : vector<8x256xf32>
    %188 = vector.extract_strided_slice %154 {offsets = [0, 128], sizes = [8, 128], strides = [1, 1]} : vector<8x256xf32> to vector<8x128xf32>
    %cst_87 = arith.constant 0.0883883461 : f32
    %189 = vector.broadcast %cst_87 : f32 to vector<8x128xf32>
    %190 = arith.mulf %188, %189 : vector<8x128xf32>
    %191 = vector.extract_strided_slice %155 {offsets = [0, 128], sizes = [8, 128], strides = [1, 1]} : vector<8x256xf32> to vector<8x128xf32>
    %192 = vector.extract_strided_slice %156 {offsets = [0, 128], sizes = [8, 128], strides = [1, 1]} : vector<8x256xf32> to vector<8x128xf32>
    %193 = arith.truncf %190 : vector<8x128xf32> to vector<8x128xbf16>
    %194 = arith.truncf %191 : vector<8x128xf32> to vector<8x128xbf16>
    %cst_88 = arith.constant dense<0.000000e+00> : vector<8x8xf32>
    %195 = tpu.matmul %193, %194, %cst_88 {dimension_numbers = #tpu.dot_dimension_numbers<[1], [1], [0], [0], [0, 0, 1, 0], [], []>} : vector<8x128xbf16>, vector<8x128xbf16>, vector<8x8xf32> -> vector<8x8xf32>
    %196 = arith.addf %195, %3 : vector<8x8xf32>
    %cst_89 = arith.constant dense<0xFF800000> : vector<8xf32>
    %197 = vector.multi_reduction <maximumf>, %196, %cst_89 [1] : vector<8x8xf32> to vector<8xf32>
    %198 = vector.shape_cast %197 : vector<8xf32> to vector<8x1xf32>
    %199 = vector.broadcast %198 : vector<8x1xf32> to vector<8x8xf32>
    %200 = arith.subf %196, %199 : vector<8x8xf32>
    %201 = math.exp %200 : vector<8x8xf32>
    %cst_90 = arith.constant dense<0.000000e+00> : vector<8xf32>
    %202 = vector.multi_reduction <add>, %201, %cst_90 [1] : vector<8x8xf32> to vector<8xf32>
    %203 = vector.shape_cast %202 : vector<8xf32> to vector<8x1xf32>
    %204 = tpu.reciprocal %203 {approx = true} : vector<8x1xf32> -> vector<8x1xf32>
    %205 = vector.broadcast %204 : vector<8x1xf32> to vector<8x8xf32>
    %206 = arith.mulf %201, %205 : vector<8x8xf32>
    %207 = arith.truncf %206 : vector<8x8xf32> to vector<8x8xbf16>
    %208 = arith.truncf %192 : vector<8x128xf32> to vector<8x128xbf16>
    %cst_91 = arith.constant dense<0.000000e+00> : vector<8x128xf32>
    %209 = tpu.matmul %207, %208, %cst_91 {dimension_numbers = #tpu.dot_dimension_numbers<[1], [0], [0], [1], [0, 0, 1, 1], [], []>} : vector<8x8xbf16>, vector<8x128xbf16>, vector<8x128xf32> -> vector<8x128xf32>
    %210 = vector.extract_strided_slice %158 {offsets = [128, 0], sizes = [128, 256], strides = [1, 1]} : vector<256x256xbf16> to vector<128x256xbf16>
    %211 = arith.truncf %209 : vector<8x128xf32> to vector<8x128xbf16>
    %cst_92 = arith.constant dense<0.000000e+00> : vector<8x256xf32>
    %212 = tpu.matmul %211, %210, %cst_92 {dimension_numbers = #tpu.dot_dimension_numbers<[1], [0], [0], [1], [0, 0, 1, 1], [], []>} : vector<8x128xbf16>, vector<128x256xbf16>, vector<8x256xf32> -> vector<8x256xf32>
    %213 = arith.addf %187, %212 : vector<8x256xf32>
    %214 = arith.addf %145, %213 : vector<8x256xf32>
    %c1_93 = arith.constant 1 : index
    %c0_94 = arith.constant 0 : index
    %c0_95 = arith.constant 0 : index
    %215 = vector.load %arg8[%c1_93, %c0_94, %c0_95] : memref<2x1x256xf32, #tpu.memory_space<vmem>>, vector<1x1x256xf32>
    %216 = vector.shape_cast %215 : vector<1x1x256xf32> to vector<1x256xf32>
    %c1_96 = arith.constant 1 : index
    %c0_97 = arith.constant 0 : index
    %c0_98 = arith.constant 0 : index
    %217 = vector.load %arg9[%c1_96, %c0_97, %c0_98] : memref<2x1x256xf32, #tpu.memory_space<vmem>>, vector<1x1x256xf32>
    %218 = vector.shape_cast %217 : vector<1x1x256xf32> to vector<1x256xf32>
    %cst_99 = arith.constant dense<0.000000e+00> : vector<8xf32>
    %219 = vector.multi_reduction <add>, %214, %cst_99 [1] : vector<8x256xf32> to vector<8xf32>
    %220 = vector.shape_cast %219 : vector<8xf32> to vector<8x1xf32>
    %cst_100 = arith.constant 2.560000e+02 : f32
    %221 = vector.broadcast %cst_100 : f32 to vector<8x1xf32>
    %222 = arith.divf %220, %221 : vector<8x1xf32>
    %223 = arith.mulf %214, %214 : vector<8x256xf32>
    %cst_101 = arith.constant dense<0.000000e+00> : vector<8xf32>
    %224 = vector.multi_reduction <add>, %223, %cst_101 [1] : vector<8x256xf32> to vector<8xf32>
    %225 = vector.shape_cast %224 : vector<8xf32> to vector<8x1xf32>
    %cst_102 = arith.constant 2.560000e+02 : f32
    %226 = vector.broadcast %cst_102 : f32 to vector<8x1xf32>
    %227 = arith.divf %225, %226 : vector<8x1xf32>
    %228 = arith.mulf %222, %222 : vector<8x1xf32>
    %229 = arith.subf %227, %228 : vector<8x1xf32>
    %230 = vector.broadcast %222 : vector<8x1xf32> to vector<8x256xf32>
    %231 = arith.subf %214, %230 : vector<8x256xf32>
    %cst_103 = arith.constant 9.99999974E-6 : f32
    %232 = vector.broadcast %cst_103 : f32 to vector<8x1xf32>
    %233 = arith.addf %229, %232 : vector<8x1xf32>
    %234 = math.rsqrt %233 : vector<8x1xf32>
    %235 = vector.broadcast %234 : vector<8x1xf32> to vector<8x256xf32>
    %236 = arith.mulf %231, %235 : vector<8x256xf32>
    %237 = vector.broadcast %216 : vector<1x256xf32> to vector<8x256xf32>
    %238 = arith.mulf %236, %237 : vector<8x256xf32>
    %239 = vector.broadcast %218 : vector<1x256xf32> to vector<8x256xf32>
    %240 = arith.addf %238, %239 : vector<8x256xf32>
    %c1_104 = arith.constant 1 : index
    %c0_105 = arith.constant 0 : index
    %c0_106 = arith.constant 0 : index
    %241 = vector.load %arg10[%c1_104, %c0_105, %c0_106] : memref<2x256x256xbf16, #tpu.memory_space<vmem>>, vector<1x256x256xbf16>
    %242 = vector.shape_cast %241 : vector<1x256x256xbf16> to vector<256x256xbf16>
    %243 = arith.truncf %240 : vector<8x256xf32> to vector<8x256xbf16>
    %cst_107 = arith.constant dense<0.000000e+00> : vector<8x256xf32>
    %244 = tpu.matmul %243, %242, %cst_107 {dimension_numbers = #tpu.dot_dimension_numbers<[1], [0], [0], [1], [0, 0, 1, 1], [], []>} : vector<8x256xbf16>, vector<256x256xbf16>, vector<8x256xf32> -> vector<8x256xf32>
    %c1_108 = arith.constant 1 : index
    %c0_109 = arith.constant 0 : index
    %c0_110 = arith.constant 0 : index
    %245 = vector.load %arg11[%c1_108, %c0_109, %c0_110] : memref<2x1x256xf32, #tpu.memory_space<vmem>>, vector<1x1x256xf32>
    %246 = vector.shape_cast %245 : vector<1x1x256xf32> to vector<1x256xf32>
    %247 = vector.broadcast %246 : vector<1x256xf32> to vector<8x256xf32>
    %248 = arith.addf %244, %247 : vector<8x256xf32>
    %cst_111 = arith.constant 0.000000e+00 : f32
    %249 = vector.broadcast %cst_111 : f32 to vector<8x256xf32>
    %250 = arith.maximumf %248, %249 : vector<8x256xf32>
    %c1_112 = arith.constant 1 : index
    %c0_113 = arith.constant 0 : index
    %c0_114 = arith.constant 0 : index
    %251 = vector.load %arg12[%c1_112, %c0_113, %c0_114] : memref<2x256x256xbf16, #tpu.memory_space<vmem>>, vector<1x256x256xbf16>
    %252 = vector.shape_cast %251 : vector<1x256x256xbf16> to vector<256x256xbf16>
    %253 = arith.truncf %250 : vector<8x256xf32> to vector<8x256xbf16>
    %cst_115 = arith.constant dense<0.000000e+00> : vector<8x256xf32>
    %254 = tpu.matmul %253, %252, %cst_115 {dimension_numbers = #tpu.dot_dimension_numbers<[1], [0], [0], [1], [0, 0, 1, 1], [], []>} : vector<8x256xbf16>, vector<256x256xbf16>, vector<8x256xf32> -> vector<8x256xf32>
    %c1_116 = arith.constant 1 : index
    %c0_117 = arith.constant 0 : index
    %c0_118 = arith.constant 0 : index
    %255 = vector.load %arg13[%c1_116, %c0_117, %c0_118] : memref<2x1x256xf32, #tpu.memory_space<vmem>>, vector<1x1x256xf32>
    %256 = vector.shape_cast %255 : vector<1x1x256xf32> to vector<1x256xf32>
    %257 = vector.broadcast %256 : vector<1x256xf32> to vector<8x256xf32>
    %258 = arith.addf %254, %257 : vector<8x256xf32>
    %259 = arith.addf %240, %258 : vector<8x256xf32>
    %c1_119 = arith.constant 1 : index
    %c0_120 = arith.constant 0 : index
    %c0_121 = arith.constant 0 : index
    %260 = vector.load %arg14[%c1_119, %c0_120, %c0_121] : memref<2x1x256xf32, #tpu.memory_space<vmem>>, vector<1x1x256xf32>
    %261 = vector.shape_cast %260 : vector<1x1x256xf32> to vector<1x256xf32>
    %c1_122 = arith.constant 1 : index
    %c0_123 = arith.constant 0 : index
    %c0_124 = arith.constant 0 : index
    %262 = vector.load %arg15[%c1_122, %c0_123, %c0_124] : memref<2x1x256xf32, #tpu.memory_space<vmem>>, vector<1x1x256xf32>
    %263 = vector.shape_cast %262 : vector<1x1x256xf32> to vector<1x256xf32>
    %cst_125 = arith.constant dense<0.000000e+00> : vector<8xf32>
    %264 = vector.multi_reduction <add>, %259, %cst_125 [1] : vector<8x256xf32> to vector<8xf32>
    %265 = vector.shape_cast %264 : vector<8xf32> to vector<8x1xf32>
    %cst_126 = arith.constant 2.560000e+02 : f32
    %266 = vector.broadcast %cst_126 : f32 to vector<8x1xf32>
    %267 = arith.divf %265, %266 : vector<8x1xf32>
    %268 = arith.mulf %259, %259 : vector<8x256xf32>
    %cst_127 = arith.constant dense<0.000000e+00> : vector<8xf32>
    %269 = vector.multi_reduction <add>, %268, %cst_127 [1] : vector<8x256xf32> to vector<8xf32>
    %270 = vector.shape_cast %269 : vector<8xf32> to vector<8x1xf32>
    %cst_128 = arith.constant 2.560000e+02 : f32
    %271 = vector.broadcast %cst_128 : f32 to vector<8x1xf32>
    %272 = arith.divf %270, %271 : vector<8x1xf32>
    %273 = arith.mulf %267, %267 : vector<8x1xf32>
    %274 = arith.subf %272, %273 : vector<8x1xf32>
    %275 = vector.broadcast %267 : vector<8x1xf32> to vector<8x256xf32>
    %276 = arith.subf %259, %275 : vector<8x256xf32>
    %cst_129 = arith.constant 9.99999974E-6 : f32
    %277 = vector.broadcast %cst_129 : f32 to vector<8x1xf32>
    %278 = arith.addf %274, %277 : vector<8x1xf32>
    %279 = math.rsqrt %278 : vector<8x1xf32>
    %280 = vector.broadcast %279 : vector<8x1xf32> to vector<8x256xf32>
    %281 = arith.mulf %276, %280 : vector<8x256xf32>
    %282 = vector.broadcast %261 : vector<1x256xf32> to vector<8x256xf32>
    %283 = arith.mulf %281, %282 : vector<8x256xf32>
    %284 = vector.broadcast %263 : vector<1x256xf32> to vector<8x256xf32>
    %285 = arith.addf %283, %284 : vector<8x256xf32>
    %286 = arith.addf %5, %285 : vector<8x256xf32>
    %c0_130 = arith.constant 0 : index
    %c0_131 = arith.constant 0 : index
    %c0_132 = arith.constant 0 : index
    %287 = vector.load %arg16[%c0_130, %c0_131, %c0_132] : memref<1x8x256xf32, #tpu.memory_space<vmem>>, vector<1x8x256xf32>
    %288 = vector.shape_cast %287 : vector<1x8x256xf32> to vector<8x256xf32>
    %289 = vector.shape_cast %286 : vector<8x256xf32> to vector<1x8x256xf32>
    tpu.vector_store %arg16[%c0_130, %c0_131, %c0_132], %289 {strides = array<i32>} : memref<1x8x256xf32, #tpu.memory_space<vmem>>, vector<1x8x256xf32>,
    return
  }
  func.func @transform_0(%arg0: i32) -> (i32, i32, i32) {
    %c0_i32 = arith.constant 0 : i32
    %c0_i32_0 = arith.constant 0 : i32
    %c0_i32_1 = arith.constant 0 : i32
    return %arg0, %c0_i32, %c0_i32_0 : i32, i32, i32
  }
  func.func @transform_1(%arg0: i32) -> (i32, i32, i32) {
    %c0_i32 = arith.constant 0 : i32
    %c0_i32_0 = arith.constant 0 : i32
    %c0_i32_1 = arith.constant 0 : i32
    return %arg0, %c0_i32, %c0_i32_0 : i32, i32, i32
  }
  func.func @transform_2(%arg0: i32) -> (i32, i32) {
    %c0_i32 = arith.constant 0 : i32
    %c0_i32_0 = arith.constant 0 : i32
    %c0_i32_1 = arith.constant 0 : i32
    return %c0_i32, %c0_i32_0 : i32, i32
  }
  func.func @transform_3(%arg0: i32) -> (i32, i32, i32) {
    %c0_i32 = arith.constant 0 : i32
    %c0_i32_0 = arith.constant 0 : i32
    %c0_i32_1 = arith.constant 0 : i32
    %c0_i32_2 = arith.constant 0 : i32
    return %c0_i32, %c0_i32_0, %c0_i32_1 : i32, i32, i32
  }
  func.func @transform_4(%arg0: i32) -> (i32, i32, i32) {
    %c0_i32 = arith.constant 0 : i32
    %c0_i32_0 = arith.constant 0 : i32
    %c0_i32_1 = arith.constant 0 : i32
    %c0_i32_2 = arith.constant 0 : i32
    return %c0_i32, %c0_i32_0, %c0_i32_1 : i32, i32, i32
  }
  func.func @transform_5(%arg0: i32) -> (i32, i32, i32) {
    %c0_i32 = arith.constant 0 : i32
    %c0_i32_0 = arith.constant 0 : i32
    %c0_i32_1 = arith.constant 0 : i32
    %c0_i32_2 = arith.constant 0 : i32
    return %c0_i32, %c0_i32_0, %c0_i32_1 : i32, i32, i32
  }
  func.func @transform_6(%arg0: i32) -> (i32, i32, i32) {
    %c0_i32 = arith.constant 0 : i32
    %c0_i32_0 = arith.constant 0 : i32
    %c0_i32_1 = arith.constant 0 : i32
    %c0_i32_2 = arith.constant 0 : i32
    return %c0_i32, %c0_i32_0, %c0_i32_1 : i32, i32, i32
  }
  func.func @transform_7(%arg0: i32) -> (i32, i32, i32) {
    %c0_i32 = arith.constant 0 : i32
    %c0_i32_0 = arith.constant 0 : i32
    %c0_i32_1 = arith.constant 0 : i32
    %c0_i32_2 = arith.constant 0 : i32
    return %c0_i32, %c0_i32_0, %c0_i32_1 : i32, i32, i32
  }
  func.func @transform_8(%arg0: i32) -> (i32, i32, i32) {
    %c0_i32 = arith.constant 0 : i32
    %c0_i32_0 = arith.constant 0 : i32
    %c0_i32_1 = arith.constant 0 : i32
    %c0_i32_2 = arith.constant 0 : i32
    return %c0_i32, %c0_i32_0, %c0_i32_1 : i32, i32, i32
  }
  func.func @transform_9(%arg0: i32) -> (i32, i32, i32) {
    %c0_i32 = arith.constant 0 : i32
    %c0_i32_0 = arith.constant 0 : i32
    %c0_i32_1 = arith.constant 0 : i32
    %c0_i32_2 = arith.constant 0 : i32
    return %c0_i32, %c0_i32_0, %c0_i32_1 : i32, i32, i32
  }
  func.func @transform_10(%arg0: i32) -> (i32, i32, i32) {
    %c0_i32 = arith.constant 0 : i32
    %c0_i32_0 = arith.constant 0 : i32
    %c0_i32_1 = arith.constant 0 : i32
    %c0_i32_2 = arith.constant 0 : i32
    return %c0_i32, %c0_i32_0, %c0_i32_1 : i32, i32, i32
  }
  func.func @transform_11(%arg0: i32) -> (i32, i32, i32) {
    %c0_i32 = arith.constant 0 : i32
    %c0_i32_0 = arith.constant 0 : i32
    %c0_i32_1 = arith.constant 0 : i32
    %c0_i32_2 = arith.constant 0 : i32
    return %c0_i32, %c0_i32_0, %c0_i32_1 : i32, i32, i32
  }
  func.func @transform_12(%arg0: i32) -> (i32, i32, i32) {
    %c0_i32 = arith.constant 0 : i32
    %c0_i32_0 = arith.constant 0 : i32
    %c0_i32_1 = arith.constant 0 : i32
    %c0_i32_2 = arith.constant 0 : i32
    return %c0_i32, %c0_i32_0, %c0_i32_1 : i32, i32, i32
  }
  func.func @transform_13(%arg0: i32) -> (i32, i32, i32) {
    %c0_i32 = arith.constant 0 : i32
    %c0_i32_0 = arith.constant 0 : i32
    %c0_i32_1 = arith.constant 0 : i32
    %c0_i32_2 = arith.constant 0 : i32
    return %c0_i32, %c0_i32_0, %c0_i32_1 : i32, i32, i32
  }
  func.func @transform_14(%arg0: i32) -> (i32, i32, i32) {
    %c0_i32 = arith.constant 0 : i32
    %c0_i32_0 = arith.constant 0 : i32
    %c0_i32_1 = arith.constant 0 : i32
    %c0_i32_2 = arith.constant 0 : i32
    return %c0_i32, %c0_i32_0, %c0_i32_1 : i32, i32, i32
  }
  func.func @transform_15(%arg0: i32) -> (i32, i32, i32) {
    %c0_i32 = arith.constant 0 : i32
    %c0_i32_0 = arith.constant 0 : i32
    %c0_i32_1 = arith.constant 0 : i32
    return %arg0, %c0_i32, %c0_i32_0 : i32, i32, i32
  }
}

</mosaic_0001>

<llo_original>
// kernel: intention_social_transformer_forward_batched.1
$region0: #{intention_social_transformer_forward_batched.1}
  #allocation0 [shape = 'u32[]', space=smem, size = 0x4, offset = 0x4, fixed_abs, tag = 'smem constant byte address 0x4 - core index']
  #allocation1 [shape = 'u32[72,128]{1,0:T(1,128)}', space=vmem, size = 0x9000, scoped, tag = 'internal scratch']
  %s0 = inlined_call_operand.vmem [shape: bf16[4,8,128], index: 0, kind: input, shape index: {}]
  %s1 = inlined_call_operand.vmem [shape: f32[4,8,8], index: 1, kind: input, shape index: {}]
  %s2 = inlined_call_operand.vmem [shape: bf16[128,256], index: 2, kind: input, shape index: {}]
  %s3 = inlined_call_operand.vmem [shape: bf16[2,256,768], index: 3, kind: input, shape index: {}]
  %s4 = inlined_call_operand.vmem [shape: f32[2,1,768], index: 4, kind: input, shape index: {}]
  %s5 = inlined_call_operand.vmem [shape: bf16[2,256,256], index: 5, kind: input, shape index: {}]
  %s6 = inlined_call_operand.vmem [shape: f32[2,1,256], index: 6, kind: input, shape index: {}]
  %s7 = inlined_call_operand.vmem [shape: f32[2,1,256], index: 7, kind: input, shape index: {}]
  %s8 = inlined_call_operand.vmem [shape: f32[2,1,256], index: 8, kind: input, shape index: {}]
  %s9 = inlined_call_operand.vmem [shape: bf16[2,256,256], index: 9, kind: input, shape index: {}]
  %s10 = inlined_call_operand.vmem [shape: f32[2,1,256], index: 10, kind: input, shape index: {}]
  %s11 = inlined_call_operand.vmem [shape: bf16[2,256,256], index: 11, kind: input, shape index: {}]
  %s12 = inlined_call_operand.vmem [shape: f32[2,1,256], index: 12, kind: input, shape index: {}]
  %s13 = inlined_call_operand.vmem [shape: f32[2,1,256], index: 13, kind: input, shape index: {}]
  %s14 = inlined_call_operand.vmem [shape: f32[2,1,256], index: 14, kind: input, shape index: {}]
  %s15 = inlined_call_operand.hbm [shape: f32[4,8,256], index: 15, kind: output, shape index: {}]
  %s16 = sld [smem:[#allocation0]]
  $region93: #{intention_social_transformer_forward_batched.1} parent=0
    _
  %s18 = ssub.s32 1, %s16
  %s19 = scalar_select 0, %s18, %s16
  $region1: #{intention_social_transformer_forward_batched.1} parent=0
    #allocation2 [shape = 'u8[16384]{0}', space=vmem, size = 0x4000, scoped, tag = 'output window, operand 0']
    #allocation3 [shape = 's32[2]{0}', space=sflag, size = 0x8, scoped, tag = 'scoped memory for intention_social_transformer_forward_batched.1']
    %20 = vsyncpa [#allocation3], 0
    %s21 = scalar_lea.sflag [#allocation3], 1
    %22 = vsyncpa %s21, 0
    loop: start=0, step=1, limit=6
    $region2: #{intention_social_transformer_forward_batched.1} parent=1 // loop_pre_header
      _
    $region3: #{intention_social_transformer_forward_batched.1} parent=1 // loop_header
      %s24 = sphi 0, %s28
      %p25 = scmp.ge.s32.totalorder %s24, 6
      %s34 = sphi 0, %s36
      %s37 = sphi 0, %s34
      %s38 = sphi 0, %s37
      %s54 = sphi 0, %s38
      %s60 = sphi 0, %s62
      %s63 = sphi 0, %s60
      %s64 = sphi 0, %s63
      %s80 = sphi 0, %s64
      %s84 = sphi 0, %s84
      %s86 = sphi 0, %s84
      %s87 = sphi 0, %s86
      %s101 = sphi 0, %s87
      %s105 = sphi 0, %s105
      %s107 = sphi 0, %s105
      %s108 = sphi 0, %s107
      %s122 = sphi 0, %s108
      %s126 = sphi 0, %s126
      %s128 = sphi 0, %s126
      %s129 = sphi 0, %s128
      %s143 = sphi 0, %s129
      %s147 = sphi 0, %s147
      %s149 = sphi 0, %s147
      %s150 = sphi 0, %s149
      %s164 = sphi 0, %s150
      %s168 = sphi 0, %s168
      %s170 = sphi 0, %s168
      %s171 = sphi 0, %s170
      %s185 = sphi 0, %s171
      %s189 = sphi 0, %s189
      %s191 = sphi 0, %s189
      %s192 = sphi 0, %s191
      %s206 = sphi 0, %s192
      %s210 = sphi 0, %s210
      %s212 = sphi 0, %s210
      %s213 = sphi 0, %s212
      %s227 = sphi 0, %s213
      %s231 = sphi 0, %s231
      %s233 = sphi 0, %s231
      %s234 = sphi 0, %s233
      %s248 = sphi 0, %s234
      %s252 = sphi 0, %s252
      %s254 = sphi 0, %s252
      %s255 = sphi 0, %s254
      %s269 = sphi 0, %s255
      %s273 = sphi 0, %s273
      %s275 = sphi 0, %s273
      %s276 = sphi 0, %s275
      %s290 = sphi 0, %s276
      %s294 = sphi 0, %s294
      %s296 = sphi 0, %s294
      %s297 = sphi 0, %s296
      %s311 = sphi 0, %s297
      %s315 = sphi 0, %s315
      %s317 = sphi 0, %s315
      %s318 = sphi 0, %s317
      %s332 = sphi 0, %s318
      %s336 = sphi 0, %s336
      %s338 = sphi 0, %s336
      %s339 = sphi 0, %s338
      %s353 = sphi 0, %s339
      %s359 = sphi 0, %s361
      %s362 = sphi 0, %s359
      %s363 = sphi 0, %s362
      %s379 = sphi 0, %s363
    $region4: #{intention_social_transformer_forward_batched.1} parent=1 // loop_header_branch
      %27 = sbr.rel (%p25) target = $region8
    $region5: #{intention_social_transformer_forward_batched.1} parent=1 // loop_body
      %s29 = ssub.s32 %s24, 1
      %s30 = ssub.s32 %s24, 2
      %s31 = sadd.s32 %s24, 1
      %s32 = ssub.s32 %s24, %s31
      %p33 = scmp.eq.s32.totalorder %s32, 0
      %s35 = sadd.s32 %s34, 1
      %s36 = scalar_select %p33, %s34, %s35
      %p39 = pneg %p33
      %p40 = scmp.eq.s32.totalorder %s24, 3
      %p41 = por %p39, %p40
      %p42 = scmp.ne.s32.totalorder %s34, %s37
      %p43 = scmp.eq.s32.totalorder %s24, 0
      %p44 = por %p42, %p43
      %p45 = scmp.ne.s32.totalorder %s34, %s37
      %p46 = scmp.eq.s32.totalorder %s29, 3
      %p47 = por %p45, %p46
      %p48 = scmp.ne.s32.totalorder %s37, %s38
      %p49 = scmp.eq.s32.totalorder %s29, 0
      %p50 = por %p48, %p49
      %p51 = scmp.ne.s32.totalorder %s37, %s38
      %p52 = scmp.eq.s32.totalorder %s30, 3
      %p53 = por %p51, %p52
      %p55 = scmp.ne.s32.totalorder %s38, %s54
      %p56 = scmp.eq.s32.totalorder %s30, 0
      %p57 = por %p55, %p56
      %s58 = ssub.s32 %s24, %s31
      %p59 = scmp.eq.s32.totalorder %s58, 0
      %s61 = sadd.s32 %s60, 1
      %s62 = scalar_select %p59, %s60, %s61
      %p65 = pneg %p59
      %p66 = scmp.eq.s32.totalorder %s24, 3
      %p67 = por %p65, %p66
      %p68 = scmp.ne.s32.totalorder %s60, %s63
      %p69 = scmp.eq.s32.totalorder %s24, 0
      %p70 = por %p68, %p69
      %p71 = scmp.ne.s32.totalorder %s60, %s63
      %p72 = scmp.eq.s32.totalorder %s29, 3
      %p73 = por %p71, %p72
      %p74 = scmp.ne.s32.totalorder %s63, %s64
      %p75 = scmp.eq.s32.totalorder %s29, 0
      %p76 = por %p74, %p75
      %p77 = scmp.ne.s32.totalorder %s63, %s64
      %p78 = scmp.eq.s32.totalorder %s30, 3
      %p79 = por %p77, %p78
      %p81 = scmp.ne.s32.totalorder %s64, %s80
      %p82 = scmp.eq.s32.totalorder %s30, 0
      %p83 = por %p81, %p82
      %s85 = sadd.s32 %s84, 1
      %p88 = scmp.eq.s32.totalorder %s24, 3
      %p89 = scmp.ne.s32.totalorder %s84, %s86
      %p90 = scmp.eq.s32.totalorder %s24, 0
      %p91 = por %p89, %p90
      %p92 = scmp.ne.s32.totalorder %s84, %s86
      %p93 = scmp.eq.s32.totalorder %s29, 3
      %p94 = por %p92, %p93
      %p95 = scmp.ne.s32.totalorder %s86, %s87
      %p96 = scmp.eq.s32.totalorder %s29, 0
      %p97 = por %p95, %p96
      %p98 = scmp.ne.s32.totalorder %s86, %s87
      %p99 = scmp.eq.s32.totalorder %s30, 3
      %p100 = por %p98, %p99
      %p102 = scmp.ne.s32.totalorder %s87, %s101
      %p103 = scmp.eq.s32.totalorder %s30, 0
      %p104 = por %p102, %p103
      %s106 = sadd.s32 %s105, 1
      %p109 = scmp.eq.s32.totalorder %s24, 3
      %p110 = scmp.ne.s32.totalorder %s105, %s107
      %p111 = scmp.eq.s32.totalorder %s24, 0
      %p112 = por %p110, %p111
      %p113 = scmp.ne.s32.totalorder %s105, %s107
      %p114 = scmp.eq.s32.totalorder %s29, 3
      %p115 = por %p113, %p114
      %p116 = scmp.ne.s32.totalorder %s107, %s108
      %p117 = scmp.eq.s32.totalorder %s29, 0
      %p118 = por %p116, %p117
      %p119 = scmp.ne.s32.totalorder %s107, %s108
      %p120 = scmp.eq.s32.totalorder %s30, 3
      %p121 = por %p119, %p120
      %p123 = scmp.ne.s32.totalorder %s108, %s122
      %p124 = scmp.eq.s32.totalorder %s30, 0
      %p125 = por %p123, %p124
      %s127 = sadd.s32 %s126, 1
      %p130 = scmp.eq.s32.totalorder %s24, 3
      %p131 = scmp.ne.s32.totalorder %s126, %s128
      %p132 = scmp.eq.s32.totalorder %s24, 0
      %p133 = por %p131, %p132
      %p134 = scmp.ne.s32.totalorder %s126, %s128
      %p135 = scmp.eq.s32.totalorder %s29, 3
      %p136 = por %p134, %p135
      %p137 = scmp.ne.s32.totalorder %s128, %s129
      %p138 = scmp.eq.s32.totalorder %s29, 0
      %p139 = por %p137, %p138
      %p140 = scmp.ne.s32.totalorder %s128, %s129
      %p141 = scmp.eq.s32.totalorder %s30, 3
      %p142 = por %p140, %p141
      %p144 = scmp.ne.s32.totalorder %s129, %s143
      %p145 = scmp.eq.s32.totalorder %s30, 0
      %p146 = por %p144, %p145
      %s148 = sadd.s32 %s147, 1
      %p151 = scmp.eq.s32.totalorder %s24, 3
      %p152 = scmp.ne.s32.totalorder %s147, %s149
      %p153 = scmp.eq.s32.totalorder %s24, 0
      %p154 = por %p152, %p153
      %p155 = scmp.ne.s32.totalorder %s147, %s149
      %p156 = scmp.eq.s32.totalorder %s29, 3
      %p157 = por %p155, %p156
      %p158 = scmp.ne.s32.totalorder %s149, %s150
      %p159 = scmp.eq.s32.totalorder %s29, 0
      %p160 = por %p158, %p159
      %p161 = scmp.ne.s32.totalorder %s149, %s150
      %p162 = scmp.eq.s32.totalorder %s30, 3
      %p163 = por %p161, %p162
      %p165 = scmp.ne.s32.totalorder %s150, %s164
      %p166 = scmp.eq.s32.totalorder %s30, 0
      %p167 = por %p165, %p166
      %s169 = sadd.s32 %s168, 1
      %p172 = scmp.eq.s32.totalorder %s24, 3
      %p173 = scmp.ne.s32.totalorder %s168, %s170
      %p174 = scmp.eq.s32.totalorder %s24, 0
      %p175 = por %p173, %p174
      %p176 = scmp.ne.s32.totalorder %s168, %s170
      %p177 = scmp.eq.s32.totalorder %s29, 3
      %p178 = por %p176, %p177
      %p179 = scmp.ne.s32.totalorder %s170, %s171
      %p180 = scmp.eq.s32.totalorder %s29, 0
      %p181 = por %p179, %p180
      %p182 = scmp.ne.s32.totalorder %s170, %s171
      %p183 = scmp.eq.s32.totalorder %s30, 3
      %p184 = por %p182, %p183
      %p186 = scmp.ne.s32.totalorder %s171, %s185
      %p187 = scmp.eq.s32.totalorder %s30, 0
      %p188 = por %p186, %p187
      %s190 = sadd.s32 %s189, 1
      %p193 = scmp.eq.s32.totalorder %s24, 3
      %p194 = scmp.ne.s32.totalorder %s189, %s191
      %p195 = scmp.eq.s32.totalorder %s24, 0
      %p196 = por %p194, %p195
      %p197 = scmp.ne.s32.totalorder %s189, %s191
      %p198 = scmp.eq.s32.totalorder %s29, 3
      %p199 = por %p197, %p198
      %p200 = scmp.ne.s32.totalorder %s191, %s192
      %p201 = scmp.eq.s32.totalorder %s29, 0
      %p202 = por %p200, %p201
      %p203 = scmp.ne.s32.totalorder %s191, %s192
      %p204 = scmp.eq.s32.totalorder %s30, 3
      %p205 = por %p203, %p204
      %p207 = scmp.ne.s32.totalorder %s192, %s206
      %p208 = scmp.eq.s32.totalorder %s30, 0
      %p209 = por %p207, %p208
      %s211 = sadd.s32 %s210, 1
      %p214 = scmp.eq.s32.totalorder %s24, 3
      %p215 = scmp.ne.s32.totalorder %s210, %s212
      %p216 = scmp.eq.s32.totalorder %s24, 0
      %p217 = por %p215, %p216
      %p218 = scmp.ne.s32.totalorder %s210, %s212
      %p219 = scmp.eq.s32.totalorder %s29, 3
      %p220 = por %p218, %p219
      %p221 = scmp.ne.s32.totalorder %s212, %s213
      %p222 = scmp.eq.s32.totalorder %s29, 0
      %p223 = por %p221, %p222
      %p224 = scmp.ne.s32.totalorder %s212, %s213
      %p225 = scmp.eq.s32.totalorder %s30, 3
      %p226 = por %p224, %p225
      %p228 = scmp.ne.s32.totalorder %s213, %s227
      %p229 = scmp.eq.s32.totalorder %s30, 0
      %p230 = por %p228, %p229
      %s232 = sadd.s32 %s231, 1
      %p235 = scmp.eq.s32.totalorder %s24, 3
      %p236 = scmp.ne.s32.totalorder %s231, %s233
      %p237 = scmp.eq.s32.totalorder %s24, 0
      %p238 = por %p236, %p237
      %p239 = scmp.ne.s32.totalorder %s231, %s233
      %p240 = scmp.eq.s32.totalorder %s29, 3
      %p241 = por %p239, %p240
      %p242 = scmp.ne.s32.totalorder %s233, %s234
      %p243 = scmp.eq.s32.totalorder %s29, 0
      %p244 = por %p242, %p243
      %p245 = scmp.ne.s32.totalorder %s233, %s234
      %p246 = scmp.eq.s32.totalorder %s30, 3
      %p247 = por %p245, %p246
      %p249 = scmp.ne.s32.totalorder %s234, %s248
      %p250 = scmp.eq.s32.totalorder %s30, 0
      %p251 = por %p249, %p250
      %s253 = sadd.s32 %s252, 1
      %p256 = scmp.eq.s32.totalorder %s24, 3
      %p257 = scmp.ne.s32.totalorder %s252, %s254
      %p258 = scmp.eq.s32.totalorder %s24, 0
      %p259 = por %p257, %p258
      %p260 = scmp.ne.s32.totalorder %s252, %s254
      %p261 = scmp.eq.s32.totalorder %s29, 3
      %p262 = por %p260, %p261
      %p263 = scmp.ne.s32.totalorder %s254, %s255
      %p264 = scmp.eq.s32.totalorder %s29, 0
      %p265 = por %p263, %p264
      %p266 = scmp.ne.s32.totalorder %s254, %s255
      %p267 = scmp.eq.s32.totalorder %s30, 3
      %p268 = por %p266, %p267
      %p270 = scmp.ne.s32.totalorder %s255, %s269
      %p271 = scmp.eq.s32.totalorder %s30, 0
      %p272 = por %p270, %p271
      %s274 = sadd.s32 %s273, 1
      %p277 = scmp.eq.s32.totalorder %s24, 3
      %p278 = scmp.ne.s32.totalorder %s273, %s275
      %p279 = scmp.eq.s32.totalorder %s24, 0
      %p280 = por %p278, %p279
      %p281 = scmp.ne.s32.totalorder %s273, %s275
      %p282 = scmp.eq.s32.totalorder %s29, 3
      %p283 = por %p281, %p282
      %p284 = scmp.ne.s32.totalorder %s275, %s276
      %p285 = scmp.eq.s32.totalorder %s29, 0
      %p286 = por %p284, %p285
      %p287 = scmp.ne.s32.totalorder %s275, %s276
      %p288 = scmp.eq.s32.totalorder %s30, 3
      %p289 = por %p287, %p288
      %p291 = scmp.ne.s32.totalorder %s276, %s290
      %p292 = scmp.eq.s32.totalorder %s30, 0
      %p293 = por %p291, %p292
      %s295 = sadd.s32 %s294, 1
      %p298 = scmp.eq.s32.totalorder %s24, 3
      %p299 = scmp.ne.s32.totalorder %s294, %s296
      %p300 = scmp.eq.s32.totalorder %s24, 0
      %p301 = por %p299, %p300
      %p302 = scmp.ne.s32.totalorder %s294, %s296
      %p303 = scmp.eq.s32.totalorder %s29, 3
      %p304 = por %p302, %p303
      %p305 = scmp.ne.s32.totalorder %s296, %s297
      %p306 = scmp.eq.s32.totalorder %s29, 0
      %p307 = por %p305, %p306
      %p308 = scmp.ne.s32.totalorder %s296, %s297
      %p309 = scmp.eq.s32.totalorder %s30, 3
      %p310 = por %p308, %p309
      %p312 = scmp.ne.s32.totalorder %s297, %s311
      %p313 = scmp.eq.s32.totalorder %s30, 0
      %p314 = por %p312, %p313
      %s316 = sadd.s32 %s315, 1
      %p319 = scmp.eq.s32.totalorder %s24, 3
      %p320 = scmp.ne.s32.totalorder %s315, %s317
      %p321 = scmp.eq.s32.totalorder %s24, 0
      %p322 = por %p320, %p321
      %p323 = scmp.ne.s32.totalorder %s315, %s317
      %p324 = scmp.eq.s32.totalorder %s29, 3
      %p325 = por %p323, %p324
      %p326 = scmp.ne.s32.totalorder %s317, %s318
      %p327 = scmp.eq.s32.totalorder %s29, 0
      %p328 = por %p326, %p327
      %p329 = scmp.ne.s32.totalorder %s317, %s318
      %p330 = scmp.eq.s32.totalorder %s30, 3
      %p331 = por %p329, %p330
      %p333 = scmp.ne.s32.totalorder %s318, %s332
      %p334 = scmp.eq.s32.totalorder %s30, 0
      %p335 = por %p333, %p334
      %s337 = sadd.s32 %s336, 1
      %p340 = scmp.eq.s32.totalorder %s24, 3
      %p341 = scmp.ne.s32.totalorder %s336, %s338
      %p342 = scmp.eq.s32.totalorder %s24, 0
      %p343 = por %p341, %p342
      %p344 = scmp.ne.s32.totalorder %s336, %s338
      %p345 = scmp.eq.s32.totalorder %s29, 3
      %p346 = por %p344, %p345
      %p347 = scmp.ne.s32.totalorder %s338, %s339
      %p348 = scmp.eq.s32.totalorder %s29, 0
      %p349 = por %p347, %p348
      %p350 = scmp.ne.s32.totalorder %s338, %s339
      %p351 = scmp.eq.s32.totalorder %s30, 3
      %p352 = por %p350, %p351
      %p354 = scmp.ne.s32.totalorder %s339, %s353
      %p355 = scmp.eq.s32.totalorder %s30, 0
      %p356 = por %p354, %p355
      %s357 = ssub.s32 %s24, %s31
      %p358 = scmp.eq.s32.totalorder %s357, 0
      %s360 = sadd.s32 %s359, 1
      %s361 = scalar_select %p358, %s359, %s360
      %p364 = pneg %p358
      %p365 = scmp.eq.s32.totalorder %s24, 3
      %p366 = por %p364, %p365
      %p367 = scmp.ne.s32.totalorder %s359, %s362
      %p368 = scmp.eq.s32.totalorder %s24, 0
      %p369 = por %p367, %p368
      %p370 = scmp.ne.s32.totalorder %s359, %s362
      %p371 = scmp.eq.s32.totalorder %s29, 3
      %p372 = por %p370, %p371
      %p373 = scmp.ne.s32.totalorder %s362, %s363
      %p374 = scmp.eq.s32.totalorder %s29, 0
      %p375 = por %p373, %p374
      %p376 = scmp.ne.s32.totalorder %s362, %s363
      %p377 = scmp.eq.s32.totalorder %s30, 3
      %p378 = por %p376, %p377
      %p380 = scmp.ne.s32.totalorder %s363, %s379
      %p381 = scmp.eq.s32.totalorder %s30, 0
      %p382 = por %p380, %p381
      %p383 = scmp.le.s32.totalorder 1, %s24
      %p384 = scmp.lt.s32.totalorder %s24, 5
      %p385 = pnand %p383, %p384
      %p386 = pneg %p385
      // Predicated region
      $region9: #{intention_social_transformer_forward_batched.1} parent=5 // pred_check
        _
      $region10: #{intention_social_transformer_forward_batched.1} parent=5 // pred_check_branch
        %388 = sbr.rel (%p385) target = $region12
      $region11: #{intention_social_transformer_forward_batched.1} parent=5 // pred_region
        %s389 = ssub.s32 %s24, 1
        // Predicated region
        $region13: #{intention_social_transformer_forward_batched.1} parent=11 // pred_check
          %p390 = pneg %p97
        $region14: #{intention_social_transformer_forward_batched.1} parent=11 // pred_check_branch
          %392 = sbr.rel (%p390) target = $region16
        $region15: #{intention_social_transformer_forward_batched.1} parent=11 // pred_region
          _
        $region16: #{intention_social_transformer_forward_batched.1} parent=11 // pred_fallthru
          _
        // Predicated region
        $region17: #{intention_social_transformer_forward_batched.1} parent=11 // pred_check
          %p393 = pneg %p118
        $region18: #{intention_social_transformer_forward_batched.1} parent=11 // pred_check_branch
          %395 = sbr.rel (%p393) target = $region20
        $region19: #{intention_social_transformer_forward_batched.1} parent=11 // pred_region
          _
        $region20: #{intention_social_transformer_forward_batched.1} parent=11 // pred_fallthru
          _
        // Predicated region
        $region21: #{intention_social_transformer_forward_batched.1} parent=11 // pred_check
          %p396 = pneg %p139
        $region22: #{intention_social_transformer_forward_batched.1} parent=11 // pred_check_branch
          %398 = sbr.rel (%p396) target = $region24
        $region23: #{intention_social_transformer_forward_batched.1} parent=11 // pred_region
          _
        $region24: #{intention_social_transformer_forward_batched.1} parent=11 // pred_fallthru
          _
        // Predicated region
        $region25: #{intention_social_transformer_forward_batched.1} parent=11 // pred_check
          %p399 = pneg %p160
        $region26: #{intention_social_transformer_forward_batched.1} parent=11 // pred_check_branch
          %401 = sbr.rel (%p399) target = $region28
        $region27: #{intention_social_transformer_forward_batched.1} parent=11 // pred_region
          _
        $region28: #{intention_social_transformer_forward_batched.1} parent=11 // pred_fallthru
          _
        // Predicated region
        $region29: #{intention_social_transformer_forward_batched.1} parent=11 // pred_check
          %p402 = pneg %p181
        $region30: #{intention_social_transformer_forward_batched.1} parent=11 // pred_check_branch
          %404 = sbr.rel (%p402) target = $region32
        $region31: #{intention_social_transformer_forward_batched.1} parent=11 // pred_region
          _
        $region32: #{intention_social_transformer_forward_batched.1} parent=11 // pred_fallthru
          _
        // Predicated region
        $region33: #{intention_social_transformer_forward_batched.1} parent=11 // pred_check
          %p405 = pneg %p202
        $region34: #{intention_social_transformer_forward_batched.1} parent=11 // pred_check_branch
          %407 = sbr.rel (%p405) target = $region36
        $region35: #{intention_social_transformer_forward_batched.1} parent=11 // pred_region
          _
        $region36: #{intention_social_transformer_forward_batched.1} parent=11 // pred_fallthru
          _
        // Predicated region
        $region37: #{intention_social_transformer_forward_batched.1} parent=11 // pred_check
          %p408 = pneg %p223
        $region38: #{intention_social_transformer_forward_batched.1} parent=11 // pred_check_branch
          %410 = sbr.rel (%p408) target = $region40
        $region39: #{intention_social_transformer_forward_batched.1} parent=11 // pred_region
          _
        $region40: #{intention_social_transformer_forward_batched.1} parent=11 // pred_fallthru
          _
        // Predicated region
        $region41: #{intention_social_transformer_forward_batched.1} parent=11 // pred_check
          %p411 = pneg %p244
        $region42: #{intention_social_transformer_forward_batched.1} parent=11 // pred_check_branch
          %413 = sbr.rel (%p411) target = $region44
        $region43: #{intention_social_transformer_forward_batched.1} parent=11 // pred_region
          _
        $region44: #{intention_social_transformer_forward_batched.1} parent=11 // pred_fallthru
          _
        // Predicated region
        $region45: #{intention_social_transformer_forward_batched.1} parent=11 // pred_check
          %p414 = pneg %p265
        $region46: #{intention_social_transformer_forward_batched.1} parent=11 // pred_check_branch
          %416 = sbr.rel (%p414) target = $region48
        $region47: #{intention_social_transformer_forward_batched.1} parent=11 // pred_region
          _
        $region48: #{intention_social_transformer_forward_batched.1} parent=11 // pred_fallthru
          _
        // Predicated region
        $region49: #{intention_social_transformer_forward_batched.1} parent=11 // pred_check
          %p417 = pneg %p286
        $region50: #{intention_social_transformer_forward_batched.1} parent=11 // pred_check_branch
          %419 = sbr.rel (%p417) target = $region52
        $region51: #{intention_social_transformer_forward_batched.1} parent=11 // pred_region
          _
        $region52: #{intention_social_transformer_forward_batched.1} parent=11 // pred_fallthru
          _
        // Predicated region
        $region53: #{intention_social_transformer_forward_batched.1} parent=11 // pred_check
          %p420 = pneg %p307
        $region54: #{intention_social_transformer_forward_batched.1} parent=11 // pred_check_branch
          %422 = sbr.rel (%p420) target = $region56
        $region55: #{intention_social_transformer_forward_batched.1} parent=11 // pred_region
          _
        $region56: #{intention_social_transformer_forward_batched.1} parent=11 // pred_fallthru
          _
        // Predicated region
        $region57: #{intention_social_transformer_forward_batched.1} parent=11 // pred_check
          %p423 = pneg %p328
        $region58: #{intention_social_transformer_forward_batched.1} parent=11 // pred_check_branch
          %425 = sbr.rel (%p423) target = $region60
        $region59: #{intention_social_transformer_forward_batched.1} parent=11 // pred_region
          _
        $region60: #{intention_social_transformer_forward_batched.1} parent=11 // pred_fallthru
          _
        // Predicated region
        $region61: #{intention_social_transformer_forward_batched.1} parent=11 // pred_check
          %p426 = pneg %p349
        $region62: #{intention_social_transformer_forward_batched.1} parent=11 // pred_check_branch
          %428 = sbr.rel (%p426) target = $region64
        $region63: #{intention_social_transformer_forward_batched.1} parent=11 // pred_region
          _
        $region64: #{intention_social_transformer_forward_batched.1} parent=11 // pred_fallthru
          _
      $region12: #{intention_social_transformer_forward_batched.1} parent=5 // pred_fallthru
        _
      %p429 = scmp.lt.s32.totalorder %s24, 4
      // Predicated region
      $region65: #{intention_social_transformer_forward_batched.1} parent=5 // pred_check
        %p430 = pneg %p429
      $region66: #{intention_social_transformer_forward_batched.1} parent=5 // pred_check_branch
        %432 = sbr.rel (%p430) target = $region68
      $region67: #{intention_social_transformer_forward_batched.1} parent=5 // pred_region
        // Predicated region
        $region69: #{intention_social_transformer_forward_batched.1} parent=67 // pred_check
          %p433 = pneg %p44
        $region70: #{intention_social_transformer_forward_batched.1} parent=67 // pred_check_branch
          %435 = sbr.rel (%p433) target = $region72
        $region71: #{intention_social_transformer_forward_batched.1} parent=67 // pred_region
          %p436 = scmp.lt.s32.totalorder %s24, 3
          %s437 = scalar_select %p436, %s24, 3
          %s438 = smul.addr %s437, 4
          %s439 = scalar_lea.vmem %s0, %s438
        $region72: #{intention_social_transformer_forward_batched.1} parent=67 // pred_fallthru
          _
        // Predicated region
        $region73: #{intention_social_transformer_forward_batched.1} parent=67 // pred_check
          %p440 = pneg %p70
        $region74: #{intention_social_transformer_forward_batched.1} parent=67 // pred_check_branch
          %442 = sbr.rel (%p440) target = $region76
        $region75: #{intention_social_transformer_forward_batched.1} parent=67 // pred_region
          %p443 = scmp.lt.s32.totalorder %s24, 3
          %s444 = scalar_select %p443, %s24, 3
          %s445 = smul.addr %s444, 8
          %s446 = scalar_lea.vmem %s1, %s445
        $region76: #{intention_social_transformer_forward_batched.1} parent=67 // pred_fallthru
          _
      $region68: #{intention_social_transformer_forward_batched.1} parent=5 // pred_fallthru
        _
      %p447 = scmp.le.s32.totalorder 1, %s24
      %p448 = scmp.lt.s32.totalorder %s24, 5
      %p449 = pnand %p447, %p448
      %p450 = pneg %p449
      // Predicated region
      $region77: #{intention_social_transformer_forward_batched.1} parent=5 // pred_check
        _
      $region78: #{intention_social_transformer_forward_batched.1} parent=5 // pred_check_branch
        %452 = sbr.rel (%p449) target = $region80
      $region79: #{intention_social_transformer_forward_batched.1} parent=5 // pred_region
        %s453 = ssub.s32 %s24, 1
        %p454 = scmp.lt.s32.totalorder %s29, 3
        %s455 = scalar_select %p454, %s29, 3
        %s456 = smul.addr %s455, 4
        %s457 = scalar_lea.vmem %s0, %s456
        %p458 = pneg %p50
        %p459 = pneg %p47
        %p460 = scmp.lt.s32.totalorder %s29, 3
        %s461 = scalar_select %p460, %s29, 3
        %s462 = smul.addr %s461, 8
        %s463 = scalar_lea.vmem %s1, %s462
        %p464 = pneg %p76
        %p465 = pneg %p73
        %p466 = pneg %p97
        %p467 = pneg %p94
        %p468 = pneg %p118
        %p469 = pneg %p115
        %p470 = pneg %p139
        %p471 = pneg %p136
        %p472 = pneg %p160
        %p473 = pneg %p157
        %p474 = pneg %p181
        %p475 = pneg %p178
        %p476 = pneg %p202
        %p477 = pneg %p199
        %p478 = pneg %p223
        %p479 = pneg %p220
        %p480 = pneg %p244
        %p481 = pneg %p241
        %p482 = pneg %p265
        %p483 = pneg %p262
        %p484 = pneg %p286
        %p485 = pneg %p283
        %p486 = pneg %p307
        %p487 = pneg %p304
        %p488 = pneg %p328
        %p489 = pneg %p325
        %p490 = pneg %p349
        %p491 = pneg %p346
        %p492 = pneg %p375
        %p493 = pneg %p372
        %s494 = sand.u32 %s362, 1
        %s495 = scalar_lea.sflag [#allocation3], %s494
        %s496 = sand.u32 %s362, 1
        %s497 = smul.addr %s496, 16
        %s498 = scalar_lea.vmem [#allocation2], %s497
        %p499 = scmp.lt.s32.totalorder %s29, 3
        %s500 = scalar_select %p499, %s29, 3
        %s501 = smul.addr %s500, 4
        %s502 = scalar_lea.vmem %s0, %s501
        %p503 = scmp.lt.s32.totalorder %s29, 3
        %s504 = scalar_select %p503, %s29, 3
        %s505 = smul.addr %s504, 8
        %s506 = scalar_lea.vmem %s1, %s505
        %v508 = vld [vmem:[%s502] sm:$0xf]
        %v509 = vld [vmem:[%s506] sm:$0xff]
        %v510 = vld [vmem:[%s2] sm:$0xff]
        %v511 = vld [vmem:[%s2 + $0x8] sm:$0xff]
        %v512 = vld [vmem:[%s2 + $0x10] sm:$0xff]
        %v513 = vld [vmem:[%s2 + $0x18] sm:$0xff]
        %v514 = vld [vmem:[%s2 + $0x20] sm:$0xff]
        %v515 = vld [vmem:[%s2 + $0x28] sm:$0xff]
        %v516 = vld [vmem:[%s2 + $0x30] sm:$0xff]
        %v517 = vld [vmem:[%s2 + $0x38] sm:$0xff]
        %v518 = vld [vmem:[%s2 + $0x40] sm:$0xff]
        %v519 = vld [vmem:[%s2 + $0x48] sm:$0xff]
        %v520 = vld [vmem:[%s2 + $0x50] sm:$0xff]
        %v521 = vld [vmem:[%s2 + $0x58] sm:$0xff]
        %v522 = vld [vmem:[%s2 + $0x60] sm:$0xff]
        %v523 = vld [vmem:[%s2 + $0x68] sm:$0xff]
        %v524 = vld [vmem:[%s2 + $0x70] sm:$0xff]
        %v525 = vld [vmem:[%s2 + $0x78] sm:$0xff]
        %v542 = vunpack.c.l.b16 %v510
        %v543 = vunpack.c.h.b16 %v510
        %v544 = vunpack.c.l.b16 %v511
        %v545 = vunpack.c.h.b16 %v511
        %v546 = vunpack.c.l.b16 %v512
        %v547 = vunpack.c.h.b16 %v512
        %v548 = vunpack.c.l.b16 %v513
        %v549 = vunpack.c.h.b16 %v513
        %v550 = vunpack.c.l.b16 %v514
        %v551 = vunpack.c.h.b16 %v514
        %v552 = vunpack.c.l.b16 %v515
        %v553 = vunpack.c.h.b16 %v515
        %v554 = vunpack.c.l.b16 %v516
        %v555 = vunpack.c.h.b16 %v516
        %v556 = vunpack.c.l.b16 %v517
        %v557 = vunpack.c.h.b16 %v517
        %v558 = vunpack.c.l.b16 %v518
        %v559 = vunpack.c.h.b16 %v518
        %v560 = vunpack.c.l.b16 %v519
        %v561 = vunpack.c.h.b16 %v519
        %v562 = vunpack.c.l.b16 %v520
        %v563 = vunpack.c.h.b16 %v520
        %v564 = vunpack.c.l.b16 %v521
        %v565 = vunpack.c.h.b16 %v521
        %v566 = vunpack.c.l.b16 %v522
        %v567 = vunpack.c.h.b16 %v522
        %v568 = vunpack.c.l.b16 %v523
        %v569 = vunpack.c.h.b16 %v523
        %v570 = vunpack.c.l.b16 %v524
        %v571 = vunpack.c.h.b16 %v524
        %v572 = vunpack.c.l.b16 %v525
        %v573 = vunpack.c.h.b16 %v525
        %v574 = vpack.c.b16 %v544, %v542
        %v575 = vpack.c.b16 %v545, %v543
        %v576 = vpack.c.b16 %v548, %v546
        %v577 = vpack.c.b16 %v549, %v547
        %v578 = vpack.c.b16 %v552, %v550
        %v579 = vpack.c.b16 %v553, %v551
        %v580 = vpack.c.b16 %v556, %v554
        %v581 = vpack.c.b16 %v557, %v555
        %v582 = vpack.c.b16 %v560, %v558
        %v583 = vpack.c.b16 %v561, %v559
        %v584 = vpack.c.b16 %v564, %v562
        %v585 = vpack.c.b16 %v565, %v563
        %v586 = vpack.c.b16 %v568, %v566
        %v587 = vpack.c.b16 %v569, %v567
        %v588 = vpack.c.b16 %v572, %v570
        %v589 = vpack.c.b16 %v573, %v571
        %606 = vmatpush.bf16.msra.mxu0 %v588
        %607 = vmatpush.bf16.msra.mxu0 %v586
        %608 = vmatpush.bf16.msra.mxu0 %v584
        %609 = vmatpush.bf16.msra.mxu0 %v582
        %610 = vmatpush.bf16.msra.mxu0 %v580
        %611 = vmatpush.bf16.msra.mxu0 %v578
        %612 = vmatpush.bf16.msra.mxu0 %v576
        %613 = vmatpush.bf16.msra.mxu0 %v574
        %614 = vmatmul.bf16.gmra.mxu0 %v508
        %v615 = vpop.f32.mrf.mxu0
        %v616 = vadd.f32 0.0, %v615
        %v617 = vpop.f32.mrf.mxu0
        %618 = vdwg.mxu0
        %619 = vmatpush.bf16.msra.mxu0 %v589
        %620 = vmatpush.bf16.msra.mxu0 %v587
        %621 = vmatpush.bf16.msra.mxu0 %v585
        %622 = vmatpush.bf16.msra.mxu0 %v583
        %623 = vmatpush.bf16.msra.mxu0 %v581
        %624 = vmatpush.bf16.msra.mxu0 %v579
        %625 = vmatpush.bf16.msra.mxu0 %v577
        %626 = vmatpush.bf16.msra.mxu0 %v575
        %627 = vmatmul.bf16.gmra.mxu0 %v508
        %v628 = vpop.f32.mrf.mxu0
        %v629 = vadd.f32 0.0, %v628
        %v630 = vpop.f32.mrf.mxu0
        %631 = vdwg.mxu0
        %v632 = vld [vmem:[%s3] sm:$0xff]
        %v633 = vld [vmem:[%s3 + $0x8] sm:$0xff]
        %v634 = vld [vmem:[%s3 + $0x10] sm:$0xff]
        %v635 = vld [vmem:[%s3 + $0x18] sm:$0xff]
        %v636 = vld [vmem:[%s3 + $0x20] sm:$0xff]
        %v637 = vld [vmem:[%s3 + $0x28] sm:$0xff]
        %v638 = vld [vmem:[%s3 + $0x30] sm:$0xff]
        %v639 = vld [vmem:[%s3 + $0x38] sm:$0xff]
        %v640 = vld [vmem:[%s3 + $0x40] sm:$0xff]
        %v641 = vld [vmem:[%s3 + $0x48] sm:$0xff]
        %v642 = vld [vmem:[%s3 + $0x50] sm:$0xff]
        %v643 = vld [vmem:[%s3 + $0x58] sm:$0xff]
        %v644 = vld [vmem:[%s3 + $0x60] sm:$0xff]
        %v645 = vld [vmem:[%s3 + $0x68] sm:$0xff]
        %v646 = vld [vmem:[%s3 + $0x70] sm:$0xff]
        %v647 = vld [vmem:[%s3 + $0x78] sm:$0xff]
        %v648 = vld [vmem:[%s3 + $0x80] sm:$0xff]
        %v649 = vld [vmem:[%s3 + $0x88] sm:$0xff]
        %v650 = vld [vmem:[%s3 + $0x90] sm:$0xff]
        %v651 = vld [vmem:[%s3 + $0x98] sm:$0xff]
        %v652 = vld [vmem:[%s3 + $0xa0] sm:$0xff]
        %v653 = vld [vmem:[%s3 + $0xa8] sm:$0xff]
        %v654 = vld [vmem:[%s3 + $0xb0] sm:$0xff]
        %v655 = vld [vmem:[%s3 + $0xb8] sm:$0xff]
        %v656 = vld [vmem:[%s3 + $0xc0] sm:$0xff]
        %v657 = vld [vmem:[%s3 + $0xc8] sm:$0xff]
        %v658 = vld [vmem:[%s3 + $0xd0] sm:$0xff]
        %v659 = vld [vmem:[%s3 + $0xd8] sm:$0xff]
        %v660 = vld [vmem:[%s3 + $0xe0] sm:$0xff]
        %v661 = vld [vmem:[%s3 + $0xe8] sm:$0xff]
        %v662 = vld [vmem:[%s3 + $0xf0] sm:$0xff]
        %v663 = vld [vmem:[%s3 + $0xf8] sm:$0xff]
        %v664 = vld [vmem:[%s3 + $0x100] sm:$0xff]
        %v665 = vld [vmem:[%s3 + $0x108] sm:$0xff]
        %v666 = vld [vmem:[%s3 + $0x110] sm:$0xff]
        %v667 = vld [vmem:[%s3 + $0x118] sm:$0xff]
        %v668 = vld [vmem:[%s3 + $0x120] sm:$0xff]
        %v669 = vld [vmem:[%s3 + $0x128] sm:$0xff]
        %v670 = vld [vmem:[%s3 + $0x130] sm:$0xff]
        %v671 = vld [vmem:[%s3 + $0x138] sm:$0xff]
        %v672 = vld [vmem:[%s3 + $0x140] sm:$0xff]
        %v673 = vld [vmem:[%s3 + $0x148] sm:$0xff]
        %v674 = vld [vmem:[%s3 + $0x150] sm:$0xff]
        %v675 = vld [vmem:[%s3 + $0x158] sm:$0xff]
        %v676 = vld [vmem:[%s3 + $0x160] sm:$0xff]
        %v677 = vld [vmem:[%s3 + $0x168] sm:$0xff]
        %v678 = vld [vmem:[%s3 + $0x170] sm:$0xff]
        %v679 = vld [vmem:[%s3 + $0x178] sm:$0xff]
        %v680 = vld [vmem:[%s3 + $0x180] sm:$0xff]
        %v681 = vld [vmem:[%s3 + $0x188] sm:$0xff]
        %v682 = vld [vmem:[%s3 + $0x190] sm:$0xff]
        %v683 = vld [vmem:[%s3 + $0x198] sm:$0xff]
        %v684 = vld [vmem:[%s3 + $0x1a0] sm:$0xff]
        %v685 = vld [vmem:[%s3 + $0x1a8] sm:$0xff]
        %v686 = vld [vmem:[%s3 + $0x1b0] sm:$0xff]
        %v687 = vld [vmem:[%s3 + $0x1b8] sm:$0xff]
        %v688 = vld [vmem:[%s3 + $0x1c0] sm:$0xff]
        %v689 = vld [vmem:[%s3 + $0x1c8] sm:$0xff]
        %v690 = vld [vmem:[%s3 + $0x1d0] sm:$0xff]
        %v691 = vld [vmem:[%s3 + $0x1d8] sm:$0xff]
        %v692 = vld [vmem:[%s3 + $0x1e0] sm:$0xff]
        %v693 = vld [vmem:[%s3 + $0x1e8] sm:$0xff]
        %v694 = vld [vmem:[%s3 + $0x1f0] sm:$0xff]
        %v695 = vld [vmem:[%s3 + $0x1f8] sm:$0xff]
        %v696 = vld [vmem:[%s3 + $0x200] sm:$0xff]
        %v697 = vld [vmem:[%s3 + $0x208] sm:$0xff]
        %v698 = vld [vmem:[%s3 + $0x210] sm:$0xff]
        %v699 = vld [vmem:[%s3 + $0x218] sm:$0xff]
        %v700 = vld [vmem:[%s3 + $0x220] sm:$0xff]
        %v701 = vld [vmem:[%s3 + $0x228] sm:$0xff]
        %v702 = vld [vmem:[%s3 + $0x230] sm:$0xff]
        %v703 = vld [vmem:[%s3 + $0x238] sm:$0xff]
        %v704 = vld [vmem:[%s3 + $0x240] sm:$0xff]
        %v705 = vld [vmem:[%s3 + $0x248] sm:$0xff]
        %v706 = vld [vmem:[%s3 + $0x250] sm:$0xff]
        %v707 = vld [vmem:[%s3 + $0x258] sm:$0xff]
        %v708 = vld [vmem:[%s3 + $0x260] sm:$0xff]
        %v709 = vld [vmem:[%s3 + $0x268] sm:$0xff]
        %v710 = vld [vmem:[%s3 + $0x270] sm:$0xff]
        %v711 = vld [vmem:[%s3 + $0x278] sm:$0xff]
        %v712 = vld [vmem:[%s3 + $0x280] sm:$0xff]
        %v713 = vld [vmem:[%s3 + $0x288] sm:$0xff]
        %v714 = vld [vmem:[%s3 + $0x290] sm:$0xff]
        %v715 = vld [vmem:[%s3 + $0x298] sm:$0xff]
        %v716 = vld [vmem:[%s3 + $0x2a0] sm:$0xff]
        %v717 = vld [vmem:[%s3 + $0x2a8] sm:$0xff]
        %v718 = vld [vmem:[%s3 + $0x2b0] sm:$0xff]
        %v719 = vld [vmem:[%s3 + $0x2b8] sm:$0xff]
        %v720 = vld [vmem:[%s3 + $0x2c0] sm:$0xff]
        %v721 = vld [vmem:[%s3 + $0x2c8] sm:$0xff]
        %v722 = vld [vmem:[%s3 + $0x2d0] sm:$0xff]
        %v723 = vld [vmem:[%s3 + $0x2d8] sm:$0xff]
        %v724 = vld [vmem:[%s3 + $0x2e0] sm:$0xff]
        %v725 = vld [vmem:[%s3 + $0x2e8] sm:$0xff]
        %v726 = vld [vmem:[%s3 + $0x2f0] sm:$0xff]
        %v727 = vld [vmem:[%s3 + $0x2f8] sm:$0xff]
        %v728 = vpack.c.bf16 %v616, %v616
        %v729 = vpack.c.bf16 %v629, %v629
        %v730 = vld [vmem:[%s4] sm:$0x3f]
        %v732 = vperm.slane %v730, 0
        %v733 = vperm.slane %v730, 1
        %v734 = vperm.slane %v730, 2
        %v735 = vperm.slane %v730, 3
        %v736 = vperm.slane %v730, 4
        %v737 = vperm.slane %v730, 5
        %v840 = vunpack.c.l.b16 %v632
        %v841 = vunpack.c.h.b16 %v632
        %v842 = vunpack.c.l.b16 %v633
        %v843 = vunpack.c.h.b16 %v633
        %v844 = vunpack.c.l.b16 %v634
        %v845 = vunpack.c.h.b16 %v634
        %v846 = vunpack.c.l.b16 %v635
        %v847 = vunpack.c.h.b16 %v635
        %v848 = vunpack.c.l.b16 %v636
        %v849 = vunpack.c.h.b16 %v636
        %v850 = vunpack.c.l.b16 %v637
        %v851 = vunpack.c.h.b16 %v637
        %v852 = vunpack.c.l.b16 %v638
        %v853 = vunpack.c.h.b16 %v638
        %v854 = vunpack.c.l.b16 %v639
        %v855 = vunpack.c.h.b16 %v639
        %v856 = vunpack.c.l.b16 %v640
        %v857 = vunpack.c.h.b16 %v640
        %v858 = vunpack.c.l.b16 %v641
        %v859 = vunpack.c.h.b16 %v641
        %v860 = vunpack.c.l.b16 %v642
        %v861 = vunpack.c.h.b16 %v642
        %v862 = vunpack.c.l.b16 %v643
        %v863 = vunpack.c.h.b16 %v643
        %v864 = vunpack.c.l.b16 %v644
        %v865 = vunpack.c.h.b16 %v644
        %v866 = vunpack.c.l.b16 %v645
        %v867 = vunpack.c.h.b16 %v645
        %v868 = vunpack.c.l.b16 %v646
        %v869 = vunpack.c.h.b16 %v646
        %v870 = vunpack.c.l.b16 %v647
        %v871 = vunpack.c.h.b16 %v647
        %v872 = vunpack.c.l.b16 %v648
        %v873 = vunpack.c.h.b16 %v648
        %v874 = vunpack.c.l.b16 %v649
        %v875 = vunpack.c.h.b16 %v649
        %v876 = vunpack.c.l.b16 %v650
        %v877 = vunpack.c.h.b16 %v650
        %v878 = vunpack.c.l.b16 %v651
        %v879 = vunpack.c.h.b16 %v651
        %v880 = vunpack.c.l.b16 %v652
        %v881 = vunpack.c.h.b16 %v652
        %v882 = vunpack.c.l.b16 %v653
        %v883 = vunpack.c.h.b16 %v653
        %v884 = vunpack.c.l.b16 %v654
        %v885 = vunpack.c.h.b16 %v654
        %v886 = vunpack.c.l.b16 %v655
        %v887 = vunpack.c.h.b16 %v655
        %v888 = vunpack.c.l.b16 %v656
        %v889 = vunpack.c.h.b16 %v656
        %v890 = vunpack.c.l.b16 %v657
        %v891 = vunpack.c.h.b16 %v657
        %v892 = vunpack.c.l.b16 %v658
        %v893 = vunpack.c.h.b16 %v658
        %v894 = vunpack.c.l.b16 %v659
        %v895 = vunpack.c.h.b16 %v659
        %v896 = vunpack.c.l.b16 %v660
        %v897 = vunpack.c.h.b16 %v660
        %v898 = vunpack.c.l.b16 %v661
        %v899 = vunpack.c.h.b16 %v661
        %v900 = vunpack.c.l.b16 %v662
        %v901 = vunpack.c.h.b16 %v662
        %v902 = vunpack.c.l.b16 %v663
        %v903 = vunpack.c.h.b16 %v663
        %v904 = vunpack.c.l.b16 %v664
        %v905 = vunpack.c.h.b16 %v664
        %v906 = vunpack.c.l.b16 %v665
        %v907 = vunpack.c.h.b16 %v665
        %v908 = vunpack.c.l.b16 %v666
        %v909 = vunpack.c.h.b16 %v666
        %v910 = vunpack.c.l.b16 %v667
        %v911 = vunpack.c.h.b16 %v667
        %v912 = vunpack.c.l.b16 %v668
        %v913 = vunpack.c.h.b16 %v668
        %v914 = vunpack.c.l.b16 %v669
        %v915 = vunpack.c.h.b16 %v669
        %v916 = vunpack.c.l.b16 %v670
        %v917 = vunpack.c.h.b16 %v670
        %v918 = vunpack.c.l.b16 %v671
        %v919 = vunpack.c.h.b16 %v671
        %v920 = vunpack.c.l.b16 %v672
        %v921 = vunpack.c.h.b16 %v672
        %v922 = vunpack.c.l.b16 %v673
        %v923 = vunpack.c.h.b16 %v673
        %v924 = vunpack.c.l.b16 %v674
        %v925 = vunpack.c.h.b16 %v674
        %v926 = vunpack.c.l.b16 %v675
        %v927 = vunpack.c.h.b16 %v675
        %v928 = vunpack.c.l.b16 %v676
        %v929 = vunpack.c.h.b16 %v676
        %v930 = vunpack.c.l.b16 %v677
        %v931 = vunpack.c.h.b16 %v677
        %v932 = vunpack.c.l.b16 %v678
        %v933 = vunpack.c.h.b16 %v678
        %v934 = vunpack.c.l.b16 %v679
        %v935 = vunpack.c.h.b16 %v679
        %v936 = vunpack.c.l.b16 %v680
        %v937 = vunpack.c.h.b16 %v680
        %v938 = vunpack.c.l.b16 %v681
        %v939 = vunpack.c.h.b16 %v681
        %v940 = vunpack.c.l.b16 %v682
        %v941 = vunpack.c.h.b16 %v682
        %v942 = vunpack.c.l.b16 %v683
        %v943 = vunpack.c.h.b16 %v683
        %v944 = vunpack.c.l.b16 %v684
        %v945 = vunpack.c.h.b16 %v684
        %v946 = vunpack.c.l.b16 %v685
        %v947 = vunpack.c.h.b16 %v685
        %v948 = vunpack.c.l.b16 %v686
        %v949 = vunpack.c.h.b16 %v686
        %v950 = vunpack.c.l.b16 %v687
        %v951 = vunpack.c.h.b16 %v687
        %v952 = vunpack.c.l.b16 %v688
        %v953 = vunpack.c.h.b16 %v688
        %v954 = vunpack.c.l.b16 %v689
        %v955 = vunpack.c.h.b16 %v689
        %v956 = vunpack.c.l.b16 %v690
        %v957 = vunpack.c.h.b16 %v690
        %v958 = vunpack.c.l.b16 %v691
        %v959 = vunpack.c.h.b16 %v691
        %v960 = vunpack.c.l.b16 %v692
        %v961 = vunpack.c.h.b16 %v692
        %v962 = vunpack.c.l.b16 %v693
        %v963 = vunpack.c.h.b16 %v693
        %v964 = vunpack.c.l.b16 %v694
        %v965 = vunpack.c.h.b16 %v694
        %v966 = vunpack.c.l.b16 %v695
        %v967 = vunpack.c.h.b16 %v695
        %v968 = vunpack.c.l.b16 %v696
        %v969 = vunpack.c.h.b16 %v696
        %v970 = vunpack.c.l.b16 %v697
        %v971 = vunpack.c.h.b16 %v697
        %v972 = vunpack.c.l.b16 %v698
        %v973 = vunpack.c.h.b16 %v698
        %v974 = vunpack.c.l.b16 %v699
        %v975 = vunpack.c.h.b16 %v699
        %v976 = vunpack.c.l.b16 %v700
        %v977 = vunpack.c.h.b16 %v700
        %v978 = vunpack.c.l.b16 %v701
        %v979 = vunpack.c.h.b16 %v701
        %v980 = vunpack.c.l.b16 %v702
        %v981 = vunpack.c.h.b16 %v702
        %v982 = vunpack.c.l.b16 %v703
        %v983 = vunpack.c.h.b16 %v703
        %v984 = vunpack.c.l.b16 %v704
        %v985 = vunpack.c.h.b16 %v704
        %v986 = vunpack.c.l.b16 %v705
        %v987 = vunpack.c.h.b16 %v705
        %v988 = vunpack.c.l.b16 %v706
        %v989 = vunpack.c.h.b16 %v706
        %v990 = vunpack.c.l.b16 %v707
        %v991 = vunpack.c.h.b16 %v707
        %v992 = vunpack.c.l.b16 %v708
        %v993 = vunpack.c.h.b16 %v708
        %v994 = vunpack.c.l.b16 %v709
        %v995 = vunpack.c.h.b16 %v709
        %v996 = vunpack.c.l.b16 %v710
        %v997 = vunpack.c.h.b16 %v710
        %v998 = vunpack.c.l.b16 %v711
        %v999 = vunpack.c.h.b16 %v711
        %v1000 = vunpack.c.l.b16 %v712
        %v1001 = vunpack.c.h.b16 %v712
        %v1002 = vunpack.c.l.b16 %v713
        %v1003 = vunpack.c.h.b16 %v713
        %v1004 = vunpack.c.l.b16 %v714
        %v1005 = vunpack.c.h.b16 %v714
        %v1006 = vunpack.c.l.b16 %v715
        %v1007 = vunpack.c.h.b16 %v715
        %v1008 = vunpack.c.l.b16 %v716
        %v1009 = vunpack.c.h.b16 %v716
        %v1010 = vunpack.c.l.b16 %v717
        %v1011 = vunpack.c.h.b16 %v717
        %v1012 = vunpack.c.l.b16 %v718
        %v1013 = vunpack.c.h.b16 %v718
        %v1014 = vunpack.c.l.b16 %v719
        %v1015 = vunpack.c.h.b16 %v719
        %v1016 = vunpack.c.l.b16 %v720
        %v1017 = vunpack.c.h.b16 %v720
        %v1018 = vunpack.c.l.b16 %v721
        %v1019 = vunpack.c.h.b16 %v721
        %v1020 = vunpack.c.l.b16 %v722
        %v1021 = vunpack.c.h.b16 %v722
        %v1022 = vunpack.c.l.b16 %v723
        %v1023 = vunpack.c.h.b16 %v723
        %v1024 = vunpack.c.l.b16 %v724
        %v1025 = vunpack.c.h.b16 %v724
        %v1026 = vunpack.c.l.b16 %v725
        %v1027 = vunpack.c.h.b16 %v725
        %v1028 = vunpack.c.l.b16 %v726
        %v1029 = vunpack.c.h.b16 %v726
        %v1030 = vunpack.c.l.b16 %v727
        %v1031 = vunpack.c.h.b16 %v727
        %v1032 = vpack.c.b16 %v846, %v840
        %v1033 = vpack.c.b16 %v847, %v841
        %v1034 = vpack.c.b16 %v848, %v842
        %v1035 = vpack.c.b16 %v849, %v843
        %v1036 = vpack.c.b16 %v850, %v844
        %v1037 = vpack.c.b16 %v851, %v845
        %v1038 = vpack.c.b16 %v858, %v852
        %v1039 = vpack.c.b16 %v859, %v853
        %v1040 = vpack.c.b16 %v860, %v854
        %v1041 = vpack.c.b16 %v861, %v855
        %v1042 = vpack.c.b16 %v862, %v856
        %v1043 = vpack.c.b16 %v863, %v857
        %v1044 = vpack.c.b16 %v870, %v864
        %v1045 = vpack.c.b16 %v871, %v865
        %v1046 = vpack.c.b16 %v872, %v866
        %v1047 = vpack.c.b16 %v873, %v867
        %v1048 = vpack.c.b16 %v874, %v868
        %v1049 = vpack.c.b16 %v875, %v869
        %v1050 = vpack.c.b16 %v882, %v876
        %v1051 = vpack.c.b16 %v883, %v877
        %v1052 = vpack.c.b16 %v884, %v878
        %v1053 = vpack.c.b16 %v885, %v879
        %v1054 = vpack.c.b16 %v886, %v880
        %v1055 = vpack.c.b16 %v887, %v881
        %v1056 = vpack.c.b16 %v894, %v888
        %v1057 = vpack.c.b16 %v895, %v889
        %v1058 = vpack.c.b16 %v896, %v890
        %v1059 = vpack.c.b16 %v897, %v891
        %v1060 = vpack.c.b16 %v898, %v892
        %v1061 = vpack.c.b16 %v899, %v893
        %v1062 = vpack.c.b16 %v906, %v900
        %v1063 = vpack.c.b16 %v907, %v901
        %v1064 = vpack.c.b16 %v908, %v902
        %v1065 = vpack.c.b16 %v909, %v903
        %v1066 = vpack.c.b16 %v910, %v904
        %v1067 = vpack.c.b16 %v911, %v905
        %v1068 = vpack.c.b16 %v918, %v912
        %v1069 = vpack.c.b16 %v919, %v913
        %v1070 = vpack.c.b16 %v920, %v914
        %v1071 = vpack.c.b16 %v921, %v915
        %v1072 = vpack.c.b16 %v922, %v916
        %v1073 = vpack.c.b16 %v923, %v917
        %v1074 = vpack.c.b16 %v930, %v924
        %v1075 = vpack.c.b16 %v931, %v925
        %v1076 = vpack.c.b16 %v932, %v926
        %v1077 = vpack.c.b16 %v933, %v927
        %v1078 = vpack.c.b16 %v934, %v928
        %v1079 = vpack.c.b16 %v935, %v929
        %v1080 = vpack.c.b16 %v942, %v936
        %v1081 = vpack.c.b16 %v943, %v937
        %v1082 = vpack.c.b16 %v944, %v938
        %v1083 = vpack.c.b16 %v945, %v939
        %v1084 = vpack.c.b16 %v946, %v940
        %v1085 = vpack.c.b16 %v947, %v941
        %v1086 = vpack.c.b16 %v954, %v948
        %v1087 = vpack.c.b16 %v955, %v949
        %v1088 = vpack.c.b16 %v956, %v950
        %v1089 = vpack.c.b16 %v957, %v951
        %v1090 = vpack.c.b16 %v958, %v952
        %v1091 = vpack.c.b16 %v959, %v953
        %v1092 = vpack.c.b16 %v966, %v960
        %v1093 = vpack.c.b16 %v967, %v961
        %v1094 = vpack.c.b16 %v968, %v962
        %v1095 = vpack.c.b16 %v969, %v963
        %v1096 = vpack.c.b16 %v970, %v964
        %v1097 = vpack.c.b16 %v971, %v965
        %v1098 = vpack.c.b16 %v978, %v972
        %v1099 = vpack.c.b16 %v979, %v973
        %v1100 = vpack.c.b16 %v980, %v974
        %v1101 = vpack.c.b16 %v981, %v975
        %v1102 = vpack.c.b16 %v982, %v976
        %v1103 = vpack.c.b16 %v983, %v977
        %v1104 = vpack.c.b16 %v990, %v984
        %v1105 = vpack.c.b16 %v991, %v985
        %v1106 = vpack.c.b16 %v992, %v986
        %v1107 = vpack.c.b16 %v993, %v987
        %v1108 = vpack.c.b16 %v994, %v988
        %v1109 = vpack.c.b16 %v995, %v989
        %v1110 = vpack.c.b16 %v1002, %v996
        %v1111 = vpack.c.b16 %v1003, %v997
        %v1112 = vpack.c.b16 %v1004, %v998
        %v1113 = vpack.c.b16 %v1005, %v999
        %v1114 = vpack.c.b16 %v1006, %v1000
        %v1115 = vpack.c.b16 %v1007, %v1001
        %v1116 = vpack.c.b16 %v1014, %v1008
        %v1117 = vpack.c.b16 %v1015, %v1009
        %v1118 = vpack.c.b16 %v1016, %v1010
        %v1119 = vpack.c.b16 %v1017, %v1011
        %v1120 = vpack.c.b16 %v1018, %v1012
        %v1121 = vpack.c.b16 %v1019, %v1013
        %v1122 = vpack.c.b16 %v1026, %v1020
        %v1123 = vpack.c.b16 %v1027, %v1021
        %v1124 = vpack.c.b16 %v1028, %v1022
        %v1125 = vpack.c.b16 %v1029, %v1023
        %v1126 = vpack.c.b16 %v1030, %v1024
        %v1127 = vpack.c.b16 %v1031, %v1025
        %1224 = vmatpush.bf16.msra.mxu0 %v1074
        %1225 = vmatpush.bf16.msra.mxu0 %v1068
        %1226 = vmatpush.bf16.msra.mxu0 %v1062
        %1227 = vmatpush.bf16.msra.mxu0 %v1056
        %1228 = vmatpush.bf16.msra.mxu0 %v1050
        %1229 = vmatpush.bf16.msra.mxu0 %v1044
        %1230 = vmatpush.bf16.msra.mxu0 %v1038
        %1231 = vmatpush.bf16.msra.mxu0 %v1032
        %1232 = vmatmul.bf16.gmra.mxu0 %v728
        %v1233 = vpop.f32.mrf.mxu0
        %v1234 = vadd.f32 %v732, %v1233
        %v1235 = vpop.f32.mrf.mxu0
        %1236 = vdwg.mxu0
        %1237 = vmatpush.bf16.msra.mxu0 %v1122
        %1238 = vmatpush.bf16.msra.mxu0 %v1116
        %1239 = vmatpush.bf16.msra.mxu0 %v1110
        %1240 = vmatpush.bf16.msra.mxu0 %v1104
        %1241 = vmatpush.bf16.msra.mxu0 %v1098
        %1242 = vmatpush.bf16.msra.mxu0 %v1092
        %1243 = vmatpush.bf16.msra.mxu0 %v1086
        %1244 = vmatpush.bf16.msra.mxu0 %v1080
        %1245 = vmatmul.bf16.gmra.mxu0 %v729
        %v1246 = vpop.f32.mrf.mxu0
        %v1247 = vadd.f32 %v1234, %v1246
        %v1248 = vpop.f32.mrf.mxu0
        %1249 = vdwg.mxu0
        %1250 = vmatpush.bf16.msra.mxu0 %v1075
        %1251 = vmatpush.bf16.msra.mxu0 %v1069
        %1252 = vmatpush.bf16.msra.mxu0 %v1063
        %1253 = vmatpush.bf16.msra.mxu0 %v1057
        %1254 = vmatpush.bf16.msra.mxu0 %v1051
        %1255 = vmatpush.bf16.msra.mxu0 %v1045
        %1256 = vmatpush.bf16.msra.mxu0 %v1039
        %1257 = vmatpush.bf16.msra.mxu0 %v1033
        %1258 = vmatmul.bf16.gmra.mxu0 %v728
        %v1259 = vpop.f32.mrf.mxu0
        %v1260 = vadd.f32 %v733, %v1259
        %v1261 = vpop.f32.mrf.mxu0
        %1262 = vdwg.mxu0
        %1263 = vmatpush.bf16.msra.mxu0 %v1123
        %1264 = vmatpush.bf16.msra.mxu0 %v1117
        %1265 = vmatpush.bf16.msra.mxu0 %v1111
        %1266 = vmatpush.bf16.msra.mxu0 %v1105
        %1267 = vmatpush.bf16.msra.mxu0 %v1099
        %1268 = vmatpush.bf16.msra.mxu0 %v1093
        %1269 = vmatpush.bf16.msra.mxu0 %v1087
        %1270 = vmatpush.bf16.msra.mxu0 %v1081
        %1271 = vmatmul.bf16.gmra.mxu0 %v729
        %v1272 = vpop.f32.mrf.mxu0
        %v1273 = vadd.f32 %v1260, %v1272
        %v1274 = vpop.f32.mrf.mxu0
        %1275 = vdwg.mxu0
        %1276 = vmatpush.bf16.msra.mxu0 %v1076
        %1277 = vmatpush.bf16.msra.mxu0 %v1070
        %1278 = vmatpush.bf16.msra.mxu0 %v1064
        %1279 = vmatpush.bf16.msra.mxu0 %v1058
        %1280 = vmatpush.bf16.msra.mxu0 %v1052
        %1281 = vmatpush.bf16.msra.mxu0 %v1046
        %1282 = vmatpush.bf16.msra.mxu0 %v1040
        %1283 = vmatpush.bf16.msra.mxu0 %v1034
        %1284 = vmatmul.bf16.gmra.mxu0 %v728
        %v1285 = vpop.f32.mrf.mxu0
        %v1286 = vadd.f32 %v734, %v1285
        %v1287 = vpop.f32.mrf.mxu0
        %1288 = vdwg.mxu0
        %1289 = vmatpush.bf16.msra.mxu0 %v1124
        %1290 = vmatpush.bf16.msra.mxu0 %v1118
        %1291 = vmatpush.bf16.msra.mxu0 %v1112
        %1292 = vmatpush.bf16.msra.mxu0 %v1106
        %1293 = vmatpush.bf16.msra.mxu0 %v1100
        %1294 = vmatpush.bf16.msra.mxu0 %v1094
        %1295 = vmatpush.bf16.msra.mxu0 %v1088
        %1296 = vmatpush.bf16.msra.mxu0 %v1082
        %1297 = vmatmul.bf16.gmra.mxu0 %v729
        %v1298 = vpop.f32.mrf.mxu0
        %v1299 = vadd.f32 %v1286, %v1298
        %v1300 = vpop.f32.mrf.mxu0
        %1301 = vdwg.mxu0
        %1302 = vmatpush.bf16.msra.mxu0 %v1077
        %1303 = vmatpush.bf16.msra.mxu0 %v1071
        %1304 = vmatpush.bf16.msra.mxu0 %v1065
        %1305 = vmatpush.bf16.msra.mxu0 %v1059
        %1306 = vmatpush.bf16.msra.mxu0 %v1053
        %1307 = vmatpush.bf16.msra.mxu0 %v1047
        %1308 = vmatpush.bf16.msra.mxu0 %v1041
        %1309 = vmatpush.bf16.msra.mxu0 %v1035
        %1310 = vmatmul.bf16.gmra.mxu0 %v728
        %v1311 = vpop.f32.mrf.mxu0
        %v1312 = vadd.f32 %v735, %v1311
        %v1313 = vpop.f32.mrf.mxu0
        %1314 = vdwg.mxu0
        %1315 = vmatpush.bf16.msra.mxu0 %v1125
        %1316 = vmatpush.bf16.msra.mxu0 %v1119
        %1317 = vmatpush.bf16.msra.mxu0 %v1113
        %1318 = vmatpush.bf16.msra.mxu0 %v1107
        %1319 = vmatpush.bf16.msra.mxu0 %v1101
        %1320 = vmatpush.bf16.msra.mxu0 %v1095
        %1321 = vmatpush.bf16.msra.mxu0 %v1089
        %1322 = vmatpush.bf16.msra.mxu0 %v1083
        %1323 = vmatmul.bf16.gmra.mxu0 %v729
        %v1324 = vpop.f32.mrf.mxu0
        %v1325 = vadd.f32 %v1312, %v1324
        %v1326 = vpop.f32.mrf.mxu0
        %1327 = vdwg.mxu0
        %1328 = vmatpush.bf16.msra.mxu0 %v1078
        %1329 = vmatpush.bf16.msra.mxu0 %v1072
        %1330 = vmatpush.bf16.msra.mxu0 %v1066
        %1331 = vmatpush.bf16.msra.mxu0 %v1060
        %1332 = vmatpush.bf16.msra.mxu0 %v1054
        %1333 = vmatpush.bf16.msra.mxu0 %v1048
        %1334 = vmatpush.bf16.msra.mxu0 %v1042
        %1335 = vmatpush.bf16.msra.mxu0 %v1036
        %1336 = vmatmul.bf16.gmra.mxu0 %v728
        %v1337 = vpop.f32.mrf.mxu0
        %v1338 = vadd.f32 %v736, %v1337
        %v1339 = vpop.f32.mrf.mxu0
        %1340 = vdwg.mxu0
        %1341 = vmatpush.bf16.msra.mxu0 %v1126
        %1342 = vmatpush.bf16.msra.mxu0 %v1120
        %1343 = vmatpush.bf16.msra.mxu0 %v1114
        %1344 = vmatpush.bf16.msra.mxu0 %v1108
        %1345 = vmatpush.bf16.msra.mxu0 %v1102
        %1346 = vmatpush.bf16.msra.mxu0 %v1096
        %1347 = vmatpush.bf16.msra.mxu0 %v1090
        %1348 = vmatpush.bf16.msra.mxu0 %v1084
        %1349 = vmatmul.bf16.gmra.mxu0 %v729
        %v1350 = vpop.f32.mrf.mxu0
        %v1351 = vadd.f32 %v1338, %v1350
        %v1352 = vpop.f32.mrf.mxu0
        %1353 = vdwg.mxu0
        %1354 = vmatpush.bf16.msra.mxu0 %v1079
        %1355 = vmatpush.bf16.msra.mxu0 %v1073
        %1356 = vmatpush.bf16.msra.mxu0 %v1067
        %1357 = vmatpush.bf16.msra.mxu0 %v1061
        %1358 = vmatpush.bf16.msra.mxu0 %v1055
        %1359 = vmatpush.bf16.msra.mxu0 %v1049
        %1360 = vmatpush.bf16.msra.mxu0 %v1043
        %1361 = vmatpush.bf16.msra.mxu0 %v1037
        %1362 = vmatmul.bf16.gmra.mxu0 %v728
        %v1363 = vpop.f32.mrf.mxu0
        %v1364 = vadd.f32 %v737, %v1363
        %v1365 = vpop.f32.mrf.mxu0
        %1366 = vdwg.mxu0
        %1367 = vmatpush.bf16.msra.mxu0 %v1127
        %1368 = vmatpush.bf16.msra.mxu0 %v1121
        %1369 = vmatpush.bf16.msra.mxu0 %v1115
        %1370 = vmatpush.bf16.msra.mxu0 %v1109
        %1371 = vmatpush.bf16.msra.mxu0 %v1103
        %1372 = vmatpush.bf16.msra.mxu0 %v1097
        %1373 = vmatpush.bf16.msra.mxu0 %v1091
        %1374 = vmatpush.bf16.msra.mxu0 %v1085
        %1375 = vmatmul.bf16.gmra.mxu0 %v729
        %v1376 = vpop.f32.mrf.mxu0
        %v1377 = vadd.f32 %v1364, %v1376
        %v1378 = vpop.f32.mrf.mxu0
        %1379 = vdwg.mxu0
        %v1380 = vld [vmem:[%s5] sm:$0xff]
        %v1381 = vld [vmem:[%s5 + $0x8] sm:$0xff]
        %v1382 = vld [vmem:[%s5 + $0x10] sm:$0xff]
        %v1383 = vld [vmem:[%s5 + $0x18] sm:$0xff]
        %v1384 = vld [vmem:[%s5 + $0x20] sm:$0xff]
        %v1385 = vld [vmem:[%s5 + $0x28] sm:$0xff]
        %v1386 = vld [vmem:[%s5 + $0x30] sm:$0xff]
        %v1387 = vld [vmem:[%s5 + $0x38] sm:$0xff]
        %v1388 = vld [vmem:[%s5 + $0x40] sm:$0xff]
        %v1389 = vld [vmem:[%s5 + $0x48] sm:$0xff]
        %v1390 = vld [vmem:[%s5 + $0x50] sm:$0xff]
        %v1391 = vld [vmem:[%s5 + $0x58] sm:$0xff]
        %v1392 = vld [vmem:[%s5 + $0x60] sm:$0xff]
        %v1393 = vld [vmem:[%s5 + $0x68] sm:$0xff]
        %v1394 = vld [vmem:[%s5 + $0x70] sm:$0xff]
        %v1395 = vld [vmem:[%s5 + $0x78] sm:$0xff]
        %v1396 = vld [vmem:[%s5 + $0x80] sm:$0xff]
        %v1397 = vld [vmem:[%s5 + $0x88] sm:$0xff]
        %v1398 = vld [vmem:[%s5 + $0x90] sm:$0xff]
        %v1399 = vld [vmem:[%s5 + $0x98] sm:$0xff]
        %v1400 = vld [vmem:[%s5 + $0xa0] sm:$0xff]
        %v1401 = vld [vmem:[%s5 + $0xa8] sm:$0xff]
        %v1402 = vld [vmem:[%s5 + $0xb0] sm:$0xff]
        %v1403 = vld [vmem:[%s5 + $0xb8] sm:$0xff]
        %v1404 = vld [vmem:[%s5 + $0xc0] sm:$0xff]
        %v1405 = vld [vmem:[%s5 + $0xc8] sm:$0xff]
        %v1406 = vld [vmem:[%s5 + $0xd0] sm:$0xff]
        %v1407 = vld [vmem:[%s5 + $0xd8] sm:$0xff]
        %v1408 = vld [vmem:[%s5 + $0xe0] sm:$0xff]
        %v1409 = vld [vmem:[%s5 + $0xe8] sm:$0xff]
        %v1410 = vld [vmem:[%s5 + $0xf0] sm:$0xff]
        %v1411 = vld [vmem:[%s5 + $0xf8] sm:$0xff]
        %v1412 = vld [vmem:[%s6] sm:$0x3]
        %v1413 = vmul.f32 %v1247, 0.088388346
        %v1414 = vpack.c.bf16 %v1413, %v1413
        %v1415 = vpack.c.bf16 %v1299, %v1299
        %1416 = vmatpush.bf16.xpose.msra.mxu0 0
        %1417 = vmatpush.bf16.xpose.msra.mxu0 0
        %1418 = vmatpush.bf16.xpose.msra.mxu0 0
        %1419 = vmatpush.bf16.xpose.msra.mxu0 0
        %1420 = vmatpush.bf16.xpose.msra.mxu0 0
        %1421 = vmatpush.bf16.xpose.msra.mxu0 0
        %1422 = vmatpush.bf16.xpose.msra.mxu0 0
        %1423 = vmatpush.bf16.xpose.msra.mxu0 %v1415
        %1424 = vmatmul.bf16.gmra.mxu0 %v1414
        %v1425 = vpop.f32.mrf.mxu0
        %v1426 = vadd.f32 %v509, %v1425
        %v1427 = vpop.f32.mrf.mxu0
        %1428 = vdwg.mxu0
        %vm1429 = vcmask 64512
        %v1430 = vsel %vm1429, %v1426, -inf
        %1431 = vmax.xlane.f32.xlu0 %v1430
        %v1432 = vpop.xlane.xlu0 %1431
        %v1433 = vsub.f32 %v1426, %v1432
        %v1434 = vmul.f32 %v1433, 1.442695
        %v1435 = vpow.pop %v1434
        %v1436 = vsel %vm1429, %v1435, 0.0
        %1437 = vadd.xlane.f32.xlu0 %v1436
        %v1438 = vpop.xlane.xlu0 %1437
        %v1439 = vrcp.pop %v1438
        %v1440 = vmul.f32 %v1435, %v1439
        %v1441 = vpack.c.bf16 %v1440, %v1440
        %v1442 = vpack.c.bf16 %v1351, %v1351
        %v1444 = vsel %vm1429, %v1441, 0
        %vm1446 = vcmask 1043456
        %v1448 = vsel %vm1446, %v1442, 0
        %1450 = vmatpush.bf16.msra.mxu0 0
        %1451 = vmatpush.bf16.msra.mxu0 0
        %1452 = vmatpush.bf16.msra.mxu0 0
        %1453 = vmatpush.bf16.msra.mxu0 0
        %1454 = vmatpush.bf16.msra.mxu0 0
        %1455 = vmatpush.bf16.msra.mxu0 0
        %1456 = vmatpush.bf16.msra.mxu0 0
        %1457 = vmatpush.bf16.msra.mxu0 %v1448
        %1458 = vmatmul.bf16.gmra.mxu0 %v1444
        %v1459 = vpop.f32.mrf.mxu0
        %v1460 = vadd.f32 0.0, %v1459
        %v1461 = vpop.f32.mrf.mxu0
        %1462 = vdwg.mxu0
        %v1463 = vpack.c.bf16 %v1460, %v1460
        %v1480 = vunpack.c.l.b16 %v1380
        %v1481 = vunpack.c.h.b16 %v1380
        %v1482 = vunpack.c.l.b16 %v1381
        %v1483 = vunpack.c.h.b16 %v1381
        %v1484 = vunpack.c.l.b16 %v1382
        %v1485 = vunpack.c.h.b16 %v1382
        %v1486 = vunpack.c.l.b16 %v1383
        %v1487 = vunpack.c.h.b16 %v1383
        %v1488 = vunpack.c.l.b16 %v1384
        %v1489 = vunpack.c.h.b16 %v1384
        %v1490 = vunpack.c.l.b16 %v1385
        %v1491 = vunpack.c.h.b16 %v1385
        %v1492 = vunpack.c.l.b16 %v1386
        %v1493 = vunpack.c.h.b16 %v1386
        %v1494 = vunpack.c.l.b16 %v1387
        %v1495 = vunpack.c.h.b16 %v1387
        %v1496 = vunpack.c.l.b16 %v1388
        %v1497 = vunpack.c.h.b16 %v1388
        %v1498 = vunpack.c.l.b16 %v1389
        %v1499 = vunpack.c.h.b16 %v1389
        %v1500 = vunpack.c.l.b16 %v1390
        %v1501 = vunpack.c.h.b16 %v1390
        %v1502 = vunpack.c.l.b16 %v1391
        %v1503 = vunpack.c.h.b16 %v1391
        %v1504 = vunpack.c.l.b16 %v1392
        %v1505 = vunpack.c.h.b16 %v1392
        %v1506 = vunpack.c.l.b16 %v1393
        %v1507 = vunpack.c.h.b16 %v1393
        %v1508 = vunpack.c.l.b16 %v1394
        %v1509 = vunpack.c.h.b16 %v1394
        %v1510 = vunpack.c.l.b16 %v1395
        %v1511 = vunpack.c.h.b16 %v1395
        %v1512 = vpack.c.b16 %v1482, %v1480
        %v1513 = vpack.c.b16 %v1483, %v1481
        %v1514 = vpack.c.b16 %v1486, %v1484
        %v1515 = vpack.c.b16 %v1487, %v1485
        %v1516 = vpack.c.b16 %v1490, %v1488
        %v1517 = vpack.c.b16 %v1491, %v1489
        %v1518 = vpack.c.b16 %v1494, %v1492
        %v1519 = vpack.c.b16 %v1495, %v1493
        %v1520 = vpack.c.b16 %v1498, %v1496
        %v1521 = vpack.c.b16 %v1499, %v1497
        %v1522 = vpack.c.b16 %v1502, %v1500
        %v1523 = vpack.c.b16 %v1503, %v1501
        %v1524 = vpack.c.b16 %v1506, %v1504
        %v1525 = vpack.c.b16 %v1507, %v1505
        %v1526 = vpack.c.b16 %v1510, %v1508
        %v1527 = vpack.c.b16 %v1511, %v1509
        %1544 = vmatpush.bf16.msra.mxu0 %v1526
        %1545 = vmatpush.bf16.msra.mxu0 %v1524
        %1546 = vmatpush.bf16.msra.mxu0 %v1522
        %1547 = vmatpush.bf16.msra.mxu0 %v1520
        %1548 = vmatpush.bf16.msra.mxu0 %v1518
        %1549 = vmatpush.bf16.msra.mxu0 %v1516
        %1550 = vmatpush.bf16.msra.mxu0 %v1514
        %1551 = vmatpush.bf16.msra.mxu0 %v1512
        %1552 = vmatmul.bf16.gmra.mxu0 %v1463
        %v1553 = vpop.f32.mrf.mxu0
        %v1554 = vadd.f32 0.0, %v1553
        %v1555 = vpop.f32.mrf.mxu0
        %1556 = vdwg.mxu0
        %1557 = vmatpush.bf16.msra.mxu0 %v1527
        %1558 = vmatpush.bf16.msra.mxu0 %v1525
        %1559 = vmatpush.bf16.msra.mxu0 %v1523
        %1560 = vmatpush.bf16.msra.mxu0 %v1521
        %1561 = vmatpush.bf16.msra.mxu0 %v1519
        %1562 = vmatpush.bf16.msra.mxu0 %v1517
        %1563 = vmatpush.bf16.msra.mxu0 %v1515
        %1564 = vmatpush.bf16.msra.mxu0 %v1513
        %1565 = vmatmul.bf16.gmra.mxu0 %v1463
        %v1566 = vpop.f32.mrf.mxu0
        %v1567 = vadd.f32 0.0, %v1566
        %v1568 = vpop.f32.mrf.mxu0
        %1569 = vdwg.mxu0
        %v1571 = vperm.slane %v1412, 0
        %v1572 = vperm.slane %v1412, 1
        %v1575 = vadd.f32 %v1571, %v1554
        %v1576 = vadd.f32 %v1572, %v1567
        %v1577 = vmul.f32 %v1273, 0.088388346
        %v1578 = vpack.c.bf16 %v1577, %v1577
        %v1579 = vpack.c.bf16 %v1325, %v1325
        %1580 = vmatpush.bf16.xpose.msra.mxu0 0
        %1581 = vmatpush.bf16.xpose.msra.mxu0 0
        %1582 = vmatpush.bf16.xpose.msra.mxu0 0
        %1583 = vmatpush.bf16.xpose.msra.mxu0 0
        %1584 = vmatpush.bf16.xpose.msra.mxu0 0
        %1585 = vmatpush.bf16.xpose.msra.mxu0 0
        %1586 = vmatpush.bf16.xpose.msra.mxu0 0
        %1587 = vmatpush.bf16.xpose.msra.mxu0 %v1579
        %1588 = vmatmul.bf16.gmra.mxu0 %v1578
        %v1589 = vpop.f32.mrf.mxu0
        %v1590 = vadd.f32 %v509, %v1589
        %v1591 = vpop.f32.mrf.mxu0
        %1592 = vdwg.mxu0
        %v1593 = vsel %vm1429, %v1590, -inf
        %1594 = vmax.xlane.f32.xlu0 %v1593
        %v1595 = vpop.xlane.xlu0 %1594
        %v1596 = vsub.f32 %v1590, %v1595
        %v1597 = vmul.f32 %v1596, 1.442695
        %v1598 = vpow.pop %v1597
        %v1599 = vsel %vm1429, %v1598, 0.0
        %1600 = vadd.xlane.f32.xlu0 %v1599
        %v1601 = vpop.xlane.xlu0 %1600
        %v1602 = vrcp.pop %v1601
        %v1603 = vmul.f32 %v1598, %v1602
        %v1604 = vpack.c.bf16 %v1603, %v1603
        %v1605 = vpack.c.bf16 %v1377, %v1377
        %v1607 = vsel %vm1429, %v1604, 0
        %v1610 = vsel %vm1446, %v1605, 0
        %1612 = vmatpush.bf16.msra.mxu0 0
        %1613 = vmatpush.bf16.msra.mxu0 0
        %1614 = vmatpush.bf16.msra.mxu0 0
        %1615 = vmatpush.bf16.msra.mxu0 0
        %1616 = vmatpush.bf16.msra.mxu0 0
        %1617 = vmatpush.bf16.msra.mxu0 0
        %1618 = vmatpush.bf16.msra.mxu0 0
        %1619 = vmatpush.bf16.msra.mxu0 %v1610
        %1620 = vmatmul.bf16.gmra.mxu0 %v1607
        %v1621 = vpop.f32.mrf.mxu0
        %v1622 = vadd.f32 0.0, %v1621
        %v1623 = vpop.f32.mrf.mxu0
        %1624 = vdwg.mxu0
        %v1625 = vpack.c.bf16 %v1622, %v1622
        %v1642 = vunpack.c.l.b16 %v1396
        %v1643 = vunpack.c.h.b16 %v1396
        %v1644 = vunpack.c.l.b16 %v1397
        %v1645 = vunpack.c.h.b16 %v1397
        %v1646 = vunpack.c.l.b16 %v1398
        %v1647 = vunpack.c.h.b16 %v1398
        %v1648 = vunpack.c.l.b16 %v1399
        %v1649 = vunpack.c.h.b16 %v1399
        %v1650 = vunpack.c.l.b16 %v1400
        %v1651 = vunpack.c.h.b16 %v1400
        %v1652 = vunpack.c.l.b16 %v1401
        %v1653 = vunpack.c.h.b16 %v1401
        %v1654 = vunpack.c.l.b16 %v1402
        %v1655 = vunpack.c.h.b16 %v1402
        %v1656 = vunpack.c.l.b16 %v1403
        %v1657 = vunpack.c.h.b16 %v1403
        %v1658 = vunpack.c.l.b16 %v1404
        %v1659 = vunpack.c.h.b16 %v1404
        %v1660 = vunpack.c.l.b16 %v1405
        %v1661 = vunpack.c.h.b16 %v1405
        %v1662 = vunpack.c.l.b16 %v1406
        %v1663 = vunpack.c.h.b16 %v1406
        %v1664 = vunpack.c.l.b16 %v1407
        %v1665 = vunpack.c.h.b16 %v1407
        %v1666 = vunpack.c.l.b16 %v1408
        %v1667 = vunpack.c.h.b16 %v1408
        %v1668 = vunpack.c.l.b16 %v1409
        %v1669 = vunpack.c.h.b16 %v1409
        %v1670 = vunpack.c.l.b16 %v1410
        %v1671 = vunpack.c.h.b16 %v1410
        %v1672 = vunpack.c.l.b16 %v1411
        %v1673 = vunpack.c.h.b16 %v1411
        %v1674 = vpack.c.b16 %v1644, %v1642
        %v1675 = vpack.c.b16 %v1645, %v1643
        %v1676 = vpack.c.b16 %v1648, %v1646
        %v1677 = vpack.c.b16 %v1649, %v1647
        %v1678 = vpack.c.b16 %v1652, %v1650
        %v1679 = vpack.c.b16 %v1653, %v1651
        %v1680 = vpack.c.b16 %v1656, %v1654
        %v1681 = vpack.c.b16 %v1657, %v1655
        %v1682 = vpack.c.b16 %v1660, %v1658
        %v1683 = vpack.c.b16 %v1661, %v1659
        %v1684 = vpack.c.b16 %v1664, %v1662
        %v1685 = vpack.c.b16 %v1665, %v1663
        %v1686 = vpack.c.b16 %v1668, %v1666
        %v1687 = vpack.c.b16 %v1669, %v1667
        %v1688 = vpack.c.b16 %v1672, %v1670
        %v1689 = vpack.c.b16 %v1673, %v1671
        %1706 = vmatpush.bf16.msra.mxu0 %v1688
        %1707 = vmatpush.bf16.msra.mxu0 %v1686
        %1708 = vmatpush.bf16.msra.mxu0 %v1684
        %1709 = vmatpush.bf16.msra.mxu0 %v1682
        %1710 = vmatpush.bf16.msra.mxu0 %v1680
        %1711 = vmatpush.bf16.msra.mxu0 %v1678
        %1712 = vmatpush.bf16.msra.mxu0 %v1676
        %1713 = vmatpush.bf16.msra.mxu0 %v1674
        %1714 = vmatmul.bf16.gmra.mxu0 %v1625
        %v1715 = vpop.f32.mrf.mxu0
        %v1716 = vadd.f32 0.0, %v1715
        %v1717 = vpop.f32.mrf.mxu0
        %1718 = vdwg.mxu0
        %1719 = vmatpush.bf16.msra.mxu0 %v1689
        %1720 = vmatpush.bf16.msra.mxu0 %v1687
        %1721 = vmatpush.bf16.msra.mxu0 %v1685
        %1722 = vmatpush.bf16.msra.mxu0 %v1683
        %1723 = vmatpush.bf16.msra.mxu0 %v1681
        %1724 = vmatpush.bf16.msra.mxu0 %v1679
        %1725 = vmatpush.bf16.msra.mxu0 %v1677
        %1726 = vmatpush.bf16.msra.mxu0 %v1675
        %1727 = vmatmul.bf16.gmra.mxu0 %v1625
        %v1728 = vpop.f32.mrf.mxu0
        %v1729 = vadd.f32 0.0, %v1728
        %v1730 = vpop.f32.mrf.mxu0
        %1731 = vdwg.mxu0
        %v1732 = vadd.f32 %v1575, %v1716
        %v1733 = vadd.f32 %v1576, %v1729
        %v1734 = vadd.f32 %v616, %v1732
        %v1735 = vadd.f32 %v629, %v1733
        %v1736 = vld [vmem:[%s7] sm:$0x3]
        %v1737 = vld [vmem:[%s8] sm:$0x3]
        %v1738 = vadd.f32 %v1734, %v1735
        %1739 = vadd.xlane.f32.xlu0 %v1738
        %v1740 = vpop.xlane.xlu0 %1739
        %v1741 = vrcp.pop 256.0
        %v1742 = vmul.f32 256.0, %v1741
        %v1743 = vsub.f32 1.0, %v1742
        %v1744 = vmul.f32 %v1741, %v1743
        %v1745 = vadd.f32 %v1741, %v1744
        %vm1746 = vweird.f32 %v1741
        %v1747 = vsel %vm1746, %v1741, %v1745
        %v1748 = vmul.f32 %v1740, %v1747
        %v1749 = vmul.f32 %v1734, %v1734
        %v1750 = vmul.f32 %v1735, %v1735
        %v1751 = vadd.f32 %v1749, %v1750
        %1752 = vadd.xlane.f32.xlu0 %v1751
        %v1753 = vpop.xlane.xlu0 %1752
        %v1754 = vmul.f32 %v1753, %v1747
        %v1755 = vmul.f32 %v1748, %v1748
        %v1756 = vsub.f32 %v1754, %v1755
        %v1757 = vsub.f32 %v1734, %v1748
        %v1758 = vsub.f32 %v1735, %v1748
        %v1759 = vadd.f32 %v1756, 1e-05
        %v1760 = vrsqrt.pop %v1759
        %v1761 = vmul.f32 %v1760, %v1759
        %v1762 = vmul.f32 %v1761, %v1760
        %v1763 = vmul.f32 0.5, %v1762
        %v1764 = vsub.f32 1.5, %v1763
        %v1765 = vmul.f32 %v1760, %v1764
        %vm1766 = vweird.f32 %v1759
        %vm1767 = vweird.f32 %v1760
        %vm1768 = vmor %vm1766, %vm1767
        %v1769 = vsel %vm1768, %v1760, %v1765
        %v1770 = vmul.f32 %v1757, %v1769
        %v1771 = vmul.f32 %v1758, %v1769
        %v1773 = vperm.slane %v1736, 0
        %v1774 = vperm.slane %v1736, 1
        %v1777 = vmul.f32 %v1770, %v1773
        %v1778 = vmul.f32 %v1771, %v1774
        %v1780 = vperm.slane %v1737, 0
        %v1781 = vperm.slane %v1737, 1
        %v1784 = vadd.f32 %v1777, %v1780
        %v1785 = vadd.f32 %v1778, %v1781
        %v1786 = vld [vmem:[%s9] sm:$0xff]
        %v1787 = vld [vmem:[%s9 + $0x8] sm:$0xff]
        %v1788 = vld [vmem:[%s9 + $0x10] sm:$0xff]
        %v1789 = vld [vmem:[%s9 + $0x18] sm:$0xff]
        %v1790 = vld [vmem:[%s9 + $0x20] sm:$0xff]
        %v1791 = vld [vmem:[%s9 + $0x28] sm:$0xff]
        %v1792 = vld [vmem:[%s9 + $0x30] sm:$0xff]
        %v1793 = vld [vmem:[%s9 + $0x38] sm:$0xff]
        %v1794 = vld [vmem:[%s9 + $0x40] sm:$0xff]
        %v1795 = vld [vmem:[%s9 + $0x48] sm:$0xff]
        %v1796 = vld [vmem:[%s9 + $0x50] sm:$0xff]
        %v1797 = vld [vmem:[%s9 + $0x58] sm:$0xff]
        %v1798 = vld [vmem:[%s9 + $0x60] sm:$0xff]
        %v1799 = vld [vmem:[%s9 + $0x68] sm:$0xff]
        %v1800 = vld [vmem:[%s9 + $0x70] sm:$0xff]
        %v1801 = vld [vmem:[%s9 + $0x78] sm:$0xff]
        %v1802 = vld [vmem:[%s9 + $0x80] sm:$0xff]
        %v1803 = vld [vmem:[%s9 + $0x88] sm:$0xff]
        %v1804 = vld [vmem:[%s9 + $0x90] sm:$0xff]
        %v1805 = vld [vmem:[%s9 + $0x98] sm:$0xff]
        %v1806 = vld [vmem:[%s9 + $0xa0] sm:$0xff]
        %v1807 = vld [vmem:[%s9 + $0xa8] sm:$0xff]
        %v1808 = vld [vmem:[%s9 + $0xb0] sm:$0xff]
        %v1809 = vld [vmem:[%s9 + $0xb8] sm:$0xff]
        %v1810 = vld [vmem:[%s9 + $0xc0] sm:$0xff]
        %v1811 = vld [vmem:[%s9 + $0xc8] sm:$0xff]
        %v1812 = vld [vmem:[%s9 + $0xd0] sm:$0xff]
        %v1813 = vld [vmem:[%s9 + $0xd8] sm:$0xff]
        %v1814 = vld [vmem:[%s9 + $0xe0] sm:$0xff]
        %v1815 = vld [vmem:[%s9 + $0xe8] sm:$0xff]
        %v1816 = vld [vmem:[%s9 + $0xf0] sm:$0xff]
        %v1817 = vld [vmem:[%s9 + $0xf8] sm:$0xff]
        %v1818 = vpack.c.bf16 %v1784, %v1784
        %v1819 = vpack.c.bf16 %v1785, %v1785
        %v1820 = vld [vmem:[%s10] sm:$0x3]
        %v1822 = vperm.slane %v1820, 0
        %v1823 = vperm.slane %v1820, 1
        %v1858 = vunpack.c.l.b16 %v1786
        %v1859 = vunpack.c.h.b16 %v1786
        %v1860 = vunpack.c.l.b16 %v1787
        %v1861 = vunpack.c.h.b16 %v1787
        %v1862 = vunpack.c.l.b16 %v1788
        %v1863 = vunpack.c.h.b16 %v1788
        %v1864 = vunpack.c.l.b16 %v1789
        %v1865 = vunpack.c.h.b16 %v1789
        %v1866 = vunpack.c.l.b16 %v1790
        %v1867 = vunpack.c.h.b16 %v1790
        %v1868 = vunpack.c.l.b16 %v1791
        %v1869 = vunpack.c.h.b16 %v1791
        %v1870 = vunpack.c.l.b16 %v1792
        %v1871 = vunpack.c.h.b16 %v1792
        %v1872 = vunpack.c.l.b16 %v1793
        %v1873 = vunpack.c.h.b16 %v1793
        %v1874 = vunpack.c.l.b16 %v1794
        %v1875 = vunpack.c.h.b16 %v1794
        %v1876 = vunpack.c.l.b16 %v1795
        %v1877 = vunpack.c.h.b16 %v1795
        %v1878 = vunpack.c.l.b16 %v1796
        %v1879 = vunpack.c.h.b16 %v1796
        %v1880 = vunpack.c.l.b16 %v1797
        %v1881 = vunpack.c.h.b16 %v1797
        %v1882 = vunpack.c.l.b16 %v1798
        %v1883 = vunpack.c.h.b16 %v1798
        %v1884 = vunpack.c.l.b16 %v1799
        %v1885 = vunpack.c.h.b16 %v1799
        %v1886 = vunpack.c.l.b16 %v1800
        %v1887 = vunpack.c.h.b16 %v1800
        %v1888 = vunpack.c.l.b16 %v1801
        %v1889 = vunpack.c.h.b16 %v1801
        %v1890 = vunpack.c.l.b16 %v1802
        %v1891 = vunpack.c.h.b16 %v1802
        %v1892 = vunpack.c.l.b16 %v1803
        %v1893 = vunpack.c.h.b16 %v1803
        %v1894 = vunpack.c.l.b16 %v1804
        %v1895 = vunpack.c.h.b16 %v1804
        %v1896 = vunpack.c.l.b16 %v1805
        %v1897 = vunpack.c.h.b16 %v1805
        %v1898 = vunpack.c.l.b16 %v1806
        %v1899 = vunpack.c.h.b16 %v1806
        %v1900 = vunpack.c.l.b16 %v1807
        %v1901 = vunpack.c.h.b16 %v1807
        %v1902 = vunpack.c.l.b16 %v1808
        %v1903 = vunpack.c.h.b16 %v1808
        %v1904 = vunpack.c.l.b16 %v1809
        %v1905 = vunpack.c.h.b16 %v1809
        %v1906 = vunpack.c.l.b16 %v1810
        %v1907 = vunpack.c.h.b16 %v1810
        %v1908 = vunpack.c.l.b16 %v1811
        %v1909 = vunpack.c.h.b16 %v1811
        %v1910 = vunpack.c.l.b16 %v1812
        %v1911 = vunpack.c.h.b16 %v1812
        %v1912 = vunpack.c.l.b16 %v1813
        %v1913 = vunpack.c.h.b16 %v1813
        %v1914 = vunpack.c.l.b16 %v1814
        %v1915 = vunpack.c.h.b16 %v1814
        %v1916 = vunpack.c.l.b16 %v1815
        %v1917 = vunpack.c.h.b16 %v1815
        %v1918 = vunpack.c.l.b16 %v1816
        %v1919 = vunpack.c.h.b16 %v1816
        %v1920 = vunpack.c.l.b16 %v1817
        %v1921 = vunpack.c.h.b16 %v1817
        %v1922 = vpack.c.b16 %v1860, %v1858
        %v1923 = vpack.c.b16 %v1861, %v1859
        %v1924 = vpack.c.b16 %v1864, %v1862
        %v1925 = vpack.c.b16 %v1865, %v1863
        %v1926 = vpack.c.b16 %v1868, %v1866
        %v1927 = vpack.c.b16 %v1869, %v1867
        %v1928 = vpack.c.b16 %v1872, %v1870
        %v1929 = vpack.c.b16 %v1873, %v1871
        %v1930 = vpack.c.b16 %v1876, %v1874
        %v1931 = vpack.c.b16 %v1877, %v1875
        %v1932 = vpack.c.b16 %v1880, %v1878
        %v1933 = vpack.c.b16 %v1881, %v1879
        %v1934 = vpack.c.b16 %v1884, %v1882
        %v1935 = vpack.c.b16 %v1885, %v1883
        %v1936 = vpack.c.b16 %v1888, %v1886
        %v1937 = vpack.c.b16 %v1889, %v1887
        %v1938 = vpack.c.b16 %v1892, %v1890
        %v1939 = vpack.c.b16 %v1893, %v1891
        %v1940 = vpack.c.b16 %v1896, %v1894
        %v1941 = vpack.c.b16 %v1897, %v1895
        %v1942 = vpack.c.b16 %v1900, %v1898
        %v1943 = vpack.c.b16 %v1901, %v1899
        %v1944 = vpack.c.b16 %v1904, %v1902
        %v1945 = vpack.c.b16 %v1905, %v1903
        %v1946 = vpack.c.b16 %v1908, %v1906
        %v1947 = vpack.c.b16 %v1909, %v1907
        %v1948 = vpack.c.b16 %v1912, %v1910
        %v1949 = vpack.c.b16 %v1913, %v1911
        %v1950 = vpack.c.b16 %v1916, %v1914
        %v1951 = vpack.c.b16 %v1917, %v1915
        %v1952 = vpack.c.b16 %v1920, %v1918
        %v1953 = vpack.c.b16 %v1921, %v1919
        %1986 = vmatpush.bf16.msra.mxu0 %v1936
        %1987 = vmatpush.bf16.msra.mxu0 %v1934
        %1988 = vmatpush.bf16.msra.mxu0 %v1932
        %1989 = vmatpush.bf16.msra.mxu0 %v1930
        %1990 = vmatpush.bf16.msra.mxu0 %v1928
        %1991 = vmatpush.bf16.msra.mxu0 %v1926
        %1992 = vmatpush.bf16.msra.mxu0 %v1924
        %1993 = vmatpush.bf16.msra.mxu0 %v1922
        %1994 = vmatmul.bf16.gmra.mxu0 %v1818
        %v1995 = vpop.f32.mrf.mxu0
        %v1996 = vadd.f32 %v1822, %v1995
        %v1997 = vpop.f32.mrf.mxu0
        %1998 = vdwg.mxu0
        %1999 = vmatpush.bf16.msra.mxu0 %v1952
        %2000 = vmatpush.bf16.msra.mxu0 %v1950
        %2001 = vmatpush.bf16.msra.mxu0 %v1948
        %2002 = vmatpush.bf16.msra.mxu0 %v1946
        %2003 = vmatpush.bf16.msra.mxu0 %v1944
        %2004 = vmatpush.bf16.msra.mxu0 %v1942
        %2005 = vmatpush.bf16.msra.mxu0 %v1940
        %2006 = vmatpush.bf16.msra.mxu0 %v1938
        %2007 = vmatmul.bf16.gmra.mxu0 %v1819
        %v2008 = vpop.f32.mrf.mxu0
        %v2009 = vadd.f32 %v1996, %v2008
        %v2010 = vpop.f32.mrf.mxu0
        %2011 = vdwg.mxu0
        %2012 = vmatpush.bf16.msra.mxu0 %v1937
        %2013 = vmatpush.bf16.msra.mxu0 %v1935
        %2014 = vmatpush.bf16.msra.mxu0 %v1933
        %2015 = vmatpush.bf16.msra.mxu0 %v1931
        %2016 = vmatpush.bf16.msra.mxu0 %v1929
        %2017 = vmatpush.bf16.msra.mxu0 %v1927
        %2018 = vmatpush.bf16.msra.mxu0 %v1925
        %2019 = vmatpush.bf16.msra.mxu0 %v1923
        %2020 = vmatmul.bf16.gmra.mxu0 %v1818
        %v2021 = vpop.f32.mrf.mxu0
        %v2022 = vadd.f32 %v1823, %v2021
        %v2023 = vpop.f32.mrf.mxu0
        %2024 = vdwg.mxu0
        %2025 = vmatpush.bf16.msra.mxu0 %v1953
        %2026 = vmatpush.bf16.msra.mxu0 %v1951
        %2027 = vmatpush.bf16.msra.mxu0 %v1949
        %2028 = vmatpush.bf16.msra.mxu0 %v1947
        %2029 = vmatpush.bf16.msra.mxu0 %v1945
        %2030 = vmatpush.bf16.msra.mxu0 %v1943
        %2031 = vmatpush.bf16.msra.mxu0 %v1941
        %2032 = vmatpush.bf16.msra.mxu0 %v1939
        %2033 = vmatmul.bf16.gmra.mxu0 %v1819
        %v2034 = vpop.f32.mrf.mxu0
        %v2035 = vadd.f32 %v2022, %v2034
        %v2036 = vpop.f32.mrf.mxu0
        %2037 = vdwg.mxu0
        %v2038 = vmax.f32 %v2009, 0.0
        %v2039 = vmax.f32 %v2035, 0.0
        %v2040 = vld [vmem:[%s11] sm:$0xff]
        %v2041 = vld [vmem:[%s11 + $0x8] sm:$0xff]
        %v2042 = vld [vmem:[%s11 + $0x10] sm:$0xff]
        %v2043 = vld [vmem:[%s11 + $0x18] sm:$0xff]
        %v2044 = vld [vmem:[%s11 + $0x20] sm:$0xff]
        %v2045 = vld [vmem:[%s11 + $0x28] sm:$0xff]
        %v2046 = vld [vmem:[%s11 + $0x30] sm:$0xff]
        %v2047 = vld [vmem:[%s11 + $0x38] sm:$0xff]
        %v2048 = vld [vmem:[%s11 + $0x40] sm:$0xff]
        %v2049 = vld [vmem:[%s11 + $0x48] sm:$0xff]
        %v2050 = vld [vmem:[%s11 + $0x50] sm:$0xff]
        %v2051 = vld [vmem:[%s11 + $0x58] sm:$0xff]
        %v2052 = vld [vmem:[%s11 + $0x60] sm:$0xff]
        %v2053 = vld [vmem:[%s11 + $0x68] sm:$0xff]
        %v2054 = vld [vmem:[%s11 + $0x70] sm:$0xff]
        %v2055 = vld [vmem:[%s11 + $0x78] sm:$0xff]
        %v2056 = vld [vmem:[%s11 + $0x80] sm:$0xff]
        %v2057 = vld [vmem:[%s11 + $0x88] sm:$0xff]
        %v2058 = vld [vmem:[%s11 + $0x90] sm:$0xff]
        %v2059 = vld [vmem:[%s11 + $0x98] sm:$0xff]
        %v2060 = vld [vmem:[%s11 + $0xa0] sm:$0xff]
        %v2061 = vld [vmem:[%s11 + $0xa8] sm:$0xff]
        %v2062 = vld [vmem:[%s11 + $0xb0] sm:$0xff]
        %v2063 = vld [vmem:[%s11 + $0xb8] sm:$0xff]
        %v2064 = vld [vmem:[%s11 + $0xc0] sm:$0xff]
        %v2065 = vld [vmem:[%s11 + $0xc8] sm:$0xff]
        %v2066 = vld [vmem:[%s11 + $0xd0] sm:$0xff]
        %v2067 = vld [vmem:[%s11 + $0xd8] sm:$0xff]
        %v2068 = vld [vmem:[%s11 + $0xe0] sm:$0xff]
        %v2069 = vld [vmem:[%s11 + $0xe8] sm:$0xff]
        %v2070 = vld [vmem:[%s11 + $0xf0] sm:$0xff]
        %v2071 = vld [vmem:[%s11 + $0xf8] sm:$0xff]
        %v2072 = vpack.c.bf16 %v2038, %v2038
        %v2073 = vpack.c.bf16 %v2039, %v2039
        %v2074 = vld [vmem:[%s12] sm:$0x3]
        %v2076 = vperm.slane %v2074, 0
        %v2077 = vperm.slane %v2074, 1
        %v2112 = vunpack.c.l.b16 %v2040
        %v2113 = vunpack.c.h.b16 %v2040
        %v2114 = vunpack.c.l.b16 %v2041
        %v2115 = vunpack.c.h.b16 %v2041
        %v2116 = vunpack.c.l.b16 %v2042
        %v2117 = vunpack.c.h.b16 %v2042
        %v2118 = vunpack.c.l.b16 %v2043
        %v2119 = vunpack.c.h.b16 %v2043
        %v2120 = vunpack.c.l.b16 %v2044
        %v2121 = vunpack.c.h.b16 %v2044
        %v2122 = vunpack.c.l.b16 %v2045
        %v2123 = vunpack.c.h.b16 %v2045
        %v2124 = vunpack.c.l.b16 %v2046
        %v2125 = vunpack.c.h.b16 %v2046
        %v2126 = vunpack.c.l.b16 %v2047
        %v2127 = vunpack.c.h.b16 %v2047
        %v2128 = vunpack.c.l.b16 %v2048
        %v2129 = vunpack.c.h.b16 %v2048
        %v2130 = vunpack.c.l.b16 %v2049
        %v2131 = vunpack.c.h.b16 %v2049
        %v2132 = vunpack.c.l.b16 %v2050
        %v2133 = vunpack.c.h.b16 %v2050
        %v2134 = vunpack.c.l.b16 %v2051
        %v2135 = vunpack.c.h.b16 %v2051
        %v2136 = vunpack.c.l.b16 %v2052
        %v2137 = vunpack.c.h.b16 %v2052
        %v2138 = vunpack.c.l.b16 %v2053
        %v2139 = vunpack.c.h.b16 %v2053
        %v2140 = vunpack.c.l.b16 %v2054
        %v2141 = vunpack.c.h.b16 %v2054
        %v2142 = vunpack.c.l.b16 %v2055
        %v2143 = vunpack.c.h.b16 %v2055
        %v2144 = vunpack.c.l.b16 %v2056
        %v2145 = vunpack.c.h.b16 %v2056
        %v2146 = vunpack.c.l.b16 %v2057
        %v2147 = vunpack.c.h.b16 %v2057
        %v2148 = vunpack.c.l.b16 %v2058
        %v2149 = vunpack.c.h.b16 %v2058
        %v2150 = vunpack.c.l.b16 %v2059
        %v2151 = vunpack.c.h.b16 %v2059
        %v2152 = vunpack.c.l.b16 %v2060
        %v2153 = vunpack.c.h.b16 %v2060
        %v2154 = vunpack.c.l.b16 %v2061
        %v2155 = vunpack.c.h.b16 %v2061
        %v2156 = vunpack.c.l.b16 %v2062
        %v2157 = vunpack.c.h.b16 %v2062
        %v2158 = vunpack.c.l.b16 %v2063
        %v2159 = vunpack.c.h.b16 %v2063
        %v2160 = vunpack.c.l.b16 %v2064
        %v2161 = vunpack.c.h.b16 %v2064
        %v2162 = vunpack.c.l.b16 %v2065
        %v2163 = vunpack.c.h.b16 %v2065
        %v2164 = vunpack.c.l.b16 %v2066
        %v2165 = vunpack.c.h.b16 %v2066
        %v2166 = vunpack.c.l.b16 %v2067
        %v2167 = vunpack.c.h.b16 %v2067
        %v2168 = vunpack.c.l.b16 %v2068
        %v2169 = vunpack.c.h.b16 %v2068
        %v2170 = vunpack.c.l.b16 %v2069
        %v2171 = vunpack.c.h.b16 %v2069
        %v2172 = vunpack.c.l.b16 %v2070
        %v2173 = vunpack.c.h.b16 %v2070
        %v2174 = vunpack.c.l.b16 %v2071
        %v2175 = vunpack.c.h.b16 %v2071
        %v2176 = vpack.c.b16 %v2114, %v2112
        %v2177 = vpack.c.b16 %v2115, %v2113
        %v2178 = vpack.c.b16 %v2118, %v2116
        %v2179 = vpack.c.b16 %v2119, %v2117
        %v2180 = vpack.c.b16 %v2122, %v2120
        %v2181 = vpack.c.b16 %v2123, %v2121
        %v2182 = vpack.c.b16 %v2126, %v2124
        %v2183 = vpack.c.b16 %v2127, %v2125
        %v2184 = vpack.c.b16 %v2130, %v2128
        %v2185 = vpack.c.b16 %v2131, %v2129
        %v2186 = vpack.c.b16 %v2134, %v2132
        %v2187 = vpack.c.b16 %v2135, %v2133
        %v2188 = vpack.c.b16 %v2138, %v2136
        %v2189 = vpack.c.b16 %v2139, %v2137
        %v2190 = vpack.c.b16 %v2142, %v2140
        %v2191 = vpack.c.b16 %v2143, %v2141
        %v2192 = vpack.c.b16 %v2146, %v2144
        %v2193 = vpack.c.b16 %v2147, %v2145
        %v2194 = vpack.c.b16 %v2150, %v2148
        %v2195 = vpack.c.b16 %v2151, %v2149
        %v2196 = vpack.c.b16 %v2154, %v2152
        %v2197 = vpack.c.b16 %v2155, %v2153
        %v2198 = vpack.c.b16 %v2158, %v2156
        %v2199 = vpack.c.b16 %v2159, %v2157
        %v2200 = vpack.c.b16 %v2162, %v2160
        %v2201 = vpack.c.b16 %v2163, %v2161
        %v2202 = vpack.c.b16 %v2166, %v2164
        %v2203 = vpack.c.b16 %v2167, %v2165
        %v2204 = vpack.c.b16 %v2170, %v2168
        %v2205 = vpack.c.b16 %v2171, %v2169
        %v2206 = vpack.c.b16 %v2174, %v2172
        %v2207 = vpack.c.b16 %v2175, %v2173
        %2240 = vmatpush.bf16.msra.mxu0 %v2190
        %2241 = vmatpush.bf16.msra.mxu0 %v2188
        %2242 = vmatpush.bf16.msra.mxu0 %v2186
        %2243 = vmatpush.bf16.msra.mxu0 %v2184
        %2244 = vmatpush.bf16.msra.mxu0 %v2182
        %2245 = vmatpush.bf16.msra.mxu0 %v2180
        %2246 = vmatpush.bf16.msra.mxu0 %v2178
        %2247 = vmatpush.bf16.msra.mxu0 %v2176
        %2248 = vmatmul.bf16.gmra.mxu0 %v2072
        %v2249 = vpop.f32.mrf.mxu0
        %v2250 = vadd.f32 %v2076, %v2249
        %v2251 = vpop.f32.mrf.mxu0
        %2252 = vdwg.mxu0
        %2253 = vmatpush.bf16.msra.mxu0 %v2206
        %2254 = vmatpush.bf16.msra.mxu0 %v2204
        %2255 = vmatpush.bf16.msra.mxu0 %v2202
        %2256 = vmatpush.bf16.msra.mxu0 %v2200
        %2257 = vmatpush.bf16.msra.mxu0 %v2198
        %2258 = vmatpush.bf16.msra.mxu0 %v2196
        %2259 = vmatpush.bf16.msra.mxu0 %v2194
        %2260 = vmatpush.bf16.msra.mxu0 %v2192
        %2261 = vmatmul.bf16.gmra.mxu0 %v2073
        %v2262 = vpop.f32.mrf.mxu0
        %v2263 = vadd.f32 %v2250, %v2262
        %v2264 = vpop.f32.mrf.mxu0
        %2265 = vdwg.mxu0
        %2266 = vmatpush.bf16.msra.mxu0 %v2191
        %2267 = vmatpush.bf16.msra.mxu0 %v2189
        %2268 = vmatpush.bf16.msra.mxu0 %v2187
        %2269 = vmatpush.bf16.msra.mxu0 %v2185
        %2270 = vmatpush.bf16.msra.mxu0 %v2183
        %2271 = vmatpush.bf16.msra.mxu0 %v2181
        %2272 = vmatpush.bf16.msra.mxu0 %v2179
        %2273 = vmatpush.bf16.msra.mxu0 %v2177
        %2274 = vmatmul.bf16.gmra.mxu0 %v2072
        %v2275 = vpop.f32.mrf.mxu0
        %v2276 = vadd.f32 %v2077, %v2275
        %v2277 = vpop.f32.mrf.mxu0
        %2278 = vdwg.mxu0
        %2279 = vmatpush.bf16.msra.mxu0 %v2207
        %2280 = vmatpush.bf16.msra.mxu0 %v2205
        %2281 = vmatpush.bf16.msra.mxu0 %v2203
        %2282 = vmatpush.bf16.msra.mxu0 %v2201
        %2283 = vmatpush.bf16.msra.mxu0 %v2199
        %2284 = vmatpush.bf16.msra.mxu0 %v2197
        %2285 = vmatpush.bf16.msra.mxu0 %v2195
        %2286 = vmatpush.bf16.msra.mxu0 %v2193
        %2287 = vmatmul.bf16.gmra.mxu0 %v2073
        %v2288 = vpop.f32.mrf.mxu0
        %v2289 = vadd.f32 %v2276, %v2288
        %v2290 = vpop.f32.mrf.mxu0
        %2291 = vdwg.mxu0
        %v2292 = vadd.f32 %v1784, %v2263
        %v2293 = vadd.f32 %v1785, %v2289
        %v2294 = vld [vmem:[%s13] sm:$0x3]
        %v2295 = vld [vmem:[%s14] sm:$0x3]
        %v2296 = vadd.f32 %v2292, %v2293
        %2297 = vadd.xlane.f32.xlu0 %v2296
        %v2298 = vpop.xlane.xlu0 %2297
        %v2299 = vmul.f32 %v2298, %v1747
        %v2300 = vmul.f32 %v2292, %v2292
        %v2301 = vmul.f32 %v2293, %v2293
        %v2302 = vadd.f32 %v2300, %v2301
        %2303 = vadd.xlane.f32.xlu0 %v2302
        %v2304 = vpop.xlane.xlu0 %2303
        %v2305 = vmul.f32 %v2304, %v1747
        %v2306 = vmul.f32 %v2299, %v2299
        %v2307 = vsub.f32 %v2305, %v2306
        %v2308 = vsub.f32 %v2292, %v2299
        %v2309 = vsub.f32 %v2293, %v2299
        %v2310 = vadd.f32 %v2307, 1e-05
        %v2311 = vrsqrt.pop %v2310
        %v2312 = vmul.f32 %v2311, %v2310
        %v2313 = vmul.f32 %v2312, %v2311
        %v2314 = vmul.f32 0.5, %v2313
        %v2315 = vsub.f32 1.5, %v2314
        %v2316 = vmul.f32 %v2311, %v2315
        %vm2317 = vweird.f32 %v2310
        %vm2318 = vweird.f32 %v2311
        %vm2319 = vmor %vm2317, %vm2318
        %v2320 = vsel %vm2319, %v2311, %v2316
        %v2321 = vmul.f32 %v2308, %v2320
        %v2322 = vmul.f32 %v2309, %v2320
        %v2324 = vperm.slane %v2294, 0
        %v2325 = vperm.slane %v2294, 1
        %v2328 = vmul.f32 %v2321, %v2324
        %v2329 = vmul.f32 %v2322, %v2325
        %v2331 = vperm.slane %v2295, 0
        %v2332 = vperm.slane %v2295, 1
        %v2335 = vadd.f32 %v2328, %v2331
        %v2336 = vadd.f32 %v2329, %v2332
        %s2337 = scalar_lea.vmem %s3, 768
        %v2338 = vld [vmem:[%s2337] sm:$0xff]
        %v2339 = vld [vmem:[%s2337 + $0x8] sm:$0xff]
        %v2340 = vld [vmem:[%s2337 + $0x10] sm:$0xff]
        %v2341 = vld [vmem:[%s2337 + $0x18] sm:$0xff]
        %v2342 = vld [vmem:[%s2337 + $0x20] sm:$0xff]
        %v2343 = vld [vmem:[%s2337 + $0x28] sm:$0xff]
        %v2344 = vld [vmem:[%s2337 + $0x30] sm:$0xff]
        %v2345 = vld [vmem:[%s2337 + $0x38] sm:$0xff]
        %v2346 = vld [vmem:[%s2337 + $0x40] sm:$0xff]
        %v2347 = vld [vmem:[%s2337 + $0x48] sm:$0xff]
        %v2348 = vld [vmem:[%s2337 + $0x50] sm:$0xff]
        %v2349 = vld [vmem:[%s2337 + $0x58] sm:$0xff]
        %v2350 = vld [vmem:[%s2337 + $0x60] sm:$0xff]
        %v2351 = vld [vmem:[%s2337 + $0x68] sm:$0xff]
        %v2352 = vld [vmem:[%s2337 + $0x70] sm:$0xff]
        %v2353 = vld [vmem:[%s2337 + $0x78] sm:$0xff]
        %v2354 = vld [vmem:[%s2337 + $0x80] sm:$0xff]
        %v2355 = vld [vmem:[%s2337 + $0x88] sm:$0xff]
        %v2356 = vld [vmem:[%s2337 + $0x90] sm:$0xff]
        %v2357 = vld [vmem:[%s2337 + $0x98] sm:$0xff]
        %v2358 = vld [vmem:[%s2337 + $0xa0] sm:$0xff]
        %v2359 = vld [vmem:[%s2337 + $0xa8] sm:$0xff]
        %v2360 = vld [vmem:[%s2337 + $0xb0] sm:$0xff]
        %v2361 = vld [vmem:[%s2337 + $0xb8] sm:$0xff]
        %v2362 = vld [vmem:[%s2337 + $0xc0] sm:$0xff]
        %v2363 = vld [vmem:[%s2337 + $0xc8] sm:$0xff]
        %v2364 = vld [vmem:[%s2337 + $0xd0] sm:$0xff]
        %v2365 = vld [vmem:[%s2337 + $0xd8] sm:$0xff]
        %v2366 = vld [vmem:[%s2337 + $0xe0] sm:$0xff]
        %v2367 = vld [vmem:[%s2337 + $0xe8] sm:$0xff]
        %v2368 = vld [vmem:[%s2337 + $0xf0] sm:$0xff]
        %v2369 = vld [vmem:[%s2337 + $0xf8] sm:$0xff]
        %v2370 = vld [vmem:[%s2337 + $0x100] sm:$0xff]
        %v2371 = vld [vmem:[%s2337 + $0x108] sm:$0xff]
        %v2372 = vld [vmem:[%s2337 + $0x110] sm:$0xff]
        %v2373 = vld [vmem:[%s2337 + $0x118] sm:$0xff]
        %v2374 = vld [vmem:[%s2337 + $0x120] sm:$0xff]
        %v2375 = vld [vmem:[%s2337 + $0x128] sm:$0xff]
        %v2376 = vld [vmem:[%s2337 + $0x130] sm:$0xff]
        %v2377 = vld [vmem:[%s2337 + $0x138] sm:$0xff]
        %v2378 = vld [vmem:[%s2337 + $0x140] sm:$0xff]
        %v2379 = vld [vmem:[%s2337 + $0x148] sm:$0xff]
        %v2380 = vld [vmem:[%s2337 + $0x150] sm:$0xff]
        %v2381 = vld [vmem:[%s2337 + $0x158] sm:$0xff]
        %v2382 = vld [vmem:[%s2337 + $0x160] sm:$0xff]
        %v2383 = vld [vmem:[%s2337 + $0x168] sm:$0xff]
        %v2384 = vld [vmem:[%s2337 + $0x170] sm:$0xff]
        %v2385 = vld [vmem:[%s2337 + $0x178] sm:$0xff]
        %v2386 = vld [vmem:[%s2337 + $0x180] sm:$0xff]
        %v2387 = vld [vmem:[%s2337 + $0x188] sm:$0xff]
        %v2388 = vld [vmem:[%s2337 + $0x190] sm:$0xff]
        %v2389 = vld [vmem:[%s2337 + $0x198] sm:$0xff]
        %v2390 = vld [vmem:[%s2337 + $0x1a0] sm:$0xff]
        %v2391 = vld [vmem:[%s2337 + $0x1a8] sm:$0xff]
        %v2392 = vld [vmem:[%s2337 + $0x1b0] sm:$0xff]
        %v2393 = vld [vmem:[%s2337 + $0x1b8] sm:$0xff]
        %v2394 = vld [vmem:[%s2337 + $0x1c0] sm:$0xff]
        %v2395 = vld [vmem:[%s2337 + $0x1c8] sm:$0xff]
        %v2396 = vld [vmem:[%s2337 + $0x1d0] sm:$0xff]
        %v2397 = vld [vmem:[%s2337 + $0x1d8] sm:$0xff]
        %v2398 = vld [vmem:[%s2337 + $0x1e0] sm:$0xff]
        %v2399 = vld [vmem:[%s2337 + $0x1e8] sm:$0xff]
        %v2400 = vld [vmem:[%s2337 + $0x1f0] sm:$0xff]
        %v2401 = vld [vmem:[%s2337 + $0x1f8] sm:$0xff]
        %v2402 = vld [vmem:[%s2337 + $0x200] sm:$0xff]
        %v2403 = vld [vmem:[%s2337 + $0x208] sm:$0xff]
        %v2404 = vld [vmem:[%s2337 + $0x210] sm:$0xff]
        %v2405 = vld [vmem:[%s2337 + $0x218] sm:$0xff]
        %v2406 = vld [vmem:[%s2337 + $0x220] sm:$0xff]
        %v2407 = vld [vmem:[%s2337 + $0x228] sm:$0xff]
        %v2408 = vld [vmem:[%s2337 + $0x230] sm:$0xff]
        %v2409 = vld [vmem:[%s2337 + $0x238] sm:$0xff]
        %v2410 = vld [vmem:[%s2337 + $0x240] sm:$0xff]
        %v2411 = vld [vmem:[%s2337 + $0x248] sm:$0xff]
        %v2412 = vld [vmem:[%s2337 + $0x250] sm:$0xff]
        %v2413 = vld [vmem:[%s2337 + $0x258] sm:$0xff]
        %v2414 = vld [vmem:[%s2337 + $0x260] sm:$0xff]
        %v2415 = vld [vmem:[%s2337 + $0x268] sm:$0xff]
        %v2416 = vld [vmem:[%s2337 + $0x270] sm:$0xff]
        %v2417 = vld [vmem:[%s2337 + $0x278] sm:$0xff]
        %v2418 = vld [vmem:[%s2337 + $0x280] sm:$0xff]
        %v2419 = vld [vmem:[%s2337 + $0x288] sm:$0xff]
        %v2420 = vld [vmem:[%s2337 + $0x290] sm:$0xff]
        %v2421 = vld [vmem:[%s2337 + $0x298] sm:$0xff]
        %v2422 = vld [vmem:[%s2337 + $0x2a0] sm:$0xff]
        %v2423 = vld [vmem:[%s2337 + $0x2a8] sm:$0xff]
        %v2424 = vld [vmem:[%s2337 + $0x2b0] sm:$0xff]
        %v2425 = vld [vmem:[%s2337 + $0x2b8] sm:$0xff]
        %v2426 = vld [vmem:[%s2337 + $0x2c0] sm:$0xff]
        %v2427 = vld [vmem:[%s2337 + $0x2c8] sm:$0xff]
        %v2428 = vld [vmem:[%s2337 + $0x2d0] sm:$0xff]
        %v2429 = vld [vmem:[%s2337 + $0x2d8] sm:$0xff]
        %v2430 = vld [vmem:[%s2337 + $0x2e0] sm:$0xff]
        %v2431 = vld [vmem:[%s2337 + $0x2e8] sm:$0xff]
        %v2432 = vld [vmem:[%s2337 + $0x2f0] sm:$0xff]
        %v2433 = vld [vmem:[%s2337 + $0x2f8] sm:$0xff]
        %v2434 = vpack.c.bf16 %v2335, %v2335
        %v2435 = vpack.c.bf16 %v2336, %v2336
        %s2436 = scalar_lea.vmem %s4, 6
        %v2437 = vld [vmem:[%s2436] sm:$0x3f]
        %v2439 = vperm.slane %v2437, 0
        %v2440 = vperm.slane %v2437, 1
        %v2441 = vperm.slane %v2437, 2
        %v2442 = vperm.slane %v2437, 3
        %v2443 = vperm.slane %v2437, 4
        %v2444 = vperm.slane %v2437, 5
        %v2547 = vunpack.c.l.b16 %v2338
        %v2548 = vunpack.c.h.b16 %v2338
        %v2549 = vunpack.c.l.b16 %v2339
        %v2550 = vunpack.c.h.b16 %v2339
        %v2551 = vunpack.c.l.b16 %v2340
        %v2552 = vunpack.c.h.b16 %v2340
        %v2553 = vunpack.c.l.b16 %v2341
        %v2554 = vunpack.c.h.b16 %v2341
        %v2555 = vunpack.c.l.b16 %v2342
        %v2556 = vunpack.c.h.b16 %v2342
        %v2557 = vunpack.c.l.b16 %v2343
        %v2558 = vunpack.c.h.b16 %v2343
        %v2559 = vunpack.c.l.b16 %v2344
        %v2560 = vunpack.c.h.b16 %v2344
        %v2561 = vunpack.c.l.b16 %v2345
        %v2562 = vunpack.c.h.b16 %v2345
        %v2563 = vunpack.c.l.b16 %v2346
        %v2564 = vunpack.c.h.b16 %v2346
        %v2565 = vunpack.c.l.b16 %v2347
        %v2566 = vunpack.c.h.b16 %v2347
        %v2567 = vunpack.c.l.b16 %v2348
        %v2568 = vunpack.c.h.b16 %v2348
        %v2569 = vunpack.c.l.b16 %v2349
        %v2570 = vunpack.c.h.b16 %v2349
        %v2571 = vunpack.c.l.b16 %v2350
        %v2572 = vunpack.c.h.b16 %v2350
        %v2573 = vunpack.c.l.b16 %v2351
        %v2574 = vunpack.c.h.b16 %v2351
        %v2575 = vunpack.c.l.b16 %v2352
        %v2576 = vunpack.c.h.b16 %v2352
        %v2577 = vunpack.c.l.b16 %v2353
        %v2578 = vunpack.c.h.b16 %v2353
        %v2579 = vunpack.c.l.b16 %v2354
        %v2580 = vunpack.c.h.b16 %v2354
        %v2581 = vunpack.c.l.b16 %v2355
        %v2582 = vunpack.c.h.b16 %v2355
        %v2583 = vunpack.c.l.b16 %v2356
        %v2584 = vunpack.c.h.b16 %v2356
        %v2585 = vunpack.c.l.b16 %v2357
        %v2586 = vunpack.c.h.b16 %v2357
        %v2587 = vunpack.c.l.b16 %v2358
        %v2588 = vunpack.c.h.b16 %v2358
        %v2589 = vunpack.c.l.b16 %v2359
        %v2590 = vunpack.c.h.b16 %v2359
        %v2591 = vunpack.c.l.b16 %v2360
        %v2592 = vunpack.c.h.b16 %v2360
        %v2593 = vunpack.c.l.b16 %v2361
        %v2594 = vunpack.c.h.b16 %v2361
        %v2595 = vunpack.c.l.b16 %v2362
        %v2596 = vunpack.c.h.b16 %v2362
        %v2597 = vunpack.c.l.b16 %v2363
        %v2598 = vunpack.c.h.b16 %v2363
        %v2599 = vunpack.c.l.b16 %v2364
        %v2600 = vunpack.c.h.b16 %v2364
        %v2601 = vunpack.c.l.b16 %v2365
        %v2602 = vunpack.c.h.b16 %v2365
        %v2603 = vunpack.c.l.b16 %v2366
        %v2604 = vunpack.c.h.b16 %v2366
        %v2605 = vunpack.c.l.b16 %v2367
        %v2606 = vunpack.c.h.b16 %v2367
        %v2607 = vunpack.c.l.b16 %v2368
        %v2608 = vunpack.c.h.b16 %v2368
        %v2609 = vunpack.c.l.b16 %v2369
        %v2610 = vunpack.c.h.b16 %v2369
        %v2611 = vunpack.c.l.b16 %v2370
        %v2612 = vunpack.c.h.b16 %v2370
        %v2613 = vunpack.c.l.b16 %v2371
        %v2614 = vunpack.c.h.b16 %v2371
        %v2615 = vunpack.c.l.b16 %v2372
        %v2616 = vunpack.c.h.b16 %v2372
        %v2617 = vunpack.c.l.b16 %v2373
        %v2618 = vunpack.c.h.b16 %v2373
        %v2619 = vunpack.c.l.b16 %v2374
        %v2620 = vunpack.c.h.b16 %v2374
        %v2621 = vunpack.c.l.b16 %v2375
        %v2622 = vunpack.c.h.b16 %v2375
        %v2623 = vunpack.c.l.b16 %v2376
        %v2624 = vunpack.c.h.b16 %v2376
        %v2625 = vunpack.c.l.b16 %v2377
        %v2626 = vunpack.c.h.b16 %v2377
        %v2627 = vunpack.c.l.b16 %v2378
        %v2628 = vunpack.c.h.b16 %v2378
        %v2629 = vunpack.c.l.b16 %v2379
        %v2630 = vunpack.c.h.b16 %v2379
        %v2631 = vunpack.c.l.b16 %v2380
        %v2632 = vunpack.c.h.b16 %v2380
        %v2633 = vunpack.c.l.b16 %v2381
        %v2634 = vunpack.c.h.b16 %v2381
        %v2635 = vunpack.c.l.b16 %v2382
        %v2636 = vunpack.c.h.b16 %v2382
        %v2637 = vunpack.c.l.b16 %v2383
        %v2638 = vunpack.c.h.b16 %v2383
        %v2639 = vunpack.c.l.b16 %v2384
        %v2640 = vunpack.c.h.b16 %v2384
        %v2641 = vunpack.c.l.b16 %v2385
        %v2642 = vunpack.c.h.b16 %v2385
        %v2643 = vunpack.c.l.b16 %v2386
        %v2644 = vunpack.c.h.b16 %v2386
        %v2645 = vunpack.c.l.b16 %v2387
        %v2646 = vunpack.c.h.b16 %v2387
        %v2647 = vunpack.c.l.b16 %v2388
        %v2648 = vunpack.c.h.b16 %v2388
        %v2649 = vunpack.c.l.b16 %v2389
        %v2650 = vunpack.c.h.b16 %v2389
        %v2651 = vunpack.c.l.b16 %v2390
        %v2652 = vunpack.c.h.b16 %v2390
        %v2653 = vunpack.c.l.b16 %v2391
        %v2654 = vunpack.c.h.b16 %v2391
        %v2655 = vunpack.c.l.b16 %v2392
        %v2656 = vunpack.c.h.b16 %v2392
        %v2657 = vunpack.c.l.b16 %v2393
        %v2658 = vunpack.c.h.b16 %v2393
        %v2659 = vunpack.c.l.b16 %v2394
        %v2660 = vunpack.c.h.b16 %v2394
        %v2661 = vunpack.c.l.b16 %v2395
        %v2662 = vunpack.c.h.b16 %v2395
        %v2663 = vunpack.c.l.b16 %v2396
        %v2664 = vunpack.c.h.b16 %v2396
        %v2665 = vunpack.c.l.b16 %v2397
        %v2666 = vunpack.c.h.b16 %v2397
        %v2667 = vunpack.c.l.b16 %v2398
        %v2668 = vunpack.c.h.b16 %v2398
        %v2669 = vunpack.c.l.b16 %v2399
        %v2670 = vunpack.c.h.b16 %v2399
        %v2671 = vunpack.c.l.b16 %v2400
        %v2672 = vunpack.c.h.b16 %v2400
        %v2673 = vunpack.c.l.b16 %v2401
        %v2674 = vunpack.c.h.b16 %v2401
        %v2675 = vunpack.c.l.b16 %v2402
        %v2676 = vunpack.c.h.b16 %v2402
        %v2677 = vunpack.c.l.b16 %v2403
        %v2678 = vunpack.c.h.b16 %v2403
        %v2679 = vunpack.c.l.b16 %v2404
        %v2680 = vunpack.c.h.b16 %v2404
        %v2681 = vunpack.c.l.b16 %v2405
        %v2682 = vunpack.c.h.b16 %v2405
        %v2683 = vunpack.c.l.b16 %v2406
        %v2684 = vunpack.c.h.b16 %v2406
        %v2685 = vunpack.c.l.b16 %v2407
        %v2686 = vunpack.c.h.b16 %v2407
        %v2687 = vunpack.c.l.b16 %v2408
        %v2688 = vunpack.c.h.b16 %v2408
        %v2689 = vunpack.c.l.b16 %v2409
        %v2690 = vunpack.c.h.b16 %v2409
        %v2691 = vunpack.c.l.b16 %v2410
        %v2692 = vunpack.c.h.b16 %v2410
        %v2693 = vunpack.c.l.b16 %v2411
        %v2694 = vunpack.c.h.b16 %v2411
        %v2695 = vunpack.c.l.b16 %v2412
        %v2696 = vunpack.c.h.b16 %v2412
        %v2697 = vunpack.c.l.b16 %v2413
        %v2698 = vunpack.c.h.b16 %v2413
        %v2699 = vunpack.c.l.b16 %v2414
        %v2700 = vunpack.c.h.b16 %v2414
        %v2701 = vunpack.c.l.b16 %v2415
        %v2702 = vunpack.c.h.b16 %v2415
        %v2703 = vunpack.c.l.b16 %v2416
        %v2704 = vunpack.c.h.b16 %v2416
        %v2705 = vunpack.c.l.b16 %v2417
        %v2706 = vunpack.c.h.b16 %v2417
        %v2707 = vunpack.c.l.b16 %v2418
        %v2708 = vunpack.c.h.b16 %v2418
        %v2709 = vunpack.c.l.b16 %v2419
        %v2710 = vunpack.c.h.b16 %v2419
        %v2711 = vunpack.c.l.b16 %v2420
        %v2712 = vunpack.c.h.b16 %v2420
        %v2713 = vunpack.c.l.b16 %v2421
        %v2714 = vunpack.c.h.b16 %v2421
        %v2715 = vunpack.c.l.b16 %v2422
        %v2716 = vunpack.c.h.b16 %v2422
        %v2717 = vunpack.c.l.b16 %v2423
        %v2718 = vunpack.c.h.b16 %v2423
        %v2719 = vunpack.c.l.b16 %v2424
        %v2720 = vunpack.c.h.b16 %v2424
        %v2721 = vunpack.c.l.b16 %v2425
        %v2722 = vunpack.c.h.b16 %v2425
        %v2723 = vunpack.c.l.b16 %v2426
        %v2724 = vunpack.c.h.b16 %v2426
        %v2725 = vunpack.c.l.b16 %v2427
        %v2726 = vunpack.c.h.b16 %v2427
        %v2727 = vunpack.c.l.b16 %v2428
        %v2728 = vunpack.c.h.b16 %v2428
        %v2729 = vunpack.c.l.b16 %v2429
        %v2730 = vunpack.c.h.b16 %v2429
        %v2731 = vunpack.c.l.b16 %v2430
        %v2732 = vunpack.c.h.b16 %v2430
        %v2733 = vunpack.c.l.b16 %v2431
        %v2734 = vunpack.c.h.b16 %v2431
        %v2735 = vunpack.c.l.b16 %v2432
        %v2736 = vunpack.c.h.b16 %v2432
        %v2737 = vunpack.c.l.b16 %v2433
        %v2738 = vunpack.c.h.b16 %v2433
        %v2739 = vpack.c.b16 %v2553, %v2547
        %v2740 = vpack.c.b16 %v2554, %v2548
        %v2741 = vpack.c.b16 %v2555, %v2549
        %v2742 = vpack.c.b16 %v2556, %v2550
        %v2743 = vpack.c.b16 %v2557, %v2551
        %v2744 = vpack.c.b16 %v2558, %v2552
        %v2745 = vpack.c.b16 %v2565, %v2559
        %v2746 = vpack.c.b16 %v2566, %v2560
        %v2747 = vpack.c.b16 %v2567, %v2561
        %v2748 = vpack.c.b16 %v2568, %v2562
        %v2749 = vpack.c.b16 %v2569, %v2563
        %v2750 = vpack.c.b16 %v2570, %v2564
        %v2751 = vpack.c.b16 %v2577, %v2571
        %v2752 = vpack.c.b16 %v2578, %v2572
        %v2753 = vpack.c.b16 %v2579, %v2573
        %v2754 = vpack.c.b16 %v2580, %v2574
        %v2755 = vpack.c.b16 %v2581, %v2575
        %v2756 = vpack.c.b16 %v2582, %v2576
        %v2757 = vpack.c.b16 %v2589, %v2583
        %v2758 = vpack.c.b16 %v2590, %v2584
        %v2759 = vpack.c.b16 %v2591, %v2585
        %v2760 = vpack.c.b16 %v2592, %v2586
        %v2761 = vpack.c.b16 %v2593, %v2587
        %v2762 = vpack.c.b16 %v2594, %v2588
        %v2763 = vpack.c.b16 %v2601, %v2595
        %v2764 = vpack.c.b16 %v2602, %v2596
        %v2765 = vpack.c.b16 %v2603, %v2597
        %v2766 = vpack.c.b16 %v2604, %v2598
        %v2767 = vpack.c.b16 %v2605, %v2599
        %v2768 = vpack.c.b16 %v2606, %v2600
        %v2769 = vpack.c.b16 %v2613, %v2607
        %v2770 = vpack.c.b16 %v2614, %v2608
        %v2771 = vpack.c.b16 %v2615, %v2609
        %v2772 = vpack.c.b16 %v2616, %v2610
        %v2773 = vpack.c.b16 %v2617, %v2611
        %v2774 = vpack.c.b16 %v2618, %v2612
        %v2775 = vpack.c.b16 %v2625, %v2619
        %v2776 = vpack.c.b16 %v2626, %v2620
        %v2777 = vpack.c.b16 %v2627, %v2621
        %v2778 = vpack.c.b16 %v2628, %v2622
        %v2779 = vpack.c.b16 %v2629, %v2623
        %v2780 = vpack.c.b16 %v2630, %v2624
        %v2781 = vpack.c.b16 %v2637, %v2631
        %v2782 = vpack.c.b16 %v2638, %v2632
        %v2783 = vpack.c.b16 %v2639, %v2633
        %v2784 = vpack.c.b16 %v2640, %v2634
        %v2785 = vpack.c.b16 %v2641, %v2635
        %v2786 = vpack.c.b16 %v2642, %v2636
        %v2787 = vpack.c.b16 %v2649, %v2643
        %v2788 = vpack.c.b16 %v2650, %v2644
        %v2789 = vpack.c.b16 %v2651, %v2645
        %v2790 = vpack.c.b16 %v2652, %v2646
        %v2791 = vpack.c.b16 %v2653, %v2647
        %v2792 = vpack.c.b16 %v2654, %v2648
        %v2793 = vpack.c.b16 %v2661, %v2655
        %v2794 = vpack.c.b16 %v2662, %v2656
        %v2795 = vpack.c.b16 %v2663, %v2657
        %v2796 = vpack.c.b16 %v2664, %v2658
        %v2797 = vpack.c.b16 %v2665, %v2659
        %v2798 = vpack.c.b16 %v2666, %v2660
        %v2799 = vpack.c.b16 %v2673, %v2667
        %v2800 = vpack.c.b16 %v2674, %v2668
        %v2801 = vpack.c.b16 %v2675, %v2669
        %v2802 = vpack.c.b16 %v2676, %v2670
        %v2803 = vpack.c.b16 %v2677, %v2671
        %v2804 = vpack.c.b16 %v2678, %v2672
        %v2805 = vpack.c.b16 %v2685, %v2679
        %v2806 = vpack.c.b16 %v2686, %v2680
        %v2807 = vpack.c.b16 %v2687, %v2681
        %v2808 = vpack.c.b16 %v2688, %v2682
        %v2809 = vpack.c.b16 %v2689, %v2683
        %v2810 = vpack.c.b16 %v2690, %v2684
        %v2811 = vpack.c.b16 %v2697, %v2691
        %v2812 = vpack.c.b16 %v2698, %v2692
        %v2813 = vpack.c.b16 %v2699, %v2693
        %v2814 = vpack.c.b16 %v2700, %v2694
        %v2815 = vpack.c.b16 %v2701, %v2695
        %v2816 = vpack.c.b16 %v2702, %v2696
        %v2817 = vpack.c.b16 %v2709, %v2703
        %v2818 = vpack.c.b16 %v2710, %v2704
        %v2819 = vpack.c.b16 %v2711, %v2705
        %v2820 = vpack.c.b16 %v2712, %v2706
        %v2821 = vpack.c.b16 %v2713, %v2707
        %v2822 = vpack.c.b16 %v2714, %v2708
        %v2823 = vpack.c.b16 %v2721, %v2715
        %v2824 = vpack.c.b16 %v2722, %v2716
        %v2825 = vpack.c.b16 %v2723, %v2717
        %v2826 = vpack.c.b16 %v2724, %v2718
        %v2827 = vpack.c.b16 %v2725, %v2719
        %v2828 = vpack.c.b16 %v2726, %v2720
        %v2829 = vpack.c.b16 %v2733, %v2727
        %v2830 = vpack.c.b16 %v2734, %v2728
        %v2831 = vpack.c.b16 %v2735, %v2729
        %v2832 = vpack.c.b16 %v2736, %v2730
        %v2833 = vpack.c.b16 %v2737, %v2731
        %v2834 = vpack.c.b16 %v2738, %v2732
        %2931 = vmatpush.bf16.msra.mxu0 %v2781
        %2932 = vmatpush.bf16.msra.mxu0 %v2775
        %2933 = vmatpush.bf16.msra.mxu0 %v2769
        %2934 = vmatpush.bf16.msra.mxu0 %v2763
        %2935 = vmatpush.bf16.msra.mxu0 %v2757
        %2936 = vmatpush.bf16.msra.mxu0 %v2751
        %2937 = vmatpush.bf16.msra.mxu0 %v2745
        %2938 = vmatpush.bf16.msra.mxu0 %v2739
        %2939 = vmatmul.bf16.gmra.mxu0 %v2434
        %v2940 = vpop.f32.mrf.mxu0
        %v2941 = vadd.f32 %v2439, %v2940
        %v2942 = vpop.f32.mrf.mxu0
        %2943 = vdwg.mxu0
        %2944 = vmatpush.bf16.msra.mxu0 %v2829
        %2945 = vmatpush.bf16.msra.mxu0 %v2823
        %2946 = vmatpush.bf16.msra.mxu0 %v2817
        %2947 = vmatpush.bf16.msra.mxu0 %v2811
        %2948 = vmatpush.bf16.msra.mxu0 %v2805
        %2949 = vmatpush.bf16.msra.mxu0 %v2799
        %2950 = vmatpush.bf16.msra.mxu0 %v2793
        %2951 = vmatpush.bf16.msra.mxu0 %v2787
        %2952 = vmatmul.bf16.gmra.mxu0 %v2435
        %v2953 = vpop.f32.mrf.mxu0
        %v2954 = vadd.f32 %v2941, %v2953
        %v2955 = vpop.f32.mrf.mxu0
        %2956 = vdwg.mxu0
        %2957 = vmatpush.bf16.msra.mxu0 %v2782
        %2958 = vmatpush.bf16.msra.mxu0 %v2776
        %2959 = vmatpush.bf16.msra.mxu0 %v2770
        %2960 = vmatpush.bf16.msra.mxu0 %v2764
        %2961 = vmatpush.bf16.msra.mxu0 %v2758
        %2962 = vmatpush.bf16.msra.mxu0 %v2752
        %2963 = vmatpush.bf16.msra.mxu0 %v2746
        %2964 = vmatpush.bf16.msra.mxu0 %v2740
        %2965 = vmatmul.bf16.gmra.mxu0 %v2434
        %v2966 = vpop.f32.mrf.mxu0
        %v2967 = vadd.f32 %v2440, %v2966
        %v2968 = vpop.f32.mrf.mxu0
        %2969 = vdwg.mxu0
        %2970 = vmatpush.bf16.msra.mxu0 %v2830
        %2971 = vmatpush.bf16.msra.mxu0 %v2824
        %2972 = vmatpush.bf16.msra.mxu0 %v2818
        %2973 = vmatpush.bf16.msra.mxu0 %v2812
        %2974 = vmatpush.bf16.msra.mxu0 %v2806
        %2975 = vmatpush.bf16.msra.mxu0 %v2800
        %2976 = vmatpush.bf16.msra.mxu0 %v2794
        %2977 = vmatpush.bf16.msra.mxu0 %v2788
        %2978 = vmatmul.bf16.gmra.mxu0 %v2435
        %v2979 = vpop.f32.mrf.mxu0
        %v2980 = vadd.f32 %v2967, %v2979
        %v2981 = vpop.f32.mrf.mxu0
        %2982 = vdwg.mxu0
        %2983 = vmatpush.bf16.msra.mxu0 %v2783
        %2984 = vmatpush.bf16.msra.mxu0 %v2777
        %2985 = vmatpush.bf16.msra.mxu0 %v2771
        %2986 = vmatpush.bf16.msra.mxu0 %v2765
        %2987 = vmatpush.bf16.msra.mxu0 %v2759
        %2988 = vmatpush.bf16.msra.mxu0 %v2753
        %2989 = vmatpush.bf16.msra.mxu0 %v2747
        %2990 = vmatpush.bf16.msra.mxu0 %v2741
        %2991 = vmatmul.bf16.gmra.mxu0 %v2434
        %v2992 = vpop.f32.mrf.mxu0
        %v2993 = vadd.f32 %v2441, %v2992
        %v2994 = vpop.f32.mrf.mxu0
        %2995 = vdwg.mxu0
        %2996 = vmatpush.bf16.msra.mxu0 %v2831
        %2997 = vmatpush.bf16.msra.mxu0 %v2825
        %2998 = vmatpush.bf16.msra.mxu0 %v2819
        %2999 = vmatpush.bf16.msra.mxu0 %v2813
        %3000 = vmatpush.bf16.msra.mxu0 %v2807
        %3001 = vmatpush.bf16.msra.mxu0 %v2801
        %3002 = vmatpush.bf16.msra.mxu0 %v2795
        %3003 = vmatpush.bf16.msra.mxu0 %v2789
        %3004 = vmatmul.bf16.gmra.mxu0 %v2435
        %v3005 = vpop.f32.mrf.mxu0
        %v3006 = vadd.f32 %v2993, %v3005
        %v3007 = vpop.f32.mrf.mxu0
        %3008 = vdwg.mxu0
        %3009 = vmatpush.bf16.msra.mxu0 %v2784
        %3010 = vmatpush.bf16.msra.mxu0 %v2778
        %3011 = vmatpush.bf16.msra.mxu0 %v2772
        %3012 = vmatpush.bf16.msra.mxu0 %v2766
        %3013 = vmatpush.bf16.msra.mxu0 %v2760
        %3014 = vmatpush.bf16.msra.mxu0 %v2754
        %3015 = vmatpush.bf16.msra.mxu0 %v2748
        %3016 = vmatpush.bf16.msra.mxu0 %v2742
        %3017 = vmatmul.bf16.gmra.mxu0 %v2434
        %v3018 = vpop.f32.mrf.mxu0
        %v3019 = vadd.f32 %v2442, %v3018
        %v3020 = vpop.f32.mrf.mxu0
        %3021 = vdwg.mxu0
        %3022 = vmatpush.bf16.msra.mxu0 %v2832
        %3023 = vmatpush.bf16.msra.mxu0 %v2826
        %3024 = vmatpush.bf16.msra.mxu0 %v2820
        %3025 = vmatpush.bf16.msra.mxu0 %v2814
        %3026 = vmatpush.bf16.msra.mxu0 %v2808
        %3027 = vmatpush.bf16.msra.mxu0 %v2802
        %3028 = vmatpush.bf16.msra.mxu0 %v2796
        %3029 = vmatpush.bf16.msra.mxu0 %v2790
        %3030 = vmatmul.bf16.gmra.mxu0 %v2435
        %v3031 = vpop.f32.mrf.mxu0
        %v3032 = vadd.f32 %v3019, %v3031
        %v3033 = vpop.f32.mrf.mxu0
        %3034 = vdwg.mxu0
        %3035 = vmatpush.bf16.msra.mxu0 %v2785
        %3036 = vmatpush.bf16.msra.mxu0 %v2779
        %3037 = vmatpush.bf16.msra.mxu0 %v2773
        %3038 = vmatpush.bf16.msra.mxu0 %v2767
        %3039 = vmatpush.bf16.msra.mxu0 %v2761
        %3040 = vmatpush.bf16.msra.mxu0 %v2755
        %3041 = vmatpush.bf16.msra.mxu0 %v2749
        %3042 = vmatpush.bf16.msra.mxu0 %v2743
        %3043 = vmatmul.bf16.gmra.mxu0 %v2434
        %v3044 = vpop.f32.mrf.mxu0
        %v3045 = vadd.f32 %v2443, %v3044
        %v3046 = vpop.f32.mrf.mxu0
        %3047 = vdwg.mxu0
        %3048 = vmatpush.bf16.msra.mxu0 %v2833
        %3049 = vmatpush.bf16.msra.mxu0 %v2827
        %3050 = vmatpush.bf16.msra.mxu0 %v2821
        %3051 = vmatpush.bf16.msra.mxu0 %v2815
        %3052 = vmatpush.bf16.msra.mxu0 %v2809
        %3053 = vmatpush.bf16.msra.mxu0 %v2803
        %3054 = vmatpush.bf16.msra.mxu0 %v2797
        %3055 = vmatpush.bf16.msra.mxu0 %v2791
        %3056 = vmatmul.bf16.gmra.mxu0 %v2435
        %v3057 = vpop.f32.mrf.mxu0
        %v3058 = vadd.f32 %v3045, %v3057
        %v3059 = vpop.f32.mrf.mxu0
        %3060 = vdwg.mxu0
        %3061 = vmatpush.bf16.msra.mxu0 %v2786
        %3062 = vmatpush.bf16.msra.mxu0 %v2780
        %3063 = vmatpush.bf16.msra.mxu0 %v2774
        %3064 = vmatpush.bf16.msra.mxu0 %v2768
        %3065 = vmatpush.bf16.msra.mxu0 %v2762
        %3066 = vmatpush.bf16.msra.mxu0 %v2756
        %3067 = vmatpush.bf16.msra.mxu0 %v2750
        %3068 = vmatpush.bf16.msra.mxu0 %v2744
        %3069 = vmatmul.bf16.gmra.mxu0 %v2434
        %v3070 = vpop.f32.mrf.mxu0
        %v3071 = vadd.f32 %v2444, %v3070
        %v3072 = vpop.f32.mrf.mxu0
        %3073 = vdwg.mxu0
        %3074 = vmatpush.bf16.msra.mxu0 %v2834
        %3075 = vmatpush.bf16.msra.mxu0 %v2828
        %3076 = vmatpush.bf16.msra.mxu0 %v2822
        %3077 = vmatpush.bf16.msra.mxu0 %v2816
        %3078 = vmatpush.bf16.msra.mxu0 %v2810
        %3079 = vmatpush.bf16.msra.mxu0 %v2804
        %3080 = vmatpush.bf16.msra.mxu0 %v2798
        %3081 = vmatpush.bf16.msra.mxu0 %v2792
        %3082 = vmatmul.bf16.gmra.mxu0 %v2435
        %v3083 = vpop.f32.mrf.mxu0
        %v3084 = vadd.f32 %v3071, %v3083
        %v3085 = vpop.f32.mrf.mxu0
        %3086 = vdwg.mxu0
        %s3087 = scalar_lea.vmem %s5, 256
        %v3088 = vld [vmem:[%s3087] sm:$0xff]
        %v3089 = vld [vmem:[%s3087 + $0x8] sm:$0xff]
        %v3090 = vld [vmem:[%s3087 + $0x10] sm:$0xff]
        %v3091 = vld [vmem:[%s3087 + $0x18] sm:$0xff]
        %v3092 = vld [vmem:[%s3087 + $0x20] sm:$0xff]
        %v3093 = vld [vmem:[%s3087 + $0x28] sm:$0xff]
        %v3094 = vld [vmem:[%s3087 + $0x30] sm:$0xff]
        %v3095 = vld [vmem:[%s3087 + $0x38] sm:$0xff]
        %v3096 = vld [vmem:[%s3087 + $0x40] sm:$0xff]
        %v3097 = vld [vmem:[%s3087 + $0x48] sm:$0xff]
        %v3098 = vld [vmem:[%s3087 + $0x50] sm:$0xff]
        %v3099 = vld [vmem:[%s3087 + $0x58] sm:$0xff]
        %v3100 = vld [vmem:[%s3087 + $0x60] sm:$0xff]
        %v3101 = vld [vmem:[%s3087 + $0x68] sm:$0xff]
        %v3102 = vld [vmem:[%s3087 + $0x70] sm:$0xff]
        %v3103 = vld [vmem:[%s3087 + $0x78] sm:$0xff]
        %v3104 = vld [vmem:[%s3087 + $0x80] sm:$0xff]
        %v3105 = vld [vmem:[%s3087 + $0x88] sm:$0xff]
        %v3106 = vld [vmem:[%s3087 + $0x90] sm:$0xff]
        %v3107 = vld [vmem:[%s3087 + $0x98] sm:$0xff]
        %v3108 = vld [vmem:[%s3087 + $0xa0] sm:$0xff]
        %v3109 = vld [vmem:[%s3087 + $0xa8] sm:$0xff]
        %v3110 = vld [vmem:[%s3087 + $0xb0] sm:$0xff]
        %v3111 = vld [vmem:[%s3087 + $0xb8] sm:$0xff]
        %v3112 = vld [vmem:[%s3087 + $0xc0] sm:$0xff]
        %v3113 = vld [vmem:[%s3087 + $0xc8] sm:$0xff]
        %v3114 = vld [vmem:[%s3087 + $0xd0] sm:$0xff]
        %v3115 = vld [vmem:[%s3087 + $0xd8] sm:$0xff]
        %v3116 = vld [vmem:[%s3087 + $0xe0] sm:$0xff]
        %v3117 = vld [vmem:[%s3087 + $0xe8] sm:$0xff]
        %v3118 = vld [vmem:[%s3087 + $0xf0] sm:$0xff]
        %v3119 = vld [vmem:[%s3087 + $0xf8] sm:$0xff]
        %s3120 = scalar_lea.vmem %s6, 2
        %v3121 = vld [vmem:[%s3120] sm:$0x3]
        %v3122 = vmul.f32 %v2954, 0.088388346
        %v3123 = vpack.c.bf16 %v3122, %v3122
        %v3124 = vpack.c.bf16 %v3006, %v3006
        %3125 = vmatpush.bf16.xpose.msra.mxu0 0
        %3126 = vmatpush.bf16.xpose.msra.mxu0 0
        %3127 = vmatpush.bf16.xpose.msra.mxu0 0
        %3128 = vmatpush.bf16.xpose.msra.mxu0 0
        %3129 = vmatpush.bf16.xpose.msra.mxu0 0
        %3130 = vmatpush.bf16.xpose.msra.mxu0 0
        %3131 = vmatpush.bf16.xpose.msra.mxu0 0
        %3132 = vmatpush.bf16.xpose.msra.mxu0 %v3124
        %3133 = vmatmul.bf16.gmra.mxu0 %v3123
        %v3134 = vpop.f32.mrf.mxu0
        %v3135 = vadd.f32 %v509, %v3134
        %v3136 = vpop.f32.mrf.mxu0
        %3137 = vdwg.mxu0
        %v3138 = vsel %vm1429, %v3135, -inf
        %3139 = vmax.xlane.f32.xlu0 %v3138
        %v3140 = vpop.xlane.xlu0 %3139
        %v3141 = vsub.f32 %v3135, %v3140
        %v3142 = vmul.f32 %v3141, 1.442695
        %v3143 = vpow.pop %v3142
        %v3144 = vsel %vm1429, %v3143, 0.0
        %3145 = vadd.xlane.f32.xlu0 %v3144
        %v3146 = vpop.xlane.xlu0 %3145
        %v3147 = vrcp.pop %v3146
        %v3148 = vmul.f32 %v3143, %v3147
        %v3149 = vpack.c.bf16 %v3148, %v3148
        %v3150 = vpack.c.bf16 %v3058, %v3058
        %v3152 = vsel %vm1429, %v3149, 0
        %v3155 = vsel %vm1446, %v3150, 0
        %3157 = vmatpush.bf16.msra.mxu0 0
        %3158 = vmatpush.bf16.msra.mxu0 0
        %3159 = vmatpush.bf16.msra.mxu0 0
        %3160 = vmatpush.bf16.msra.mxu0 0
        %3161 = vmatpush.bf16.msra.mxu0 0
        %3162 = vmatpush.bf16.msra.mxu0 0
        %3163 = vmatpush.bf16.msra.mxu0 0
        %3164 = vmatpush.bf16.msra.mxu0 %v3155
        %3165 = vmatmul.bf16.gmra.mxu0 %v3152
        %v3166 = vpop.f32.mrf.mxu0
        %v3167 = vadd.f32 0.0, %v3166
        %v3168 = vpop.f32.mrf.mxu0
        %3169 = vdwg.mxu0
        %v3170 = vpack.c.bf16 %v3167, %v3167
        %v3187 = vunpack.c.l.b16 %v3088
        %v3188 = vunpack.c.h.b16 %v3088
        %v3189 = vunpack.c.l.b16 %v3089
        %v3190 = vunpack.c.h.b16 %v3089
        %v3191 = vunpack.c.l.b16 %v3090
        %v3192 = vunpack.c.h.b16 %v3090
        %v3193 = vunpack.c.l.b16 %v3091
        %v3194 = vunpack.c.h.b16 %v3091
        %v3195 = vunpack.c.l.b16 %v3092
        %v3196 = vunpack.c.h.b16 %v3092
        %v3197 = vunpack.c.l.b16 %v3093
        %v3198 = vunpack.c.h.b16 %v3093
        %v3199 = vunpack.c.l.b16 %v3094
        %v3200 = vunpack.c.h.b16 %v3094
        %v3201 = vunpack.c.l.b16 %v3095
        %v3202 = vunpack.c.h.b16 %v3095
        %v3203 = vunpack.c.l.b16 %v3096
        %v3204 = vunpack.c.h.b16 %v3096
        %v3205 = vunpack.c.l.b16 %v3097
        %v3206 = vunpack.c.h.b16 %v3097
        %v3207 = vunpack.c.l.b16 %v3098
        %v3208 = vunpack.c.h.b16 %v3098
        %v3209 = vunpack.c.l.b16 %v3099
        %v3210 = vunpack.c.h.b16 %v3099
        %v3211 = vunpack.c.l.b16 %v3100
        %v3212 = vunpack.c.h.b16 %v3100
        %v3213 = vunpack.c.l.b16 %v3101
        %v3214 = vunpack.c.h.b16 %v3101
        %v3215 = vunpack.c.l.b16 %v3102
        %v3216 = vunpack.c.h.b16 %v3102
        %v3217 = vunpack.c.l.b16 %v3103
        %v3218 = vunpack.c.h.b16 %v3103
        %v3219 = vpack.c.b16 %v3189, %v3187
        %v3220 = vpack.c.b16 %v3190, %v3188
        %v3221 = vpack.c.b16 %v3193, %v3191
        %v3222 = vpack.c.b16 %v3194, %v3192
        %v3223 = vpack.c.b16 %v3197, %v3195
        %v3224 = vpack.c.b16 %v3198, %v3196
        %v3225 = vpack.c.b16 %v3201, %v3199
        %v3226 = vpack.c.b16 %v3202, %v3200
        %v3227 = vpack.c.b16 %v3205, %v3203
        %v3228 = vpack.c.b16 %v3206, %v3204
        %v3229 = vpack.c.b16 %v3209, %v3207
        %v3230 = vpack.c.b16 %v3210, %v3208
        %v3231 = vpack.c.b16 %v3213, %v3211
        %v3232 = vpack.c.b16 %v3214, %v3212
        %v3233 = vpack.c.b16 %v3217, %v3215
        %v3234 = vpack.c.b16 %v3218, %v3216
        %3251 = vmatpush.bf16.msra.mxu0 %v3233
        %3252 = vmatpush.bf16.msra.mxu0 %v3231
        %3253 = vmatpush.bf16.msra.mxu0 %v3229
        %3254 = vmatpush.bf16.msra.mxu0 %v3227
        %3255 = vmatpush.bf16.msra.mxu0 %v3225
        %3256 = vmatpush.bf16.msra.mxu0 %v3223
        %3257 = vmatpush.bf16.msra.mxu0 %v3221
        %3258 = vmatpush.bf16.msra.mxu0 %v3219
        %3259 = vmatmul.bf16.gmra.mxu0 %v3170
        %v3260 = vpop.f32.mrf.mxu0
        %v3261 = vadd.f32 0.0, %v3260
        %v3262 = vpop.f32.mrf.mxu0
        %3263 = vdwg.mxu0
        %3264 = vmatpush.bf16.msra.mxu0 %v3234
        %3265 = vmatpush.bf16.msra.mxu0 %v3232
        %3266 = vmatpush.bf16.msra.mxu0 %v3230
        %3267 = vmatpush.bf16.msra.mxu0 %v3228
        %3268 = vmatpush.bf16.msra.mxu0 %v3226
        %3269 = vmatpush.bf16.msra.mxu0 %v3224
        %3270 = vmatpush.bf16.msra.mxu0 %v3222
        %3271 = vmatpush.bf16.msra.mxu0 %v3220
        %3272 = vmatmul.bf16.gmra.mxu0 %v3170
        %v3273 = vpop.f32.mrf.mxu0
        %v3274 = vadd.f32 0.0, %v3273
        %v3275 = vpop.f32.mrf.mxu0
        %3276 = vdwg.mxu0
        %v3278 = vperm.slane %v3121, 0
        %v3279 = vperm.slane %v3121, 1
        %v3282 = vadd.f32 %v3278, %v3261
        %v3283 = vadd.f32 %v3279, %v3274
        %v3284 = vmul.f32 %v2980, 0.088388346
        %v3285 = vpack.c.bf16 %v3284, %v3284
        %v3286 = vpack.c.bf16 %v3032, %v3032
        %3287 = vmatpush.bf16.xpose.msra.mxu0 0
        %3288 = vmatpush.bf16.xpose.msra.mxu0 0
        %3289 = vmatpush.bf16.xpose.msra.mxu0 0
        %3290 = vmatpush.bf16.xpose.msra.mxu0 0
        %3291 = vmatpush.bf16.xpose.msra.mxu0 0
        %3292 = vmatpush.bf16.xpose.msra.mxu0 0
        %3293 = vmatpush.bf16.xpose.msra.mxu0 0
        %3294 = vmatpush.bf16.xpose.msra.mxu0 %v3286
        %3295 = vmatmul.bf16.gmra.mxu0 %v3285
        %v3296 = vpop.f32.mrf.mxu0
        %v3297 = vadd.f32 %v509, %v3296
        %v3298 = vpop.f32.mrf.mxu0
        %3299 = vdwg.mxu0
        %v3300 = vsel %vm1429, %v3297, -inf
        %3301 = vmax.xlane.f32.xlu0 %v3300
        %v3302 = vpop.xlane.xlu0 %3301
        %v3303 = vsub.f32 %v3297, %v3302
        %v3304 = vmul.f32 %v3303, 1.442695
        %v3305 = vpow.pop %v3304
        %v3306 = vsel %vm1429, %v3305, 0.0
        %3307 = vadd.xlane.f32.xlu0 %v3306
        %v3308 = vpop.xlane.xlu0 %3307
        %v3309 = vrcp.pop %v3308
        %v3310 = vmul.f32 %v3305, %v3309
        %v3311 = vpack.c.bf16 %v3310, %v3310
        %v3312 = vpack.c.bf16 %v3084, %v3084
        %v3314 = vsel %vm1429, %v3311, 0
        %v3317 = vsel %vm1446, %v3312, 0
        %3319 = vmatpush.bf16.msra.mxu0 0
        %3320 = vmatpush.bf16.msra.mxu0 0
        %3321 = vmatpush.bf16.msra.mxu0 0
        %3322 = vmatpush.bf16.msra.mxu0 0
        %3323 = vmatpush.bf16.msra.mxu0 0
        %3324 = vmatpush.bf16.msra.mxu0 0
        %3325 = vmatpush.bf16.msra.mxu0 0
        %3326 = vmatpush.bf16.msra.mxu0 %v3317
        %3327 = vmatmul.bf16.gmra.mxu0 %v3314
        %v3328 = vpop.f32.mrf.mxu0
        %v3329 = vadd.f32 0.0, %v3328
        %v3330 = vpop.f32.mrf.mxu0
        %3331 = vdwg.mxu0
        %v3332 = vpack.c.bf16 %v3329, %v3329
        %v3349 = vunpack.c.l.b16 %v3104
        %v3350 = vunpack.c.h.b16 %v3104
        %v3351 = vunpack.c.l.b16 %v3105
        %v3352 = vunpack.c.h.b16 %v3105
        %v3353 = vunpack.c.l.b16 %v3106
        %v3354 = vunpack.c.h.b16 %v3106
        %v3355 = vunpack.c.l.b16 %v3107
        %v3356 = vunpack.c.h.b16 %v3107
        %v3357 = vunpack.c.l.b16 %v3108
        %v3358 = vunpack.c.h.b16 %v3108
        %v3359 = vunpack.c.l.b16 %v3109
        %v3360 = vunpack.c.h.b16 %v3109
        %v3361 = vunpack.c.l.b16 %v3110
        %v3362 = vunpack.c.h.b16 %v3110
        %v3363 = vunpack.c.l.b16 %v3111
        %v3364 = vunpack.c.h.b16 %v3111
        %v3365 = vunpack.c.l.b16 %v3112
        %v3366 = vunpack.c.h.b16 %v3112
        %v3367 = vunpack.c.l.b16 %v3113
        %v3368 = vunpack.c.h.b16 %v3113
        %v3369 = vunpack.c.l.b16 %v3114
        %v3370 = vunpack.c.h.b16 %v3114
        %v3371 = vunpack.c.l.b16 %v3115
        %v3372 = vunpack.c.h.b16 %v3115
        %v3373 = vunpack.c.l.b16 %v3116
        %v3374 = vunpack.c.h.b16 %v3116
        %v3375 = vunpack.c.l.b16 %v3117
        %v3376 = vunpack.c.h.b16 %v3117
        %v3377 = vunpack.c.l.b16 %v3118
        %v3378 = vunpack.c.h.b16 %v3118
        %v3379 = vunpack.c.l.b16 %v3119
        %v3380 = vunpack.c.h.b16 %v3119
        %v3381 = vpack.c.b16 %v3351, %v3349
        %v3382 = vpack.c.b16 %v3352, %v3350
        %v3383 = vpack.c.b16 %v3355, %v3353
        %v3384 = vpack.c.b16 %v3356, %v3354
        %v3385 = vpack.c.b16 %v3359, %v3357
        %v3386 = vpack.c.b16 %v3360, %v3358
        %v3387 = vpack.c.b16 %v3363, %v3361
        %v3388 = vpack.c.b16 %v3364, %v3362
        %v3389 = vpack.c.b16 %v3367, %v3365
        %v3390 = vpack.c.b16 %v3368, %v3366
        %v3391 = vpack.c.b16 %v3371, %v3369
        %v3392 = vpack.c.b16 %v3372, %v3370
        %v3393 = vpack.c.b16 %v3375, %v3373
        %v3394 = vpack.c.b16 %v3376, %v3374
        %v3395 = vpack.c.b16 %v3379, %v3377
        %v3396 = vpack.c.b16 %v3380, %v3378
        %3413 = vmatpush.bf16.msra.mxu0 %v3395
        %3414 = vmatpush.bf16.msra.mxu0 %v3393
        %3415 = vmatpush.bf16.msra.mxu0 %v3391
        %3416 = vmatpush.bf16.msra.mxu0 %v3389
        %3417 = vmatpush.bf16.msra.mxu0 %v3387
        %3418 = vmatpush.bf16.msra.mxu0 %v3385
        %3419 = vmatpush.bf16.msra.mxu0 %v3383
        %3420 = vmatpush.bf16.msra.mxu0 %v3381
        %3421 = vmatmul.bf16.gmra.mxu0 %v3332
        %v3422 = vpop.f32.mrf.mxu0
        %v3423 = vadd.f32 0.0, %v3422
        %v3424 = vpop.f32.mrf.mxu0
        %3425 = vdwg.mxu0
        %3426 = vmatpush.bf16.msra.mxu0 %v3396
        %3427 = vmatpush.bf16.msra.mxu0 %v3394
        %3428 = vmatpush.bf16.msra.mxu0 %v3392
        %3429 = vmatpush.bf16.msra.mxu0 %v3390
        %3430 = vmatpush.bf16.msra.mxu0 %v3388
        %3431 = vmatpush.bf16.msra.mxu0 %v3386
        %3432 = vmatpush.bf16.msra.mxu0 %v3384
        %3433 = vmatpush.bf16.msra.mxu0 %v3382
        %3434 = vmatmul.bf16.gmra.mxu0 %v3332
        %v3435 = vpop.f32.mrf.mxu0
        %v3436 = vadd.f32 0.0, %v3435
        %v3437 = vpop.f32.mrf.mxu0
        %3438 = vdwg.mxu0
        %v3439 = vadd.f32 %v3282, %v3423
        %v3440 = vadd.f32 %v3283, %v3436
        %v3441 = vadd.f32 %v2335, %v3439
        %v3442 = vadd.f32 %v2336, %v3440
        %s3443 = scalar_lea.vmem %s7, 2
        %v3444 = vld [vmem:[%s3443] sm:$0x3]
        %s3445 = scalar_lea.vmem %s8, 2
        %v3446 = vld [vmem:[%s3445] sm:$0x3]
        %v3447 = vadd.f32 %v3441, %v3442
        %3448 = vadd.xlane.f32.xlu0 %v3447
        %v3449 = vpop.xlane.xlu0 %3448
        %v3450 = vmul.f32 %v3449, %v1747
        %v3451 = vmul.f32 %v3441, %v3441
        %v3452 = vmul.f32 %v3442, %v3442
        %v3453 = vadd.f32 %v3451, %v3452
        %3454 = vadd.xlane.f32.xlu0 %v3453
        %v3455 = vpop.xlane.xlu0 %3454
        %v3456 = vmul.f32 %v3455, %v1747
        %v3457 = vmul.f32 %v3450, %v3450
        %v3458 = vsub.f32 %v3456, %v3457
        %v3459 = vsub.f32 %v3441, %v3450
        %v3460 = vsub.f32 %v3442, %v3450
        %v3461 = vadd.f32 %v3458, 1e-05
        %v3462 = vrsqrt.pop %v3461
        %v3463 = vmul.f32 %v3462, %v3461
        %v3464 = vmul.f32 %v3463, %v3462
        %v3465 = vmul.f32 0.5, %v3464
        %v3466 = vsub.f32 1.5, %v3465
        %v3467 = vmul.f32 %v3462, %v3466
        %vm3468 = vweird.f32 %v3461
        %vm3469 = vweird.f32 %v3462
        %vm3470 = vmor %vm3468, %vm3469
        %v3471 = vsel %vm3470, %v3462, %v3467
        %v3472 = vmul.f32 %v3459, %v3471
        %v3473 = vmul.f32 %v3460, %v3471
        %v3475 = vperm.slane %v3444, 0
        %v3476 = vperm.slane %v3444, 1
        %v3479 = vmul.f32 %v3472, %v3475
        %v3480 = vmul.f32 %v3473, %v3476
        %v3482 = vperm.slane %v3446, 0
        %v3483 = vperm.slane %v3446, 1
        %v3486 = vadd.f32 %v3479, %v3482
        %v3487 = vadd.f32 %v3480, %v3483
        %s3488 = scalar_lea.vmem %s9, 256
        %v3489 = vld [vmem:[%s3488] sm:$0xff]
        %v3490 = vld [vmem:[%s3488 + $0x8] sm:$0xff]
        %v3491 = vld [vmem:[%s3488 + $0x10] sm:$0xff]
        %v3492 = vld [vmem:[%s3488 + $0x18] sm:$0xff]
        %v3493 = vld [vmem:[%s3488 + $0x20] sm:$0xff]
        %v3494 = vld [vmem:[%s3488 + $0x28] sm:$0xff]
        %v3495 = vld [vmem:[%s3488 + $0x30] sm:$0xff]
        %v3496 = vld [vmem:[%s3488 + $0x38] sm:$0xff]
        %v3497 = vld [vmem:[%s3488 + $0x40] sm:$0xff]
        %v3498 = vld [vmem:[%s3488 + $0x48] sm:$0xff]
        %v3499 = vld [vmem:[%s3488 + $0x50] sm:$0xff]
        %v3500 = vld [vmem:[%s3488 + $0x58] sm:$0xff]
        %v3501 = vld [vmem:[%s3488 + $0x60] sm:$0xff]
        %v3502 = vld [vmem:[%s3488 + $0x68] sm:$0xff]
        %v3503 = vld [vmem:[%s3488 + $0x70] sm:$0xff]
        %v3504 = vld [vmem:[%s3488 + $0x78] sm:$0xff]
        %v3505 = vld [vmem:[%s3488 + $0x80] sm:$0xff]
        %v3506 = vld [vmem:[%s3488 + $0x88] sm:$0xff]
        %v3507 = vld [vmem:[%s3488 + $0x90] sm:$0xff]
        %v3508 = vld [vmem:[%s3488 + $0x98] sm:$0xff]
        %v3509 = vld [vmem:[%s3488 + $0xa0] sm:$0xff]
        %v3510 = vld [vmem:[%s3488 + $0xa8] sm:$0xff]
        %v3511 = vld [vmem:[%s3488 + $0xb0] sm:$0xff]
        %v3512 = vld [vmem:[%s3488 + $0xb8] sm:$0xff]
        %v3513 = vld [vmem:[%s3488 + $0xc0] sm:$0xff]
        %v3514 = vld [vmem:[%s3488 + $0xc8] sm:$0xff]
        %v3515 = vld [vmem:[%s3488 + $0xd0] sm:$0xff]
        %v3516 = vld [vmem:[%s3488 + $0xd8] sm:$0xff]
        %v3517 = vld [vmem:[%s3488 + $0xe0] sm:$0xff]
        %v3518 = vld [vmem:[%s3488 + $0xe8] sm:$0xff]
        %v3519 = vld [vmem:[%s3488 + $0xf0] sm:$0xff]
        %v3520 = vld [vmem:[%s3488 + $0xf8] sm:$0xff]
        %v3521 = vpack.c.bf16 %v3486, %v3486
        %v3522 = vpack.c.bf16 %v3487, %v3487
        %s3523 = scalar_lea.vmem %s10, 2
        %v3524 = vld [vmem:[%s3523] sm:$0x3]
        %v3526 = vperm.slane %v3524, 0
        %v3527 = vperm.slane %v3524, 1
        %v3562 = vunpack.c.l.b16 %v3489
        %v3563 = vunpack.c.h.b16 %v3489
        %v3564 = vunpack.c.l.b16 %v3490
        %v3565 = vunpack.c.h.b16 %v3490
        %v3566 = vunpack.c.l.b16 %v3491
        %v3567 = vunpack.c.h.b16 %v3491
        %v3568 = vunpack.c.l.b16 %v3492
        %v3569 = vunpack.c.h.b16 %v3492
        %v3570 = vunpack.c.l.b16 %v3493
        %v3571 = vunpack.c.h.b16 %v3493
        %v3572 = vunpack.c.l.b16 %v3494
        %v3573 = vunpack.c.h.b16 %v3494
        %v3574 = vunpack.c.l.b16 %v3495
        %v3575 = vunpack.c.h.b16 %v3495
        %v3576 = vunpack.c.l.b16 %v3496
        %v3577 = vunpack.c.h.b16 %v3496
        %v3578 = vunpack.c.l.b16 %v3497
        %v3579 = vunpack.c.h.b16 %v3497
        %v3580 = vunpack.c.l.b16 %v3498
        %v3581 = vunpack.c.h.b16 %v3498
        %v3582 = vunpack.c.l.b16 %v3499
        %v3583 = vunpack.c.h.b16 %v3499
        %v3584 = vunpack.c.l.b16 %v3500
        %v3585 = vunpack.c.h.b16 %v3500
        %v3586 = vunpack.c.l.b16 %v3501
        %v3587 = vunpack.c.h.b16 %v3501
        %v3588 = vunpack.c.l.b16 %v3502
        %v3589 = vunpack.c.h.b16 %v3502
        %v3590 = vunpack.c.l.b16 %v3503
        %v3591 = vunpack.c.h.b16 %v3503
        %v3592 = vunpack.c.l.b16 %v3504
        %v3593 = vunpack.c.h.b16 %v3504
        %v3594 = vunpack.c.l.b16 %v3505
        %v3595 = vunpack.c.h.b16 %v3505
        %v3596 = vunpack.c.l.b16 %v3506
        %v3597 = vunpack.c.h.b16 %v3506
        %v3598 = vunpack.c.l.b16 %v3507
        %v3599 = vunpack.c.h.b16 %v3507
        %v3600 = vunpack.c.l.b16 %v3508
        %v3601 = vunpack.c.h.b16 %v3508
        %v3602 = vunpack.c.l.b16 %v3509
        %v3603 = vunpack.c.h.b16 %v3509
        %v3604 = vunpack.c.l.b16 %v3510
        %v3605 = vunpack.c.h.b16 %v3510
        %v3606 = vunpack.c.l.b16 %v3511
        %v3607 = vunpack.c.h.b16 %v3511
        %v3608 = vunpack.c.l.b16 %v3512
        %v3609 = vunpack.c.h.b16 %v3512
        %v3610 = vunpack.c.l.b16 %v3513
        %v3611 = vunpack.c.h.b16 %v3513
        %v3612 = vunpack.c.l.b16 %v3514
        %v3613 = vunpack.c.h.b16 %v3514
        %v3614 = vunpack.c.l.b16 %v3515
        %v3615 = vunpack.c.h.b16 %v3515
        %v3616 = vunpack.c.l.b16 %v3516
        %v3617 = vunpack.c.h.b16 %v3516
        %v3618 = vunpack.c.l.b16 %v3517
        %v3619 = vunpack.c.h.b16 %v3517
        %v3620 = vunpack.c.l.b16 %v3518
        %v3621 = vunpack.c.h.b16 %v3518
        %v3622 = vunpack.c.l.b16 %v3519
        %v3623 = vunpack.c.h.b16 %v3519
        %v3624 = vunpack.c.l.b16 %v3520
        %v3625 = vunpack.c.h.b16 %v3520
        %v3626 = vpack.c.b16 %v3564, %v3562
        %v3627 = vpack.c.b16 %v3565, %v3563
        %v3628 = vpack.c.b16 %v3568, %v3566
        %v3629 = vpack.c.b16 %v3569, %v3567
        %v3630 = vpack.c.b16 %v3572, %v3570
        %v3631 = vpack.c.b16 %v3573, %v3571
        %v3632 = vpack.c.b16 %v3576, %v3574
        %v3633 = vpack.c.b16 %v3577, %v3575
        %v3634 = vpack.c.b16 %v3580, %v3578
        %v3635 = vpack.c.b16 %v3581, %v3579
        %v3636 = vpack.c.b16 %v3584, %v3582
        %v3637 = vpack.c.b16 %v3585, %v3583
        %v3638 = vpack.c.b16 %v3588, %v3586
        %v3639 = vpack.c.b16 %v3589, %v3587
        %v3640 = vpack.c.b16 %v3592, %v3590
        %v3641 = vpack.c.b16 %v3593, %v3591
        %v3642 = vpack.c.b16 %v3596, %v3594
        %v3643 = vpack.c.b16 %v3597, %v3595
        %v3644 = vpack.c.b16 %v3600, %v3598
        %v3645 = vpack.c.b16 %v3601, %v3599
        %v3646 = vpack.c.b16 %v3604, %v3602
        %v3647 = vpack.c.b16 %v3605, %v3603
        %v3648 = vpack.c.b16 %v3608, %v3606
        %v3649 = vpack.c.b16 %v3609, %v3607
        %v3650 = vpack.c.b16 %v3612, %v3610
        %v3651 = vpack.c.b16 %v3613, %v3611
        %v3652 = vpack.c.b16 %v3616, %v3614
        %v3653 = vpack.c.b16 %v3617, %v3615
        %v3654 = vpack.c.b16 %v3620, %v3618
        %v3655 = vpack.c.b16 %v3621, %v3619
        %v3656 = vpack.c.b16 %v3624, %v3622
        %v3657 = vpack.c.b16 %v3625, %v3623
        %3690 = vmatpush.bf16.msra.mxu0 %v3640
        %3691 = vmatpush.bf16.msra.mxu0 %v3638
        %3692 = vmatpush.bf16.msra.mxu0 %v3636
        %3693 = vmatpush.bf16.msra.mxu0 %v3634
        %3694 = vmatpush.bf16.msra.mxu0 %v3632
        %3695 = vmatpush.bf16.msra.mxu0 %v3630
        %3696 = vmatpush.bf16.msra.mxu0 %v3628
        %3697 = vmatpush.bf16.msra.mxu0 %v3626
        %3698 = vmatmul.bf16.gmra.mxu0 %v3521
        %v3699 = vpop.f32.mrf.mxu0
        %v3700 = vadd.f32 %v3526, %v3699
        %v3701 = vpop.f32.mrf.mxu0
        %3702 = vdwg.mxu0
        %3703 = vmatpush.bf16.msra.mxu0 %v3656
        %3704 = vmatpush.bf16.msra.mxu0 %v3654
        %3705 = vmatpush.bf16.msra.mxu0 %v3652
        %3706 = vmatpush.bf16.msra.mxu0 %v3650
        %3707 = vmatpush.bf16.msra.mxu0 %v3648
        %3708 = vmatpush.bf16.msra.mxu0 %v3646
        %3709 = vmatpush.bf16.msra.mxu0 %v3644
        %3710 = vmatpush.bf16.msra.mxu0 %v3642
        %3711 = vmatmul.bf16.gmra.mxu0 %v3522
        %v3712 = vpop.f32.mrf.mxu0
        %v3713 = vadd.f32 %v3700, %v3712
        %v3714 = vpop.f32.mrf.mxu0
        %3715 = vdwg.mxu0
        %3716 = vmatpush.bf16.msra.mxu0 %v3641
        %3717 = vmatpush.bf16.msra.mxu0 %v3639
        %3718 = vmatpush.bf16.msra.mxu0 %v3637
        %3719 = vmatpush.bf16.msra.mxu0 %v3635
        %3720 = vmatpush.bf16.msra.mxu0 %v3633
        %3721 = vmatpush.bf16.msra.mxu0 %v3631
        %3722 = vmatpush.bf16.msra.mxu0 %v3629
        %3723 = vmatpush.bf16.msra.mxu0 %v3627
        %3724 = vmatmul.bf16.gmra.mxu0 %v3521
        %v3725 = vpop.f32.mrf.mxu0
        %v3726 = vadd.f32 %v3527, %v3725
        %v3727 = vpop.f32.mrf.mxu0
        %3728 = vdwg.mxu0
        %3729 = vmatpush.bf16.msra.mxu0 %v3657
        %3730 = vmatpush.bf16.msra.mxu0 %v3655
        %3731 = vmatpush.bf16.msra.mxu0 %v3653
        %3732 = vmatpush.bf16.msra.mxu0 %v3651
        %3733 = vmatpush.bf16.msra.mxu0 %v3649
        %3734 = vmatpush.bf16.msra.mxu0 %v3647
        %3735 = vmatpush.bf16.msra.mxu0 %v3645
        %3736 = vmatpush.bf16.msra.mxu0 %v3643
        %3737 = vmatmul.bf16.gmra.mxu0 %v3522
        %v3738 = vpop.f32.mrf.mxu0
        %v3739 = vadd.f32 %v3726, %v3738
        %v3740 = vpop.f32.mrf.mxu0
        %3741 = vdwg.mxu0
        %v3742 = vmax.f32 %v3713, 0.0
        %v3743 = vmax.f32 %v3739, 0.0
        %s3744 = scalar_lea.vmem %s11, 256
        %v3745 = vld [vmem:[%s3744] sm:$0xff]
        %v3746 = vld [vmem:[%s3744 + $0x8] sm:$0xff]
        %v3747 = vld [vmem:[%s3744 + $0x10] sm:$0xff]
        %v3748 = vld [vmem:[%s3744 + $0x18] sm:$0xff]
        %v3749 = vld [vmem:[%s3744 + $0x20] sm:$0xff]
        %v3750 = vld [vmem:[%s3744 + $0x28] sm:$0xff]
        %v3751 = vld [vmem:[%s3744 + $0x30] sm:$0xff]
        %v3752 = vld [vmem:[%s3744 + $0x38] sm:$0xff]
        %v3753 = vld [vmem:[%s3744 + $0x40] sm:$0xff]
        %v3754 = vld [vmem:[%s3744 + $0x48] sm:$0xff]
        %v3755 = vld [vmem:[%s3744 + $0x50] sm:$0xff]
        %v3756 = vld [vmem:[%s3744 + $0x58] sm:$0xff]
        %v3757 = vld [vmem:[%s3744 + $0x60] sm:$0xff]
        %v3758 = vld [vmem:[%s3744 + $0x68] sm:$0xff]
        %v3759 = vld [vmem:[%s3744 + $0x70] sm:$0xff]
        %v3760 = vld [vmem:[%s3744 + $0x78] sm:$0xff]
        %v3761 = vld [vmem:[%s3744 + $0x80] sm:$0xff]
        %v3762 = vld [vmem:[%s3744 + $0x88] sm:$0xff]
        %v3763 = vld [vmem:[%s3744 + $0x90] sm:$0xff]
        %v3764 = vld [vmem:[%s3744 + $0x98] sm:$0xff]
        %v3765 = vld [vmem:[%s3744 + $0xa0] sm:$0xff]
        %v3766 = vld [vmem:[%s3744 + $0xa8] sm:$0xff]
        %v3767 = vld [vmem:[%s3744 + $0xb0] sm:$0xff]
        %v3768 = vld [vmem:[%s3744 + $0xb8] sm:$0xff]
        %v3769 = vld [vmem:[%s3744 + $0xc0] sm:$0xff]
        %v3770 = vld [vmem:[%s3744 + $0xc8] sm:$0xff]
        %v3771 = vld [vmem:[%s3744 + $0xd0] sm:$0xff]
        %v3772 = vld [vmem:[%s3744 + $0xd8] sm:$0xff]
        %v3773 = vld [vmem:[%s3744 + $0xe0] sm:$0xff]
        %v3774 = vld [vmem:[%s3744 + $0xe8] sm:$0xff]
        %v3775 = vld [vmem:[%s3744 + $0xf0] sm:$0xff]
        %v3776 = vld [vmem:[%s3744 + $0xf8] sm:$0xff]
        %v3777 = vpack.c.bf16 %v3742, %v3742
        %v3778 = vpack.c.bf16 %v3743, %v3743
        %s3779 = scalar_lea.vmem %s12, 2
        %v3780 = vld [vmem:[%s3779] sm:$0x3]
        %v3782 = vperm.slane %v3780, 0
        %v3783 = vperm.slane %v3780, 1
        %v3818 = vunpack.c.l.b16 %v3745
        %v3819 = vunpack.c.h.b16 %v3745
        %v3820 = vunpack.c.l.b16 %v3746
        %v3821 = vunpack.c.h.b16 %v3746
        %v3822 = vunpack.c.l.b16 %v3747
        %v3823 = vunpack.c.h.b16 %v3747
        %v3824 = vunpack.c.l.b16 %v3748
        %v3825 = vunpack.c.h.b16 %v3748
        %v3826 = vunpack.c.l.b16 %v3749
        %v3827 = vunpack.c.h.b16 %v3749
        %v3828 = vunpack.c.l.b16 %v3750
        %v3829 = vunpack.c.h.b16 %v3750
        %v3830 = vunpack.c.l.b16 %v3751
        %v3831 = vunpack.c.h.b16 %v3751
        %v3832 = vunpack.c.l.b16 %v3752
        %v3833 = vunpack.c.h.b16 %v3752
        %v3834 = vunpack.c.l.b16 %v3753
        %v3835 = vunpack.c.h.b16 %v3753
        %v3836 = vunpack.c.l.b16 %v3754
        %v3837 = vunpack.c.h.b16 %v3754
        %v3838 = vunpack.c.l.b16 %v3755
        %v3839 = vunpack.c.h.b16 %v3755
        %v3840 = vunpack.c.l.b16 %v3756
        %v3841 = vunpack.c.h.b16 %v3756
        %v3842 = vunpack.c.l.b16 %v3757
        %v3843 = vunpack.c.h.b16 %v3757
        %v3844 = vunpack.c.l.b16 %v3758
        %v3845 = vunpack.c.h.b16 %v3758
        %v3846 = vunpack.c.l.b16 %v3759
        %v3847 = vunpack.c.h.b16 %v3759
        %v3848 = vunpack.c.l.b16 %v3760
        %v3849 = vunpack.c.h.b16 %v3760
        %v3850 = vunpack.c.l.b16 %v3761
        %v3851 = vunpack.c.h.b16 %v3761
        %v3852 = vunpack.c.l.b16 %v3762
        %v3853 = vunpack.c.h.b16 %v3762
        %v3854 = vunpack.c.l.b16 %v3763
        %v3855 = vunpack.c.h.b16 %v3763
        %v3856 = vunpack.c.l.b16 %v3764
        %v3857 = vunpack.c.h.b16 %v3764
        %v3858 = vunpack.c.l.b16 %v3765
        %v3859 = vunpack.c.h.b16 %v3765
        %v3860 = vunpack.c.l.b16 %v3766
        %v3861 = vunpack.c.h.b16 %v3766
        %v3862 = vunpack.c.l.b16 %v3767
        %v3863 = vunpack.c.h.b16 %v3767
        %v3864 = vunpack.c.l.b16 %v3768
        %v3865 = vunpack.c.h.b16 %v3768
        %v3866 = vunpack.c.l.b16 %v3769
        %v3867 = vunpack.c.h.b16 %v3769
        %v3868 = vunpack.c.l.b16 %v3770
        %v3869 = vunpack.c.h.b16 %v3770
        %v3870 = vunpack.c.l.b16 %v3771
        %v3871 = vunpack.c.h.b16 %v3771
        %v3872 = vunpack.c.l.b16 %v3772
        %v3873 = vunpack.c.h.b16 %v3772
        %v3874 = vunpack.c.l.b16 %v3773
        %v3875 = vunpack.c.h.b16 %v3773
        %v3876 = vunpack.c.l.b16 %v3774
        %v3877 = vunpack.c.h.b16 %v3774
        %v3878 = vunpack.c.l.b16 %v3775
        %v3879 = vunpack.c.h.b16 %v3775
        %v3880 = vunpack.c.l.b16 %v3776
        %v3881 = vunpack.c.h.b16 %v3776
        %v3882 = vpack.c.b16 %v3820, %v3818
        %v3883 = vpack.c.b16 %v3821, %v3819
        %v3884 = vpack.c.b16 %v3824, %v3822
        %v3885 = vpack.c.b16 %v3825, %v3823
        %v3886 = vpack.c.b16 %v3828, %v3826
        %v3887 = vpack.c.b16 %v3829, %v3827
        %v3888 = vpack.c.b16 %v3832, %v3830
        %v3889 = vpack.c.b16 %v3833, %v3831
        %v3890 = vpack.c.b16 %v3836, %v3834
        %v3891 = vpack.c.b16 %v3837, %v3835
        %v3892 = vpack.c.b16 %v3840, %v3838
        %v3893 = vpack.c.b16 %v3841, %v3839
        %v3894 = vpack.c.b16 %v3844, %v3842
        %v3895 = vpack.c.b16 %v3845, %v3843
        %v3896 = vpack.c.b16 %v3848, %v3846
        %v3897 = vpack.c.b16 %v3849, %v3847
        %v3898 = vpack.c.b16 %v3852, %v3850
        %v3899 = vpack.c.b16 %v3853, %v3851
        %v3900 = vpack.c.b16 %v3856, %v3854
        %v3901 = vpack.c.b16 %v3857, %v3855
        %v3902 = vpack.c.b16 %v3860, %v3858
        %v3903 = vpack.c.b16 %v3861, %v3859
        %v3904 = vpack.c.b16 %v3864, %v3862
        %v3905 = vpack.c.b16 %v3865, %v3863
        %v3906 = vpack.c.b16 %v3868, %v3866
        %v3907 = vpack.c.b16 %v3869, %v3867
        %v3908 = vpack.c.b16 %v3872, %v3870
        %v3909 = vpack.c.b16 %v3873, %v3871
        %v3910 = vpack.c.b16 %v3876, %v3874
        %v3911 = vpack.c.b16 %v3877, %v3875
        %v3912 = vpack.c.b16 %v3880, %v3878
        %v3913 = vpack.c.b16 %v3881, %v3879
        %3946 = vmatpush.bf16.msra.mxu0 %v3896
        %3947 = vmatpush.bf16.msra.mxu0 %v3894
        %3948 = vmatpush.bf16.msra.mxu0 %v3892
        %3949 = vmatpush.bf16.msra.mxu0 %v3890
        %3950 = vmatpush.bf16.msra.mxu0 %v3888
        %3951 = vmatpush.bf16.msra.mxu0 %v3886
        %3952 = vmatpush.bf16.msra.mxu0 %v3884
        %3953 = vmatpush.bf16.msra.mxu0 %v3882
        %3954 = vmatmul.bf16.gmra.mxu0 %v3777
        %v3955 = vpop.f32.mrf.mxu0
        %v3956 = vadd.f32 %v3782, %v3955
        %v3957 = vpop.f32.mrf.mxu0
        %3958 = vdwg.mxu0
        %3959 = vmatpush.bf16.msra.mxu0 %v3912
        %3960 = vmatpush.bf16.msra.mxu0 %v3910
        %3961 = vmatpush.bf16.msra.mxu0 %v3908
        %3962 = vmatpush.bf16.msra.mxu0 %v3906
        %3963 = vmatpush.bf16.msra.mxu0 %v3904
        %3964 = vmatpush.bf16.msra.mxu0 %v3902
        %3965 = vmatpush.bf16.msra.mxu0 %v3900
        %3966 = vmatpush.bf16.msra.mxu0 %v3898
        %3967 = vmatmul.bf16.gmra.mxu0 %v3778
        %v3968 = vpop.f32.mrf.mxu0
        %v3969 = vadd.f32 %v3956, %v3968
        %v3970 = vpop.f32.mrf.mxu0
        %3971 = vdwg.mxu0
        %3972 = vmatpush.bf16.msra.mxu0 %v3897
        %3973 = vmatpush.bf16.msra.mxu0 %v3895
        %3974 = vmatpush.bf16.msra.mxu0 %v3893
        %3975 = vmatpush.bf16.msra.mxu0 %v3891
        %3976 = vmatpush.bf16.msra.mxu0 %v3889
        %3977 = vmatpush.bf16.msra.mxu0 %v3887
        %3978 = vmatpush.bf16.msra.mxu0 %v3885
        %3979 = vmatpush.bf16.msra.mxu0 %v3883
        %3980 = vmatmul.bf16.gmra.mxu0 %v3777
        %v3981 = vpop.f32.mrf.mxu0
        %v3982 = vadd.f32 %v3783, %v3981
        %v3983 = vpop.f32.mrf.mxu0
        %3984 = vdwg.mxu0
        %3985 = vmatpush.bf16.msra.mxu0 %v3913
        %3986 = vmatpush.bf16.msra.mxu0 %v3911
        %3987 = vmatpush.bf16.msra.mxu0 %v3909
        %3988 = vmatpush.bf16.msra.mxu0 %v3907
        %3989 = vmatpush.bf16.msra.mxu0 %v3905
        %3990 = vmatpush.bf16.msra.mxu0 %v3903
        %3991 = vmatpush.bf16.msra.mxu0 %v3901
        %3992 = vmatpush.bf16.msra.mxu0 %v3899
        %3993 = vmatmul.bf16.gmra.mxu0 %v3778
        %v3994 = vpop.f32.mrf.mxu0
        %v3995 = vadd.f32 %v3982, %v3994
        %v3996 = vpop.f32.mrf.mxu0
        %3997 = vdwg.mxu0
        %v3998 = vadd.f32 %v3486, %v3969
        %v3999 = vadd.f32 %v3487, %v3995
        %s4000 = scalar_lea.vmem %s13, 2
        %v4001 = vld [vmem:[%s4000] sm:$0x3]
        %s4002 = scalar_lea.vmem %s14, 2
        %v4003 = vld [vmem:[%s4002] sm:$0x3]
        %v4004 = vadd.f32 %v3998, %v3999
        %4005 = vadd.xlane.f32.xlu0 %v4004
        %v4006 = vpop.xlane.xlu0 %4005
        %v4007 = vmul.f32 %v4006, %v1747
        %v4008 = vmul.f32 %v3998, %v3998
        %v4009 = vmul.f32 %v3999, %v3999
        %v4010 = vadd.f32 %v4008, %v4009
        %4011 = vadd.xlane.f32.xlu0 %v4010
        %v4012 = vpop.xlane.xlu0 %4011
        %v4013 = vmul.f32 %v4012, %v1747
        %v4014 = vmul.f32 %v4007, %v4007
        %v4015 = vsub.f32 %v4013, %v4014
        %v4016 = vsub.f32 %v3998, %v4007
        %v4017 = vsub.f32 %v3999, %v4007
        %v4018 = vadd.f32 %v4015, 1e-05
        %v4019 = vrsqrt.pop %v4018
        %v4020 = vmul.f32 %v4019, %v4018
        %v4021 = vmul.f32 %v4020, %v4019
        %v4022 = vmul.f32 0.5, %v4021
        %v4023 = vsub.f32 1.5, %v4022
        %v4024 = vmul.f32 %v4019, %v4023
        %vm4025 = vweird.f32 %v4018
        %vm4026 = vweird.f32 %v4019
        %vm4027 = vmor %vm4025, %vm4026
        %v4028 = vsel %vm4027, %v4019, %v4024
        %v4029 = vmul.f32 %v4016, %v4028
        %v4030 = vmul.f32 %v4017, %v4028
        %v4032 = vperm.slane %v4001, 0
        %v4033 = vperm.slane %v4001, 1
        %v4036 = vmul.f32 %v4029, %v4032
        %v4037 = vmul.f32 %v4030, %v4033
        %v4039 = vperm.slane %v4003, 0
        %v4040 = vperm.slane %v4003, 1
        %v4043 = vadd.f32 %v4036, %v4039
        %v4044 = vadd.f32 %v4037, %v4040
        %v4045 = vadd.f32 %v616, %v4043
        %v4046 = vadd.f32 %v629, %v4044
        %4047 = vst [vmem:[%s498] sm:$0xff] %v4045
        %4048 = vst [vmem:[%s498 + $0x8] sm:$0xff] %v4046
        %s4049 = sand.u32 %s362, 1
        %s4050 = scalar_lea.sflag [#allocation3], %s4049
        %s4051 = sand.u32 %s362, 1
        %s4052 = smul.addr %s4051, 16
        %s4053 = scalar_lea.vmem [#allocation2], %s4052
        // Predicated region
        $region81: #{intention_social_transformer_forward_batched.1} parent=79 // pred_check
          %p4054 = pneg %p372
        $region82: #{intention_social_transformer_forward_batched.1} parent=79 // pred_check_branch
          %4056 = sbr.rel (%p4054) target = $region84
        $region83: #{intention_social_transformer_forward_batched.1} parent=79 // pred_region
          %4058 = vsyncadd %s4050, 0
          %s4059 = smul.addr %s29, 2
          %s4060 = smul.addr %s4059, 8
          %s4061 = scalar_lea.hbm %s15, %s4060
          %s4063 = sshll.u32 %s4053, 4
          %s4064 = int_to_ptr.vmem [resolvable:$true] %s4063
          %s4065 = sshll.u32 %s4061, 4
          %s4066 = int_to_ptr.hbm [resolvable:$true] %s4065
          %4068 = dma.vmem_to_hbm [thread:$0]  %s4064, 256, %s4066, %s4050
        $region84: #{intention_social_transformer_forward_batched.1} parent=79 // pred_fallthru
          _
      $region80: #{intention_social_transformer_forward_batched.1} parent=5 // pred_fallthru
        _
      %p4069 = scmp.le.s32.totalorder 2, %s24
      // Predicated region
      $region85: #{intention_social_transformer_forward_batched.1} parent=5 // pred_check
        %p4070 = pneg %p4069
      $region86: #{intention_social_transformer_forward_batched.1} parent=5 // pred_check_branch
        %4072 = sbr.rel (%p4070) target = $region88
      $region87: #{intention_social_transformer_forward_batched.1} parent=5 // pred_region
        %s4073 = ssub.s32 %s24, 2
        // Predicated region
        $region89: #{intention_social_transformer_forward_batched.1} parent=87 // pred_check
          %p4074 = pneg %p378
        $region90: #{intention_social_transformer_forward_batched.1} parent=87 // pred_check_branch
          %4076 = sbr.rel (%p4074) target = $region92
        $region91: #{intention_social_transformer_forward_batched.1} parent=87 // pred_region
          %s4077 = sand.u32 %s363, 1
          %s4078 = scalar_lea.sflag [#allocation3], %s4077
          %s4079 = sand.u32 %s363, 1
          %s4080 = smul.addr %s4079, 16
          %s4081 = scalar_lea.vmem [#allocation2], %s4080
          %4083 = dma.done %s4078, 256
        $region92: #{intention_social_transformer_forward_batched.1} parent=87 // pred_fallthru
          _
      $region88: #{intention_social_transformer_forward_batched.1} parent=5 // pred_fallthru
        _
    $region6: #{intention_social_transformer_forward_batched.1} parent=1 // loop_footer
      %s28 = sadd.s32 1, %s24
    $region7: #{intention_social_transformer_forward_batched.1} parent=1 // loop_footer_branch
      %23 = sbr.rel target = $region3
    $region8: #{intention_social_transformer_forward_batched.1} parent=1 // loop_exit
      _
    %4084 = vsyncpa [#allocation3], 1
    %s4085 = scalar_lea.sflag [#allocation3], 1
    %4086 = vsyncpa %s4085, 1

</llo_original>
